<compile_context>
chip_gen: v5e
topology: v5e:2x2
jax: 0.10.0
libtpu: 0.0.40
codegen_flags: <defaults>
</compile_context>

<pallas_src>
import jax
import jax.numpy as jnp
from jax.experimental import pallas as pl
from jax.experimental.pallas import tpu as pltpu

LANES = 128  # lane-padding target for all GEMM output dims


# ----------------------------------------------------------------------------
# Pallas kernels
# ----------------------------------------------------------------------------
def conv_pool_kernel(p_ref, w_ref, b_ref, pool_ref, o_ref):
    """One image: o = Pool @ relu(patches @ W + b); everything VMEM-resident.

    p_ref:    [1, M, K]   im2col patches of one image (M = OH*OW spatial rows)
    w_ref:    [K, 128]    conv weight, output channels zero-padded to 128 lanes
    b_ref:    [1, 128]    bias (padded)
    pool_ref: [M//4, M]   constant 2x2-average-pool matrix (0.25 entries)
    o_ref:    [1, M//4, 128]  pooled, lane-dense output
    """
    y = jnp.dot(p_ref[0], w_ref[...], preferred_element_type=jnp.float32)
    y = jnp.maximum(y + b_ref[...], 0.0)                       # f32 epilogue
    o_ref[0] = jnp.dot(pool_ref[...], y, preferred_element_type=jnp.float32)


def fc_stack_kernel(x_ref, w1_ref, b1_ref, w2_ref, b2_ref, w3_ref, b3_ref, o_ref):
    """Fused classifier: fc1 -> ReLU -> fc2 -> ReLU -> fc3 (all dims lane-padded)."""
    h = jnp.dot(x_ref[...], w1_ref[...], preferred_element_type=jnp.float32)
    h = jnp.maximum(h + b1_ref[...], 0.0)
    h = jnp.dot(h, w2_ref[...], preferred_element_type=jnp.float32)
    h = jnp.maximum(h + b2_ref[...], 0.0)
    h = jnp.dot(h, w3_ref[...], preferred_element_type=jnp.float32)
    o_ref[...] = h + b3_ref[...]


# ----------------------------------------------------------------------------
# Pallas wrappers
# ----------------------------------------------------------------------------
def pallas_conv_pool(patches, w, b, pool):
    """patches: [B, M, K], w: [K, 128], b: [1, 128], pool: [M//4, M] -> [B, M//4, 128]."""
    B, M, K = patches.shape
    MP = pool.shape[0]
    return pl.pallas_call(
        conv_pool_kernel,
        out_shape=jax.ShapeDtypeStruct((B, MP, LANES), jnp.float32),
        grid=(B,),
        in_specs=[
            pl.BlockSpec((1, M, K), lambda i: (i, 0, 0)),
            pl.BlockSpec((K, LANES), lambda i: (0, 0)),
            pl.BlockSpec((1, LANES), lambda i: (0, 0)),
            pl.BlockSpec((MP, M), lambda i: (0, 0)),
        ],
        out_specs=pl.BlockSpec((1, MP, LANES), lambda i: (i, 0, 0)),
        compiler_params=pltpu.CompilerParams(dimension_semantics=("parallel",)),
    )(patches, w, b, pool)


def pallas_fc_stack(x, w1, b1, w2, b2, w3, b3):
    """x: [B, 25*128] -> logits [B, 128] (only first 10 lanes meaningful)."""
    B = x.shape[0]
    args = (x, w1, b1, w2, b2, w3, b3)
    in_specs = [pl.BlockSpec(a.shape, lambda i: (0, 0)) for a in args]
    return pl.pallas_call(
        fc_stack_kernel,
        out_shape=jax.ShapeDtypeStruct((B, LANES), jnp.float32),
        grid=(1,),
        in_specs=in_specs,
        out_specs=pl.BlockSpec((B, LANES), lambda i: (0, 0)),
    )(*args)


# ----------------------------------------------------------------------------
# Glue: im2col patches + constant pooling matrix (layout plumbing, plain JAX)
# ----------------------------------------------------------------------------
def im2col(x, kh, kw):
    """x: [B, H, W, C] -> [B, OH*OW, kh*kw*C] (valid conv, stride 1).

    Patch feature order is (kh, kw, c), matching weights reshaped from
    (KH, KW, IC, OC) -> (KH*KW*IC, OC).
    """
    B, H, W, C = x.shape
    oh, ow = H - kh + 1, W - kw + 1
    cols = [x[:, i:i + oh, j:j + ow, :] for i in range(kh) for j in range(kw)]
    return jnp.concatenate(cols, axis=-1).reshape(B, oh * ow, kh * kw * C)


def make_pool_matrix(oh, ow):
    """[oh*ow/4, oh*ow] matrix averaging each 2x2 spatial window (row-major)."""
    oh2, ow2 = oh // 2, ow // 2
    out_idx = jnp.arange(oh2 * ow2)
    in_idx = jnp.arange(oh * ow)
    r, c = out_idx // ow2, out_idx % ow2
    y, x = in_idx // ow, in_idx % ow
    mask = ((y[None, :] // 2) == r[:, None]) & ((x[None, :] // 2) == c[:, None])
    return jnp.where(mask, 0.25, 0.0).astype(jnp.float32)


# ----------------------------------------------------------------------------
# One-time parameter preparation (PyTorch layout -> kernel-ready, lane-padded)
# ----------------------------------------------------------------------------
def _pad_to(a, shape):
    return jnp.pad(a, [(0, t - s) for s, t in zip(a.shape, shape)])


def prepare_params(params):
    p = {}
    # conv1: (6,1,5,5) -> (KH,KW,IC,OC) -> (25, 6) -> pad OC to 128 lanes
    w1 = params["conv1_w"].transpose(2, 3, 1, 0).reshape(25 * 1, 6)
    p["conv1_w"] = _pad_to(w1, (25, LANES))
    p["conv1_b"] = _pad_to(params["conv1_b"], (LANES,)).reshape(1, LANES)
    # conv2: (16,6,5,5) -> (150, 16) -> pad OC to 128 lanes
    w2 = params["conv2_w"].transpose(2, 3, 1, 0).reshape(25 * 6, 16)
    p["conv2_w"] = _pad_to(w2, (150, LANES))
    p["conv2_b"] = _pad_to(params["conv2_b"], (LANES,)).reshape(1, LANES)
    # fc1: [120, 400] expects PyTorch NCHW flatten (c*25 + h*5 + w).  The conv2
    # kernel emits [B, 25, 128] ordered ((h*5+w), padded-channel); rebuild fc1
    # as [25*128, 128] so it consumes that layout directly (flatten transpose
    # is pre-baked here, not done at runtime).
    wf1 = params["fc1_w"].reshape(120, 16, 5, 5).transpose(2, 3, 1, 0)  # [5,5,16,120]
    wf1 = wf1.reshape(25, 16, 120)
    wf1 = jnp.pad(wf1, ((0, 0), (0, LANES - 16), (0, LANES - 120)))
    p["fc1_w"] = wf1.reshape(25 * LANES, LANES)
    p["fc1_b"] = _pad_to(params["fc1_b"], (LANES,)).reshape(1, LANES)
    p["fc2_w"] = _pad_to(params["fc2_w"].T, (LANES, LANES))   # [120->128, 84->128]
    p["fc2_b"] = _pad_to(params["fc2_b"], (LANES,)).reshape(1, LANES)
    p["fc3_w"] = _pad_to(params["fc3_w"].T, (LANES, LANES))   # [84->128, 10->128]
    p["fc3_b"] = _pad_to(params["fc3_b"], (LANES,)).reshape(1, LANES)
    return p


# ----------------------------------------------------------------------------
# LeNet5 forward (Pallas version)
# ----------------------------------------------------------------------------
def lenet5_forward(x_nchw, prep):
    B = x_nchw.shape[0]
    x = jnp.transpose(x_nchw, (0, 2, 3, 1))                  # NHWC [B,28,28,1]

    # conv1 (pad=2) + ReLU + 2x2 avgpool, fused -> [B, 196, 128]
    xp = jnp.pad(x, ((0, 0), (2, 2), (2, 2), (0, 0)))
    patches = im2col(xp, 5, 5)                               # [B, 784, 25]
    pool1 = make_pool_matrix(28, 28)                         # [196, 784]
    y = pallas_conv_pool(patches, prep["conv1_w"], prep["conv1_b"], pool1)

    # conv2 (valid) + ReLU + 2x2 avgpool, fused -> [B, 25, 128]
    y = y.reshape(B, 14, 14, LANES)[:, :, :, :6]             # drop lane padding
    patches = im2col(y, 5, 5)                                # [B, 100, 150]
    pool2 = make_pool_matrix(10, 10)                         # [25, 100]
    y = pallas_conv_pool(patches, prep["conv2_w"], prep["conv2_b"], pool2)

    # classifier: fc1+ReLU+fc2+ReLU+fc3 fused in one kernel (flatten is a free
    # reshape; the NCHW permutation was baked into fc1's weight).
    flat = y.reshape(B, 25 * LANES)                          # [B, 3200]
    out = pallas_fc_stack(flat, prep["fc1_w"], prep["fc1_b"],
                          prep["fc2_w"], prep["fc2_b"],
                          prep["fc3_w"], prep["fc3_b"])
    return out[:, :10]


# ----------------------------------------------------------------------------
# Pure-JAX reference (correctness check only; HIGHEST precision)
# ----------------------------------------------------------------------------
def lenet5_reference(x, params):
    B = x.shape[0]
    hp = jax.lax.Precision.HIGHEST

    y = jax.lax.conv_general_dilated(
        x, params["conv1_w"], (1, 1), ((2, 2), (2, 2)),
        dimension_numbers=("NCHW", "OIHW", "NCHW"), precision=hp)
    y = jnp.maximum(y + params["conv1_b"][None, :, None, None], 0.0)
    y = y.reshape(B, 6, 14, 2, 14, 2).mean(axis=(3, 5))

    y = jax.lax.conv_general_dilated(
        y, params["conv2_w"], (1, 1), ((0, 0), (0, 0)),
        dimension_numbers=("NCHW", "OIHW", "NCHW"), precision=hp)
    y = jnp.maximum(y + params["conv2_b"][None, :, None, None], 0.0)
    y = y.reshape(B, 16, 5, 2, 5, 2).mean(axis=(3, 5))

    flat = y.reshape(B, 16 * 5 * 5)
    h = jnp.maximum(jnp.dot(flat, params["fc1_w"].T, precision=hp) + params["fc1_b"], 0.0)
    h = jnp.maximum(jnp.dot(h, params["fc2_w"].T, precision=hp) + params["fc2_b"], 0.0)
    return jnp.dot(h, params["fc3_w"].T, precision=hp) + params["fc3_b"]


# ----------------------------------------------------------------------------
# Deterministic parameter init (shapes mirror the PyTorch module)
# ----------------------------------------------------------------------------
def init_params(key):
    ks = jax.random.split(key, 10)
    f32 = jnp.float32
    return {
        "conv1_w": 0.05 * jax.random.normal(ks[0], (6, 1, 5, 5), f32),
        "conv1_b": 0.05 * jax.random.normal(ks[1], (6,), f32),
        "conv2_w": 0.05 * jax.random.normal(ks[2], (16, 6, 5, 5), f32),
        "conv2_b": 0.05 * jax.random.normal(ks[3], (16,), f32),
        "fc1_w": 0.05 * jax.random.normal(ks[4], (120, 400), f32),
        "fc1_b": 0.05 * jax.random.normal(ks[5], (120,), f32),
        "fc2_w": 0.05 * jax.random.normal(ks[6], (84, 120), f32),
        "fc2_b": 0.05 * jax.random.normal(ks[7], (84,), f32),
        "fc3_w": 0.05 * jax.random.normal(ks[8], (10, 84), f32),
        "fc3_b": 0.05 * jax.random.normal(ks[9], (10,), f32),
    }


if __name__ == "__main__":
    key = jax.random.PRNGKey(0)
    pkey, xkey = jax.random.split(key)
    params = init_params(pkey)
    prep = prepare_params(params)   # one-time weight repack/pad (not in hot path)

    # LeNet5 requires 28x28 spatial inputs (16*5*5 flatten); batch kept small.
    x = jax.random.normal(xkey, (2, 1, 28, 28), jnp.float32)

    fwd = jax.jit(lenet5_forward)
    out = jax.block_until_ready(fwd(x, prep))
    assert out.shape == (2, 10), out.shape

    ref = jax.block_until_ready(lenet5_reference(x, params))
    err = float(jnp.max(jnp.abs(out - ref)))
    # Kernels use default (single-pass bf16) MXU precision per perf guidance,
    # so compare against the HIGHEST-precision f32 reference with a tolerance
    # sized for that (estimated max abs err ~1e-3 for this network scale).
    assert jnp.allclose(out, ref, rtol=1e-2, atol=5e-3), f"max abs err = {err}"
    print("KERNEL_OK")
</pallas_src>

<mosaic_0001>
module attributes {stable_mosaic.version = 11 : i64} {
  func.func @conv_pool_kernel(%arg0: i32, %arg1: memref<1x784x25xf32, #tpu.memory_space<vmem>>, %arg2: memref<25x128xf32, #tpu.memory_space<vmem>>, %arg3: memref<1x128xf32, #tpu.memory_space<vmem>>, %arg4: memref<196x784xf32, #tpu.memory_space<vmem>>, %arg5: memref<1x196x128xf32, #tpu.memory_space<vmem>>) attributes {dimension_semantics = [#tpu.dimension_semantics<parallel>], iteration_bounds = array<i64: 2>, scalar_prefetch = 0 : i64, scratch_operands = 0 : i64, tpu.core_type = #tpu.core_type<tc>, window_params = [{transform_indices = @transform_0, window_bounds = array<i64: 1, 784, 25>}, {pipeline_mode = #tpu.pipeline_mode<synchronous>, transform_indices = @transform_1, window_bounds = array<i64: 25, 128>}, {pipeline_mode = #tpu.pipeline_mode<synchronous>, transform_indices = @transform_2, window_bounds = array<i64: 1, 128>}, {pipeline_mode = #tpu.pipeline_mode<synchronous>, transform_indices = @transform_3, window_bounds = array<i64: 196, 784>}, {transform_indices = @transform_4, window_bounds = array<i64: 1, 196, 128>}]} {
    %c0 = arith.constant 0 : index
    %c0_0 = arith.constant 0 : index
    %c0_1 = arith.constant 0 : index
    %0 = vector.load %arg1[%c0, %c0_0, %c0_1] : memref<1x784x25xf32, #tpu.memory_space<vmem>>, vector<1x784x25xf32>
    %1 = vector.shape_cast %0 : vector<1x784x25xf32> to vector<784x25xf32>
    %c0_2 = arith.constant 0 : index
    %c0_3 = arith.constant 0 : index
    %2 = vector.load %arg2[%c0_2, %c0_3] : memref<25x128xf32, #tpu.memory_space<vmem>>, vector<25x128xf32>
    %cst = arith.constant dense<0.000000e+00> : vector<784x128xf32>
    %3 = tpu.matmul %1, %2, %cst {dimension_numbers = #tpu.dot_dimension_numbers<[1], [0], [0], [1], [0, 0, 1, 1], [], []>} : vector<784x25xf32>, vector<25x128xf32>, vector<784x128xf32> -> vector<784x128xf32>
    %c0_4 = arith.constant 0 : index
    %c0_5 = arith.constant 0 : index
    %4 = vector.load %arg3[%c0_4, %c0_5] : memref<1x128xf32, #tpu.memory_space<vmem>>, vector<1x128xf32>
    %5 = vector.broadcast %4 : vector<1x128xf32> to vector<784x128xf32>
    %6 = arith.addf %3, %5 : vector<784x128xf32>
    %cst_6 = arith.constant 0.000000e+00 : f32
    %7 = vector.broadcast %cst_6 : f32 to vector<784x128xf32>
    %8 = arith.maximumf %6, %7 : vector<784x128xf32>
    %c0_7 = arith.constant 0 : index
    %c0_8 = arith.constant 0 : index
    %9 = vector.load %arg4[%c0_7, %c0_8] : memref<196x784xf32, #tpu.memory_space<vmem>>, vector<196x784xf32>
    %cst_9 = arith.constant dense<0.000000e+00> : vector<196x128xf32>
    %10 = tpu.matmul %9, %8, %cst_9 {dimension_numbers = #tpu.dot_dimension_numbers<[1], [0], [0], [1], [0, 0, 1, 1], [], []>} : vector<196x784xf32>, vector<784x128xf32>, vector<196x128xf32> -> vector<196x128xf32>
    %c0_10 = arith.constant 0 : index
    %c0_11 = arith.constant 0 : index
    %c0_12 = arith.constant 0 : index
    %11 = vector.load %arg5[%c0_10, %c0_11, %c0_12] : memref<1x196x128xf32, #tpu.memory_space<vmem>>, vector<1x196x128xf32>
    %12 = vector.shape_cast %11 : vector<1x196x128xf32> to vector<196x128xf32>
    %13 = vector.shape_cast %10 : vector<196x128xf32> to vector<1x196x128xf32>
    tpu.vector_store %arg5[%c0_10, %c0_11, %c0_12], %13 {strides = array<i32>} : memref<1x196x128xf32, #tpu.memory_space<vmem>>, vector<1x196x128xf32>,
    return
  }
  func.func @transform_0(%arg0: i32) -> (i32, i32, i32) {
    %c0_i32 = arith.constant 0 : i32
    %c0_i32_0 = arith.constant 0 : i32
    %c0_i32_1 = arith.constant 0 : i32
    return %arg0, %c0_i32, %c0_i32_0 : i32, i32, i32
  }
  func.func @transform_1(%arg0: i32) -> (i32, i32) {
    %c0_i32 = arith.constant 0 : i32
    %c0_i32_0 = arith.constant 0 : i32
    %c0_i32_1 = arith.constant 0 : i32
    return %c0_i32, %c0_i32_0 : i32, i32
  }
  func.func @transform_2(%arg0: i32) -> (i32, i32) {
    %c0_i32 = arith.constant 0 : i32
    %c0_i32_0 = arith.constant 0 : i32
    %c0_i32_1 = arith.constant 0 : i32
    return %c0_i32, %c0_i32_0 : i32, i32
  }
  func.func @transform_3(%arg0: i32) -> (i32, i32) {
    %c0_i32 = arith.constant 0 : i32
    %c0_i32_0 = arith.constant 0 : i32
    %c0_i32_1 = arith.constant 0 : i32
    return %c0_i32, %c0_i32_0 : i32, i32
  }
  func.func @transform_4(%arg0: i32) -> (i32, i32, i32) {
    %c0_i32 = arith.constant 0 : i32
    %c0_i32_0 = arith.constant 0 : i32
    %c0_i32_1 = arith.constant 0 : i32
    return %arg0, %c0_i32, %c0_i32_0 : i32, i32, i32
  }
}

module attributes {stable_mosaic.version = 11 : i64} {
  func.func @conv_pool_kernel(%arg0: i32, %arg1: memref<1x100x150xf32, #tpu.memory_space<vmem>>, %arg2: memref<150x128xf32, #tpu.memory_space<vmem>>, %arg3: memref<1x128xf32, #tpu.memory_space<vmem>>, %arg4: memref<25x100xf32, #tpu.memory_space<vmem>>, %arg5: memref<1x25x128xf32, #tpu.memory_space<vmem>>) attributes {dimension_semantics = [#tpu.dimension_semantics<parallel>], iteration_bounds = array<i64: 2>, scalar_prefetch = 0 : i64, scratch_operands = 0 : i64, tpu.core_type = #tpu.core_type<tc>, window_params = [{transform_indices = @transform_0, window_bounds = array<i64: 1, 100, 150>}, {pipeline_mode = #tpu.pipeline_mode<synchronous>, transform_indices = @transform_1, window_bounds = array<i64: 150, 128>}, {pipeline_mode = #tpu.pipeline_mode<synchronous>, transform_indices = @transform_2, window_bounds = array<i64: 1, 128>}, {pipeline_mode = #tpu.pipeline_mode<synchronous>, transform_indices = @transform_3, window_bounds = array<i64: 25, 100>}, {transform_indices = @transform_4, window_bounds = array<i64: 1, 25, 128>}]} {
    %c0 = arith.constant 0 : index
    %c0_0 = arith.constant 0 : index
    %c0_1 = arith.constant 0 : index
    %0 = vector.load %arg1[%c0, %c0_0, %c0_1] : memref<1x100x150xf32, #tpu.memory_space<vmem>>, vector<1x100x150xf32>
    %1 = vector.shape_cast %0 : vector<1x100x150xf32> to vector<100x150xf32>
    %c0_2 = arith.constant 0 : index
    %c0_3 = arith.constant 0 : index
    %2 = vector.load %arg2[%c0_2, %c0_3] : memref<150x128xf32, #tpu.memory_space<vmem>>, vector<150x128xf32>
    %cst = arith.constant dense<0.000000e+00> : vector<100x128xf32>
    %3 = tpu.matmul %1, %2, %cst {dimension_numbers = #tpu.dot_dimension_numbers<[1], [0], [0], [1], [0, 0, 1, 1], [], []>} : vector<100x150xf32>, vector<150x128xf32>, vector<100x128xf32> -> vector<100x128xf32>
    %c0_4 = arith.constant 0 : index
    %c0_5 = arith.constant 0 : index
    %4 = vector.load %arg3[%c0_4, %c0_5] : memref<1x128xf32, #tpu.memory_space<vmem>>, vector<1x128xf32>
    %5 = vector.broadcast %4 : vector<1x128xf32> to vector<100x128xf32>
    %6 = arith.addf %3, %5 : vector<100x128xf32>
    %cst_6 = arith.constant 0.000000e+00 : f32
    %7 = vector.broadcast %cst_6 : f32 to vector<100x128xf32>
    %8 = arith.maximumf %6, %7 : vector<100x128xf32>
    %c0_7 = arith.constant 0 : index
    %c0_8 = arith.constant 0 : index
    %9 = vector.load %arg4[%c0_7, %c0_8] : memref<25x100xf32, #tpu.memory_space<vmem>>, vector<25x100xf32>
    %cst_9 = arith.constant dense<0.000000e+00> : vector<25x128xf32>
    %10 = tpu.matmul %9, %8, %cst_9 {dimension_numbers = #tpu.dot_dimension_numbers<[1], [0], [0], [1], [0, 0, 1, 1], [], []>} : vector<25x100xf32>, vector<100x128xf32>, vector<25x128xf32> -> vector<25x128xf32>
    %c0_10 = arith.constant 0 : index
    %c0_11 = arith.constant 0 : index
    %c0_12 = arith.constant 0 : index
    %11 = vector.load %arg5[%c0_10, %c0_11, %c0_12] : memref<1x25x128xf32, #tpu.memory_space<vmem>>, vector<1x25x128xf32>
    %12 = vector.shape_cast %11 : vector<1x25x128xf32> to vector<25x128xf32>
    %13 = vector.shape_cast %10 : vector<25x128xf32> to vector<1x25x128xf32>
    tpu.vector_store %arg5[%c0_10, %c0_11, %c0_12], %13 {strides = array<i32>} : memref<1x25x128xf32, #tpu.memory_space<vmem>>, vector<1x25x128xf32>,
    return
  }
  func.func @transform_0(%arg0: i32) -> (i32, i32, i32) {
    %c0_i32 = arith.constant 0 : i32
    %c0_i32_0 = arith.constant 0 : i32
    %c0_i32_1 = arith.constant 0 : i32
    return %arg0, %c0_i32, %c0_i32_0 : i32, i32, i32
  }
  func.func @transform_1(%arg0: i32) -> (i32, i32) {
    %c0_i32 = arith.constant 0 : i32
    %c0_i32_0 = arith.constant 0 : i32
    %c0_i32_1 = arith.constant 0 : i32
    return %c0_i32, %c0_i32_0 : i32, i32
  }
  func.func @transform_2(%arg0: i32) -> (i32, i32) {
    %c0_i32 = arith.constant 0 : i32
    %c0_i32_0 = arith.constant 0 : i32
    %c0_i32_1 = arith.constant 0 : i32
    return %c0_i32, %c0_i32_0 : i32, i32
  }
  func.func @transform_3(%arg0: i32) -> (i32, i32) {
    %c0_i32 = arith.constant 0 : i32
    %c0_i32_0 = arith.constant 0 : i32
    %c0_i32_1 = arith.constant 0 : i32
    return %c0_i32, %c0_i32_0 : i32, i32
  }
  func.func @transform_4(%arg0: i32) -> (i32, i32, i32) {
    %c0_i32 = arith.constant 0 : i32
    %c0_i32_0 = arith.constant 0 : i32
    %c0_i32_1 = arith.constant 0 : i32
    return %arg0, %c0_i32, %c0_i32_0 : i32, i32, i32
  }
}

module attributes {stable_mosaic.version = 11 : i64} {
  func.func @fc_stack_kernel(%arg0: i32, %arg1: memref<2x3200xf32, #tpu.memory_space<vmem>>, %arg2: memref<3200x128xf32, #tpu.memory_space<vmem>>, %arg3: memref<1x128xf32, #tpu.memory_space<vmem>>, %arg4: memref<128x128xf32, #tpu.memory_space<vmem>>, %arg5: memref<1x128xf32, #tpu.memory_space<vmem>>, %arg6: memref<128x128xf32, #tpu.memory_space<vmem>>, %arg7: memref<1x128xf32, #tpu.memory_space<vmem>>, %arg8: memref<2x128xf32, #tpu.memory_space<vmem>>) attributes {dimension_semantics = [#tpu.dimension_semantics<arbitrary>], iteration_bounds = array<i64: 1>, scalar_prefetch = 0 : i64, scratch_operands = 0 : i64, tpu.core_type = #tpu.core_type<tc>, window_params = [{pipeline_mode = #tpu.pipeline_mode<synchronous>, transform_indices = @transform_0, window_bounds = array<i64: 2, 3200>}, {pipeline_mode = #tpu.pipeline_mode<synchronous>, transform_indices = @transform_1, window_bounds = array<i64: 3200, 128>}, {pipeline_mode = #tpu.pipeline_mode<synchronous>, transform_indices = @transform_2, window_bounds = array<i64: 1, 128>}, {pipeline_mode = #tpu.pipeline_mode<synchronous>, transform_indices = @transform_3, window_bounds = array<i64: 128, 128>}, {pipeline_mode = #tpu.pipeline_mode<synchronous>, transform_indices = @transform_4, window_bounds = array<i64: 1, 128>}, {pipeline_mode = #tpu.pipeline_mode<synchronous>, transform_indices = @transform_5, window_bounds = array<i64: 128, 128>}, {pipeline_mode = #tpu.pipeline_mode<synchronous>, transform_indices = @transform_6, window_bounds = array<i64: 1, 128>}, {pipeline_mode = #tpu.pipeline_mode<synchronous>, transform_indices = @transform_7, window_bounds = array<i64: 2, 128>}]} {
    %c0 = arith.constant 0 : index
    %c0_0 = arith.constant 0 : index
    %0 = vector.load %arg1[%c0, %c0_0] : memref<2x3200xf32, #tpu.memory_space<vmem>>, vector<2x3200xf32>
    %c0_1 = arith.constant 0 : index
    %c0_2 = arith.constant 0 : index
    %1 = vector.load %arg2[%c0_1, %c0_2] : memref<3200x128xf32, #tpu.memory_space<vmem>>, vector<3200x128xf32>
    %cst = arith.constant dense<0.000000e+00> : vector<2x128xf32>
    %2 = tpu.matmul %0, %1, %cst {dimension_numbers = #tpu.dot_dimension_numbers<[1], [0], [0], [1], [0, 0, 1, 1], [], []>} : vector<2x3200xf32>, vector<3200x128xf32>, vector<2x128xf32> -> vector<2x128xf32>
    %c0_3 = arith.constant 0 : index
    %c0_4 = arith.constant 0 : index
    %3 = vector.load %arg3[%c0_3, %c0_4] : memref<1x128xf32, #tpu.memory_space<vmem>>, vector<1x128xf32>
    %4 = vector.broadcast %3 : vector<1x128xf32> to vector<2x128xf32>
    %5 = arith.addf %2, %4 : vector<2x128xf32>
    %cst_5 = arith.constant 0.000000e+00 : f32
    %6 = vector.broadcast %cst_5 : f32 to vector<2x128xf32>
    %7 = arith.maximumf %5, %6 : vector<2x128xf32>
    %c0_6 = arith.constant 0 : index
    %c0_7 = arith.constant 0 : index
    %8 = vector.load %arg4[%c0_6, %c0_7] : memref<128x128xf32, #tpu.memory_space<vmem>>, vector<128x128xf32>
    %cst_8 = arith.constant dense<0.000000e+00> : vector<2x128xf32>
    %9 = tpu.matmul %7, %8, %cst_8 {dimension_numbers = #tpu.dot_dimension_numbers<[1], [0], [0], [1], [0, 0, 1, 1], [], []>} : vector<2x128xf32>, vector<128x128xf32>, vector<2x128xf32> -> vector<2x128xf32>
    %c0_9 = arith.constant 0 : index
    %c0_10 = arith.constant 0 : index
    %10 = vector.load %arg5[%c0_9, %c0_10] : memref<1x128xf32, #tpu.memory_space<vmem>>, vector<1x128xf32>
    %11 = vector.broadcast %10 : vector<1x128xf32> to vector<2x128xf32>
    %12 = arith.addf %9, %11 : vector<2x128xf32>
    %cst_11 = arith.constant 0.000000e+00 : f32
    %13 = vector.broadcast %cst_11 : f32 to vector<2x128xf32>
    %14 = arith.maximumf %12, %13 : vector<2x128xf32>
    %c0_12 = arith.constant 0 : index
    %c0_13 = arith.constant 0 : index
    %15 = vector.load %arg6[%c0_12, %c0_13] : memref<128x128xf32, #tpu.memory_space<vmem>>, vector<128x128xf32>
    %cst_14 = arith.constant dense<0.000000e+00> : vector<2x128xf32>
    %16 = tpu.matmul %14, %15, %cst_14 {dimension_numbers = #tpu.dot_dimension_numbers<[1], [0], [0], [1], [0, 0, 1, 1], [], []>} : vector<2x128xf32>, vector<128x128xf32>, vector<2x128xf32> -> vector<2x128xf32>
    %c0_15 = arith.constant 0 : index
    %c0_16 = arith.constant 0 : index
    %17 = vector.load %arg7[%c0_15, %c0_16] : memref<1x128xf32, #tpu.memory_space<vmem>>, vector<1x128xf32>
    %18 = vector.broadcast %17 : vector<1x128xf32> to vector<2x128xf32>
    %19 = arith.addf %16, %18 : vector<2x128xf32>
    %c0_17 = arith.constant 0 : index
    %c0_18 = arith.constant 0 : index
    %20 = vector.load %arg8[%c0_17, %c0_18] : memref<2x128xf32, #tpu.memory_space<vmem>>, vector<2x128xf32>
    tpu.vector_store %arg8[%c0_17, %c0_18], %19 {strides = array<i32>} : memref<2x128xf32, #tpu.memory_space<vmem>>, vector<2x128xf32>,
    return
  }
  func.func @transform_0(%arg0: i32) -> (i32, i32) {
    %c0_i32 = arith.constant 0 : i32
    %c0_i32_0 = arith.constant 0 : i32
    %c0_i32_1 = arith.constant 0 : i32
    return %c0_i32, %c0_i32_0 : i32, i32
  }
  func.func @transform_1(%arg0: i32) -> (i32, i32) {
    %c0_i32 = arith.constant 0 : i32
    %c0_i32_0 = arith.constant 0 : i32
    %c0_i32_1 = arith.constant 0 : i32
    return %c0_i32, %c0_i32_0 : i32, i32
  }
  func.func @transform_2(%arg0: i32) -> (i32, i32) {
    %c0_i32 = arith.constant 0 : i32
    %c0_i32_0 = arith.constant 0 : i32
    %c0_i32_1 = arith.constant 0 : i32
    return %c0_i32, %c0_i32_0 : i32, i32
  }
  func.func @transform_3(%arg0: i32) -> (i32, i32) {
    %c0_i32 = arith.constant 0 : i32
    %c0_i32_0 = arith.constant 0 : i32
    %c0_i32_1 = arith.constant 0 : i32
    return %c0_i32, %c0_i32_0 : i32, i32
  }
  func.func @transform_4(%arg0: i32) -> (i32, i32) {
    %c0_i32 = arith.constant 0 : i32
    %c0_i32_0 = arith.constant 0 : i32
    %c0_i32_1 = arith.constant 0 : i32
    return %c0_i32, %c0_i32_0 : i32, i32
  }
  func.func @transform_5(%arg0: i32) -> (i32, i32) {
    %c0_i32 = arith.constant 0 : i32
    %c0_i32_0 = arith.constant 0 : i32
    %c0_i32_1 = arith.constant 0 : i32
    return %c0_i32, %c0_i32_0 : i32, i32
  }
  func.func @transform_6(%arg0: i32) -> (i32, i32) {
    %c0_i32 = arith.constant 0 : i32
    %c0_i32_0 = arith.constant 0 : i32
    %c0_i32_1 = arith.constant 0 : i32
    return %c0_i32, %c0_i32_0 : i32, i32
  }
  func.func @transform_7(%arg0: i32) -> (i32, i32) {
    %c0_i32 = arith.constant 0 : i32
    %c0_i32_0 = arith.constant 0 : i32
    %c0_i32_1 = arith.constant 0 : i32
    return %c0_i32, %c0_i32_0 : i32, i32
  }
}

</mosaic_0001>

<llo_original>
// kernel: lenet5_forward.3
$region0: #{lenet5_forward.3}
  #allocation0 [shape = 'u32[]', space=smem, size = 0x4, offset = 0x4, fixed_abs, tag = 'smem constant byte address 0x4 - core index']
  #allocation1 [shape = 'u32[72,128]{1,0:T(1,128)}', space=vmem, size = 0x9000, scoped, tag = 'internal scratch']
  %s0 = inlined_call_operand.vmem [shape: f32[2,784,25], index: 0, kind: input, shape index: {}]
  %s1 = inlined_call_operand.vmem [shape: f32[25,128], index: 1, kind: input, shape index: {}]
  %s2 = inlined_call_operand.vmem [shape: f32[1,128], index: 2, kind: input, shape index: {}]
  %s3 = inlined_call_operand.vmem [shape: f32[196,784], index: 3, kind: input, shape index: {}]
  %s4 = inlined_call_operand.vmem [shape: f32[2,196,128], index: 4, kind: output, shape index: {}]
  %s5 = sld [smem:[#allocation0]]
  $region49: #{lenet5_forward.3} parent=0
    _
  %s7 = ssub.s32 1, %s5
  %s8 = scalar_select 0, %s7, %s5
  loop: start=0, step=1, limit=4
  $region2: #{lenet5_forward.3} parent=0 // loop_pre_header
    _
  $region3: #{lenet5_forward.3} parent=0 // loop_header
    %s10 = sphi 0, %s14
    %p11 = scmp.ge.s32.totalorder %s10, 4
    %s20 = sphi 0, %s22
    %s23 = sphi 0, %s20
    %s24 = sphi 0, %s23
    %s40 = sphi 0, %s24
    %s44 = sphi 0, %s44
    %s46 = sphi 0, %s44
    %s47 = sphi 0, %s46
    %s61 = sphi 0, %s47
    %s65 = sphi 0, %s65
    %s67 = sphi 0, %s65
    %s68 = sphi 0, %s67
    %s82 = sphi 0, %s68
    %s86 = sphi 0, %s86
    %s88 = sphi 0, %s86
    %s89 = sphi 0, %s88
    %s103 = sphi 0, %s89
    %s109 = sphi 0, %s111
    %s112 = sphi 0, %s109
    %s113 = sphi 0, %s112
    %s129 = sphi 0, %s113
  $region4: #{lenet5_forward.3} parent=0 // loop_header_branch
    %13 = sbr.rel (%p11) target = $region8
  $region5: #{lenet5_forward.3} parent=0 // loop_body
    %s15 = ssub.s32 %s10, 1
    %s16 = ssub.s32 %s10, 2
    %s17 = sadd.s32 %s10, 1
    %s18 = ssub.s32 %s10, %s17
    %p19 = scmp.eq.s32.totalorder %s18, 0
    %s21 = sadd.s32 %s20, 1
    %s22 = scalar_select %p19, %s20, %s21
    %p25 = pneg %p19
    %p26 = scmp.eq.s32.totalorder %s10, 1
    %p27 = por %p25, %p26
    %p28 = scmp.ne.s32.totalorder %s20, %s23
    %p29 = scmp.eq.s32.totalorder %s10, 0
    %p30 = por %p28, %p29
    %p31 = scmp.ne.s32.totalorder %s20, %s23
    %p32 = scmp.eq.s32.totalorder %s15, 1
    %p33 = por %p31, %p32
    %p34 = scmp.ne.s32.totalorder %s23, %s24
    %p35 = scmp.eq.s32.totalorder %s15, 0
    %p36 = por %p34, %p35
    %p37 = scmp.ne.s32.totalorder %s23, %s24
    %p38 = scmp.eq.s32.totalorder %s16, 1
    %p39 = por %p37, %p38
    %p41 = scmp.ne.s32.totalorder %s24, %s40
    %p42 = scmp.eq.s32.totalorder %s16, 0
    %p43 = por %p41, %p42
    %s45 = sadd.s32 %s44, 1
    %p48 = scmp.eq.s32.totalorder %s10, 1
    %p49 = scmp.ne.s32.totalorder %s44, %s46
    %p50 = scmp.eq.s32.totalorder %s10, 0
    %p51 = por %p49, %p50
    %p52 = scmp.ne.s32.totalorder %s44, %s46
    %p53 = scmp.eq.s32.totalorder %s15, 1
    %p54 = por %p52, %p53
    %p55 = scmp.ne.s32.totalorder %s46, %s47
    %p56 = scmp.eq.s32.totalorder %s15, 0
    %p57 = por %p55, %p56
    %p58 = scmp.ne.s32.totalorder %s46, %s47
    %p59 = scmp.eq.s32.totalorder %s16, 1
    %p60 = por %p58, %p59
    %p62 = scmp.ne.s32.totalorder %s47, %s61
    %p63 = scmp.eq.s32.totalorder %s16, 0
    %p64 = por %p62, %p63
    %s66 = sadd.s32 %s65, 1
    %p69 = scmp.eq.s32.totalorder %s10, 1
    %p70 = scmp.ne.s32.totalorder %s65, %s67
    %p71 = scmp.eq.s32.totalorder %s10, 0
    %p72 = por %p70, %p71
    %p73 = scmp.ne.s32.totalorder %s65, %s67
    %p74 = scmp.eq.s32.totalorder %s15, 1
    %p75 = por %p73, %p74
    %p76 = scmp.ne.s32.totalorder %s67, %s68
    %p77 = scmp.eq.s32.totalorder %s15, 0
    %p78 = por %p76, %p77
    %p79 = scmp.ne.s32.totalorder %s67, %s68
    %p80 = scmp.eq.s32.totalorder %s16, 1
    %p81 = por %p79, %p80
    %p83 = scmp.ne.s32.totalorder %s68, %s82
    %p84 = scmp.eq.s32.totalorder %s16, 0
    %p85 = por %p83, %p84
    %s87 = sadd.s32 %s86, 1
    %p90 = scmp.eq.s32.totalorder %s10, 1
    %p91 = scmp.ne.s32.totalorder %s86, %s88
    %p92 = scmp.eq.s32.totalorder %s10, 0
    %p93 = por %p91, %p92
    %p94 = scmp.ne.s32.totalorder %s86, %s88
    %p95 = scmp.eq.s32.totalorder %s15, 1
    %p96 = por %p94, %p95
    %p97 = scmp.ne.s32.totalorder %s88, %s89
    %p98 = scmp.eq.s32.totalorder %s15, 0
    %p99 = por %p97, %p98
    %p100 = scmp.ne.s32.totalorder %s88, %s89
    %p101 = scmp.eq.s32.totalorder %s16, 1
    %p102 = por %p100, %p101
    %p104 = scmp.ne.s32.totalorder %s89, %s103
    %p105 = scmp.eq.s32.totalorder %s16, 0
    %p106 = por %p104, %p105
    %s107 = ssub.s32 %s10, %s17
    %p108 = scmp.eq.s32.totalorder %s107, 0
    %s110 = sadd.s32 %s109, 1
    %s111 = scalar_select %p108, %s109, %s110
    %p114 = pneg %p108
    %p115 = scmp.eq.s32.totalorder %s10, 1
    %p116 = por %p114, %p115
    %p117 = scmp.ne.s32.totalorder %s109, %s112
    %p118 = scmp.eq.s32.totalorder %s10, 0
    %p119 = por %p117, %p118
    %p120 = scmp.ne.s32.totalorder %s109, %s112
    %p121 = scmp.eq.s32.totalorder %s15, 1
    %p122 = por %p120, %p121
    %p123 = scmp.ne.s32.totalorder %s112, %s113
    %p124 = scmp.eq.s32.totalorder %s15, 0
    %p125 = por %p123, %p124
    %p126 = scmp.ne.s32.totalorder %s112, %s113
    %p127 = scmp.eq.s32.totalorder %s16, 1
    %p128 = por %p126, %p127
    %p130 = scmp.ne.s32.totalorder %s113, %s129
    %p131 = scmp.eq.s32.totalorder %s16, 0
    %p132 = por %p130, %p131
    %p133 = scmp.le.s32.totalorder 1, %s10
    %p134 = scmp.lt.s32.totalorder %s10, 3
    %p135 = pnand %p133, %p134
    %p136 = pneg %p135
    // Predicated region
    $region9: #{lenet5_forward.3} parent=5 // pred_check
      _
    $region10: #{lenet5_forward.3} parent=5 // pred_check_branch
      %138 = sbr.rel (%p135) target = $region12
    $region11: #{lenet5_forward.3} parent=5 // pred_region
      %s139 = ssub.s32 %s10, 1
      // Predicated region
      $region13: #{lenet5_forward.3} parent=11 // pred_check
        %p140 = pneg %p57
      $region14: #{lenet5_forward.3} parent=11 // pred_check_branch
        %142 = sbr.rel (%p140) target = $region16
      $region15: #{lenet5_forward.3} parent=11 // pred_region
        _
      $region16: #{lenet5_forward.3} parent=11 // pred_fallthru
        _
      // Predicated region
      $region17: #{lenet5_forward.3} parent=11 // pred_check
        %p143 = pneg %p78
      $region18: #{lenet5_forward.3} parent=11 // pred_check_branch
        %145 = sbr.rel (%p143) target = $region20
      $region19: #{lenet5_forward.3} parent=11 // pred_region
        _
      $region20: #{lenet5_forward.3} parent=11 // pred_fallthru
        _
      // Predicated region
      $region21: #{lenet5_forward.3} parent=11 // pred_check
        %p146 = pneg %p99
      $region22: #{lenet5_forward.3} parent=11 // pred_check_branch
        %148 = sbr.rel (%p146) target = $region24
      $region23: #{lenet5_forward.3} parent=11 // pred_region
        _
      $region24: #{lenet5_forward.3} parent=11 // pred_fallthru
        _
    $region12: #{lenet5_forward.3} parent=5 // pred_fallthru
      _
    %p149 = scmp.lt.s32.totalorder %s10, 2
    // Predicated region
    $region25: #{lenet5_forward.3} parent=5 // pred_check
      %p150 = pneg %p149
    $region26: #{lenet5_forward.3} parent=5 // pred_check_branch
      %152 = sbr.rel (%p150) target = $region28
    $region27: #{lenet5_forward.3} parent=5 // pred_region
      // Predicated region
      $region29: #{lenet5_forward.3} parent=27 // pred_check
        %p153 = pneg %p30
      $region30: #{lenet5_forward.3} parent=27 // pred_check_branch
        %155 = sbr.rel (%p153) target = $region32
      $region31: #{lenet5_forward.3} parent=27 // pred_region
        %p156 = scmp.lt.s32.totalorder %s10, 1
        %s157 = scalar_select %p156, %s10, 1
        %s158 = smul.addr %s157, 98
        %s159 = smul.addr %s158, 8
        %s160 = scalar_lea.vmem %s0, %s159
      $region32: #{lenet5_forward.3} parent=27 // pred_fallthru
        _
    $region28: #{lenet5_forward.3} parent=5 // pred_fallthru
      _
    %p161 = scmp.le.s32.totalorder 1, %s10
    %p162 = scmp.lt.s32.totalorder %s10, 3
    %p163 = pnand %p161, %p162
    %p164 = pneg %p163
    // Predicated region
    $region33: #{lenet5_forward.3} parent=5 // pred_check
      _
    $region34: #{lenet5_forward.3} parent=5 // pred_check_branch
      %166 = sbr.rel (%p163) target = $region36
    $region35: #{lenet5_forward.3} parent=5 // pred_region
      %s167 = ssub.s32 %s10, 1
      %p168 = scmp.lt.s32.totalorder %s15, 1
      %s169 = scalar_select %p168, %s15, 1
      %s170 = smul.addr %s169, 98
      %s171 = smul.addr %s170, 8
      %s172 = scalar_lea.vmem %s0, %s171
      %p173 = pneg %p36
      %p174 = pneg %p33
      %p175 = pneg %p57
      %p176 = pneg %p54
      %p177 = pneg %p78
      %p178 = pneg %p75
      %p179 = pneg %p99
      %p180 = pneg %p96
      %p181 = pneg %p125
      %p182 = pneg %p122
      %p183 = scmp.lt.s32.totalorder %s15, 1
      %s184 = scalar_select %p183, %s15, 1
      %s185 = smul.addr %s184, 25
      %s186 = smul.addr %s185, 8
      %s187 = scalar_lea.vmem %s4, %s186
      %p188 = scmp.lt.s32.totalorder %s15, 1
      %s189 = scalar_select %p188, %s15, 1
      %s190 = smul.addr %s189, 98
      %s191 = smul.addr %s190, 8
      %s192 = scalar_lea.vmem %s0, %s191
      %p193 = scmp.lt.s32.totalorder %s15, 1
      %s194 = scalar_select %p193, %s15, 1
      %s195 = smul.addr %s194, 25
      %s196 = smul.addr %s195, 8
      %s197 = scalar_lea.vmem %s4, %s196
      %v198 = vld [vmem:[%s192] sm:$0xff]
      %v199 = vld [vmem:[%s192 + $0x8] sm:$0xff]
      %v200 = vld [vmem:[%s192 + $0x10] sm:$0xff]
      %v201 = vld [vmem:[%s192 + $0x18] sm:$0xff]
      %v202 = vld [vmem:[%s192 + $0x20] sm:$0xff]
      %v203 = vld [vmem:[%s192 + $0x28] sm:$0xff]
      %v204 = vld [vmem:[%s192 + $0x30] sm:$0xff]
      %v205 = vld [vmem:[%s192 + $0x38] sm:$0xff]
      %v206 = vld [vmem:[%s192 + $0x40] sm:$0xff]
      %v207 = vld [vmem:[%s192 + $0x48] sm:$0xff]
      %v208 = vld [vmem:[%s192 + $0x50] sm:$0xff]
      %v209 = vld [vmem:[%s192 + $0x58] sm:$0xff]
      %v210 = vld [vmem:[%s192 + $0x60] sm:$0xff]
      %v211 = vld [vmem:[%s192 + $0x68] sm:$0xff]
      %v212 = vld [vmem:[%s192 + $0x70] sm:$0xff]
      %v213 = vld [vmem:[%s192 + $0x78] sm:$0xff]
      %v214 = vld [vmem:[%s192 + $0x80] sm:$0xff]
      %v215 = vld [vmem:[%s192 + $0x88] sm:$0xff]
      %v216 = vld [vmem:[%s192 + $0x90] sm:$0xff]
      %v217 = vld [vmem:[%s192 + $0x98] sm:$0xff]
      %v218 = vld [vmem:[%s192 + $0xa0] sm:$0xff]
      %v219 = vld [vmem:[%s192 + $0xa8] sm:$0xff]
      %v220 = vld [vmem:[%s192 + $0xb0] sm:$0xff]
      %v221 = vld [vmem:[%s192 + $0xb8] sm:$0xff]
      %v222 = vld [vmem:[%s192 + $0xc0] sm:$0xff]
      %v223 = vld [vmem:[%s192 + $0xc8] sm:$0xff]
      %v224 = vld [vmem:[%s192 + $0xd0] sm:$0xff]
      %v225 = vld [vmem:[%s192 + $0xd8] sm:$0xff]
      %v226 = vld [vmem:[%s192 + $0xe0] sm:$0xff]
      %v227 = vld [vmem:[%s192 + $0xe8] sm:$0xff]
      %v228 = vld [vmem:[%s192 + $0xf0] sm:$0xff]
      %v229 = vld [vmem:[%s192 + $0xf8] sm:$0xff]
      %v230 = vld [vmem:[%s192 + $0x100] sm:$0xff]
      %v231 = vld [vmem:[%s192 + $0x108] sm:$0xff]
      %v232 = vld [vmem:[%s192 + $0x110] sm:$0xff]
      %v233 = vld [vmem:[%s192 + $0x118] sm:$0xff]
      %v234 = vld [vmem:[%s192 + $0x120] sm:$0xff]
      %v235 = vld [vmem:[%s192 + $0x128] sm:$0xff]
      %v236 = vld [vmem:[%s192 + $0x130] sm:$0xff]
      %v237 = vld [vmem:[%s192 + $0x138] sm:$0xff]
      %v238 = vld [vmem:[%s192 + $0x140] sm:$0xff]
      %v239 = vld [vmem:[%s192 + $0x148] sm:$0xff]
      %v240 = vld [vmem:[%s192 + $0x150] sm:$0xff]
      %v241 = vld [vmem:[%s192 + $0x158] sm:$0xff]
      %v242 = vld [vmem:[%s192 + $0x160] sm:$0xff]
      %v243 = vld [vmem:[%s192 + $0x168] sm:$0xff]
      %v244 = vld [vmem:[%s192 + $0x170] sm:$0xff]
      %v245 = vld [vmem:[%s192 + $0x178] sm:$0xff]
      %v246 = vld [vmem:[%s192 + $0x180] sm:$0xff]
      %v247 = vld [vmem:[%s192 + $0x188] sm:$0xff]
      %v248 = vld [vmem:[%s192 + $0x190] sm:$0xff]
      %v249 = vld [vmem:[%s192 + $0x198] sm:$0xff]
      %v250 = vld [vmem:[%s192 + $0x1a0] sm:$0xff]
      %v251 = vld [vmem:[%s192 + $0x1a8] sm:$0xff]
      %v252 = vld [vmem:[%s192 + $0x1b0] sm:$0xff]
      %v253 = vld [vmem:[%s192 + $0x1b8] sm:$0xff]
      %v254 = vld [vmem:[%s192 + $0x1c0] sm:$0xff]
      %v255 = vld [vmem:[%s192 + $0x1c8] sm:$0xff]
      %v256 = vld [vmem:[%s192 + $0x1d0] sm:$0xff]
      %v257 = vld [vmem:[%s192 + $0x1d8] sm:$0xff]
      %v258 = vld [vmem:[%s192 + $0x1e0] sm:$0xff]
      %v259 = vld [vmem:[%s192 + $0x1e8] sm:$0xff]
      %v260 = vld [vmem:[%s192 + $0x1f0] sm:$0xff]
      %v261 = vld [vmem:[%s192 + $0x1f8] sm:$0xff]
      %v262 = vld [vmem:[%s192 + $0x200] sm:$0xff]
      %v263 = vld [vmem:[%s192 + $0x208] sm:$0xff]
      %v264 = vld [vmem:[%s192 + $0x210] sm:$0xff]
      %v265 = vld [vmem:[%s192 + $0x218] sm:$0xff]
      %v266 = vld [vmem:[%s192 + $0x220] sm:$0xff]
      %v267 = vld [vmem:[%s192 + $0x228] sm:$0xff]
      %v268 = vld [vmem:[%s192 + $0x230] sm:$0xff]
      %v269 = vld [vmem:[%s192 + $0x238] sm:$0xff]
      %v270 = vld [vmem:[%s192 + $0x240] sm:$0xff]
      %v271 = vld [vmem:[%s192 + $0x248] sm:$0xff]
      %v272 = vld [vmem:[%s192 + $0x250] sm:$0xff]
      %v273 = vld [vmem:[%s192 + $0x258] sm:$0xff]
      %v274 = vld [vmem:[%s192 + $0x260] sm:$0xff]
      %v275 = vld [vmem:[%s192 + $0x268] sm:$0xff]
      %v276 = vld [vmem:[%s192 + $0x270] sm:$0xff]
      %v277 = vld [vmem:[%s192 + $0x278] sm:$0xff]
      %v278 = vld [vmem:[%s192 + $0x280] sm:$0xff]
      %v279 = vld [vmem:[%s192 + $0x288] sm:$0xff]
      %v280 = vld [vmem:[%s192 + $0x290] sm:$0xff]
      %v281 = vld [vmem:[%s192 + $0x298] sm:$0xff]
      %v282 = vld [vmem:[%s192 + $0x2a0] sm:$0xff]
      %v283 = vld [vmem:[%s192 + $0x2a8] sm:$0xff]
      %v284 = vld [vmem:[%s192 + $0x2b0] sm:$0xff]
      %v285 = vld [vmem:[%s192 + $0x2b8] sm:$0xff]
      %v286 = vld [vmem:[%s192 + $0x2c0] sm:$0xff]
      %v287 = vld [vmem:[%s192 + $0x2c8] sm:$0xff]
      %v288 = vld [vmem:[%s192 + $0x2d0] sm:$0xff]
      %v289 = vld [vmem:[%s192 + $0x2d8] sm:$0xff]
      %v290 = vld [vmem:[%s192 + $0x2e0] sm:$0xff]
      %v291 = vld [vmem:[%s192 + $0x2e8] sm:$0xff]
      %v292 = vld [vmem:[%s192 + $0x2f0] sm:$0xff]
      %v293 = vld [vmem:[%s192 + $0x2f8] sm:$0xff]
      %v294 = vld [vmem:[%s192 + $0x300] sm:$0xff]
      %v295 = vld [vmem:[%s192 + $0x308] sm:$0xff]
      %v296 = vld [vmem:[%s1] sm:$0xff]
      %v297 = vld [vmem:[%s1 + $0x8] sm:$0xff]
      %v298 = vld [vmem:[%s1 + $0x10] sm:$0xff]
      %v299 = vld [vmem:[%s1 + $0x18] sm:$0x1]
      %v300 = vld [vmem:[%s2] sm:$0x1]
      %v302 = vperm.slane %v300, 0
      %vm304 = vcmask 203776
      %v306 = vsel %vm304, %v198, 0
      %v309 = vsel %vm304, %v199, 0
      %v312 = vsel %vm304, %v200, 0
      %v315 = vsel %vm304, %v201, 0
      %v318 = vsel %vm304, %v202, 0
      %v321 = vsel %vm304, %v203, 0
      %v324 = vsel %vm304, %v204, 0
      %v327 = vsel %vm304, %v205, 0
      %v330 = vsel %vm304, %v206, 0
      %v333 = vsel %vm304, %v207, 0
      %v336 = vsel %vm304, %v208, 0
      %v339 = vsel %vm304, %v209, 0
      %v342 = vsel %vm304, %v210, 0
      %v345 = vsel %vm304, %v211, 0
      %v348 = vsel %vm304, %v212, 0
      %v351 = vsel %vm304, %v213, 0
      %v354 = vsel %vm304, %v214, 0
      %v357 = vsel %vm304, %v215, 0
      %v360 = vsel %vm304, %v216, 0
      %v363 = vsel %vm304, %v217, 0
      %v366 = vsel %vm304, %v218, 0
      %v369 = vsel %vm304, %v219, 0
      %v372 = vsel %vm304, %v220, 0
      %v375 = vsel %vm304, %v221, 0
      %v378 = vsel %vm304, %v222, 0
      %v381 = vsel %vm304, %v223, 0
      %v384 = vsel %vm304, %v224, 0
      %v387 = vsel %vm304, %v225, 0
      %v390 = vsel %vm304, %v226, 0
      %v393 = vsel %vm304, %v227, 0
      %v396 = vsel %vm304, %v228, 0
      %v399 = vsel %vm304, %v229, 0
      %v402 = vsel %vm304, %v230, 0
      %v405 = vsel %vm304, %v231, 0
      %v408 = vsel %vm304, %v232, 0
      %v411 = vsel %vm304, %v233, 0
      %v414 = vsel %vm304, %v234, 0
      %v417 = vsel %vm304, %v235, 0
      %v420 = vsel %vm304, %v236, 0
      %v423 = vsel %vm304, %v237, 0
      %v426 = vsel %vm304, %v238, 0
      %v429 = vsel %vm304, %v239, 0
      %v432 = vsel %vm304, %v240, 0
      %v435 = vsel %vm304, %v241, 0
      %v438 = vsel %vm304, %v242, 0
      %v441 = vsel %vm304, %v243, 0
      %v444 = vsel %vm304, %v244, 0
      %v447 = vsel %vm304, %v245, 0
      %v450 = vsel %vm304, %v246, 0
      %v453 = vsel %vm304, %v247, 0
      %v456 = vsel %vm304, %v248, 0
      %v459 = vsel %vm304, %v249, 0
      %v462 = vsel %vm304, %v250, 0
      %v465 = vsel %vm304, %v251, 0
      %v468 = vsel %vm304, %v252, 0
      %v471 = vsel %vm304, %v253, 0
      %v474 = vsel %vm304, %v254, 0
      %v477 = vsel %vm304, %v255, 0
      %v480 = vsel %vm304, %v256, 0
      %v483 = vsel %vm304, %v257, 0
      %v486 = vsel %vm304, %v258, 0
      %v489 = vsel %vm304, %v259, 0
      %v492 = vsel %vm304, %v260, 0
      %v495 = vsel %vm304, %v261, 0
      %v498 = vsel %vm304, %v262, 0
      %v501 = vsel %vm304, %v263, 0
      %v504 = vsel %vm304, %v264, 0
      %v507 = vsel %vm304, %v265, 0
      %v510 = vsel %vm304, %v266, 0
      %v513 = vsel %vm304, %v267, 0
      %v516 = vsel %vm304, %v268, 0
      %v519 = vsel %vm304, %v269, 0
      %v522 = vsel %vm304, %v270, 0
      %v525 = vsel %vm304, %v271, 0
      %v528 = vsel %vm304, %v272, 0
      %v531 = vsel %vm304, %v273, 0
      %v534 = vsel %vm304, %v274, 0
      %v537 = vsel %vm304, %v275, 0
      %v540 = vsel %vm304, %v276, 0
      %v543 = vsel %vm304, %v277, 0
      %v546 = vsel %vm304, %v278, 0
      %v549 = vsel %vm304, %v279, 0
      %v552 = vsel %vm304, %v280, 0
      %v555 = vsel %vm304, %v281, 0
      %v558 = vsel %vm304, %v282, 0
      %v561 = vsel %vm304, %v283, 0
      %v564 = vsel %vm304, %v284, 0
      %v567 = vsel %vm304, %v285, 0
      %v570 = vsel %vm304, %v286, 0
      %v573 = vsel %vm304, %v287, 0
      %v576 = vsel %vm304, %v288, 0
      %v579 = vsel %vm304, %v289, 0
      %v582 = vsel %vm304, %v290, 0
      %v585 = vsel %vm304, %v291, 0
      %v588 = vsel %vm304, %v292, 0
      %v591 = vsel %vm304, %v293, 0
      %v594 = vsel %vm304, %v294, 0
      %v597 = vsel %vm304, %v295, 0
      %vm599 = vcmask 1040384
      %v601 = vsel %vm599, %v299, 0
      %603 = vmatpush.msra.mxu0 0.0
      %604 = vmatpush.msra.mxu0 0.0
      %605 = vmatpush.msra.mxu0 0.0
      %606 = vmatpush.msra.mxu0 0.0
      %607 = vmatpush.msra.mxu0 0.0
      %608 = vmatpush.msra.mxu0 0.0
      %609 = vmatpush.msra.mxu0 0.0
      %610 = vmatpush.msra.mxu0 0.0
      %611 = vmatpush.msra.mxu0 0.0
      %612 = vmatpush.msra.mxu0 0.0
      %613 = vmatpush.msra.mxu0 0.0
      %614 = vmatpush.msra.mxu0 0.0
      %615 = vmatpush.msra.mxu0 %v601
      %616 = vmatpush.msra.mxu0 %v298
      %617 = vmatpush.msra.mxu0 %v297
      %618 = vmatpush.msra.mxu0 %v296
      %619 = vmatmul.f32.gmra.mxu0 %v306
      %v620 = vpop.f32.mrf.mxu0
      %v621 = vadd.f32 %v302, %v620
      %622 = vmatmul.f32.gmra.mxu0 %v309
      %v623 = vpop.f32.mrf.mxu0
      %v624 = vadd.f32 %v302, %v623
      %625 = vmatmul.f32.gmra.mxu0 %v312
      %v626 = vpop.f32.mrf.mxu0
      %v627 = vadd.f32 %v302, %v626
      %628 = vmatmul.f32.gmra.mxu0 %v315
      %v629 = vpop.f32.mrf.mxu0
      %v630 = vadd.f32 %v302, %v629
      %631 = vmatmul.f32.gmra.mxu0 %v318
      %v632 = vpop.f32.mrf.mxu0
      %v633 = vadd.f32 %v302, %v632
      %634 = vmatmul.f32.gmra.mxu0 %v321
      %v635 = vpop.f32.mrf.mxu0
      %v636 = vadd.f32 %v302, %v635
      %637 = vmatmul.f32.gmra.mxu0 %v324
      %v638 = vpop.f32.mrf.mxu0
      %v639 = vadd.f32 %v302, %v638
      %640 = vmatmul.f32.gmra.mxu0 %v327
      %v641 = vpop.f32.mrf.mxu0
      %v642 = vadd.f32 %v302, %v641
      %643 = vmatmul.f32.gmra.mxu0 %v330
      %v644 = vpop.f32.mrf.mxu0
      %v645 = vadd.f32 %v302, %v644
      %646 = vmatmul.f32.gmra.mxu0 %v333
      %v647 = vpop.f32.mrf.mxu0
      %v648 = vadd.f32 %v302, %v647
      %649 = vmatmul.f32.gmra.mxu0 %v336
      %v650 = vpop.f32.mrf.mxu0
      %v651 = vadd.f32 %v302, %v650
      %652 = vmatmul.f32.gmra.mxu0 %v339
      %v653 = vpop.f32.mrf.mxu0
      %v654 = vadd.f32 %v302, %v653
      %655 = vmatmul.f32.gmra.mxu0 %v342
      %v656 = vpop.f32.mrf.mxu0
      %v657 = vadd.f32 %v302, %v656
      %658 = vmatmul.f32.gmra.mxu0 %v345
      %v659 = vpop.f32.mrf.mxu0
      %v660 = vadd.f32 %v302, %v659
      %661 = vmatmul.f32.gmra.mxu0 %v348
      %v662 = vpop.f32.mrf.mxu0
      %v663 = vadd.f32 %v302, %v662
      %664 = vmatmul.f32.gmra.mxu0 %v351
      %v665 = vpop.f32.mrf.mxu0
      %v666 = vadd.f32 %v302, %v665
      %667 = vmatmul.f32.gmra.mxu0 %v354
      %v668 = vpop.f32.mrf.mxu0
      %v669 = vadd.f32 %v302, %v668
      %670 = vmatmul.f32.gmra.mxu0 %v357
      %v671 = vpop.f32.mrf.mxu0
      %v672 = vadd.f32 %v302, %v671
      %673 = vmatmul.f32.gmra.mxu0 %v360
      %v674 = vpop.f32.mrf.mxu0
      %v675 = vadd.f32 %v302, %v674
      %676 = vmatmul.f32.gmra.mxu0 %v363
      %v677 = vpop.f32.mrf.mxu0
      %v678 = vadd.f32 %v302, %v677
      %679 = vmatmul.f32.gmra.mxu0 %v366
      %v680 = vpop.f32.mrf.mxu0
      %v681 = vadd.f32 %v302, %v680
      %682 = vmatmul.f32.gmra.mxu0 %v369
      %v683 = vpop.f32.mrf.mxu0
      %v684 = vadd.f32 %v302, %v683
      %685 = vmatmul.f32.gmra.mxu0 %v372
      %v686 = vpop.f32.mrf.mxu0
      %v687 = vadd.f32 %v302, %v686
      %688 = vmatmul.f32.gmra.mxu0 %v375
      %v689 = vpop.f32.mrf.mxu0
      %v690 = vadd.f32 %v302, %v689
      %691 = vmatmul.f32.gmra.mxu0 %v378
      %v692 = vpop.f32.mrf.mxu0
      %v693 = vadd.f32 %v302, %v692
      %694 = vmatmul.f32.gmra.mxu0 %v381
      %v695 = vpop.f32.mrf.mxu0
      %v696 = vadd.f32 %v302, %v695
      %697 = vmatmul.f32.gmra.mxu0 %v384
      %v698 = vpop.f32.mrf.mxu0
      %v699 = vadd.f32 %v302, %v698
      %700 = vmatmul.f32.gmra.mxu0 %v387
      %v701 = vpop.f32.mrf.mxu0
      %v702 = vadd.f32 %v302, %v701
      %703 = vmatmul.f32.gmra.mxu0 %v390
      %v704 = vpop.f32.mrf.mxu0
      %v705 = vadd.f32 %v302, %v704
      %706 = vmatmul.f32.gmra.mxu0 %v393
      %v707 = vpop.f32.mrf.mxu0
      %v708 = vadd.f32 %v302, %v707
      %709 = vmatmul.f32.gmra.mxu0 %v396
      %v710 = vpop.f32.mrf.mxu0
      %v711 = vadd.f32 %v302, %v710
      %712 = vmatmul.f32.gmra.mxu0 %v399
      %v713 = vpop.f32.mrf.mxu0
      %v714 = vadd.f32 %v302, %v713
      %715 = vmatmul.f32.gmra.mxu0 %v402
      %v716 = vpop.f32.mrf.mxu0
      %v717 = vadd.f32 %v302, %v716
      %718 = vmatmul.f32.gmra.mxu0 %v405
      %v719 = vpop.f32.mrf.mxu0
      %v720 = vadd.f32 %v302, %v719
      %721 = vmatmul.f32.gmra.mxu0 %v408
      %v722 = vpop.f32.mrf.mxu0
      %v723 = vadd.f32 %v302, %v722
      %724 = vmatmul.f32.gmra.mxu0 %v411
      %v725 = vpop.f32.mrf.mxu0
      %v726 = vadd.f32 %v302, %v725
      %727 = vmatmul.f32.gmra.mxu0 %v414
      %v728 = vpop.f32.mrf.mxu0
      %v729 = vadd.f32 %v302, %v728
      %730 = vmatmul.f32.gmra.mxu0 %v417
      %v731 = vpop.f32.mrf.mxu0
      %v732 = vadd.f32 %v302, %v731
      %733 = vmatmul.f32.gmra.mxu0 %v420
      %v734 = vpop.f32.mrf.mxu0
      %v735 = vadd.f32 %v302, %v734
      %736 = vmatmul.f32.gmra.mxu0 %v423
      %v737 = vpop.f32.mrf.mxu0
      %v738 = vadd.f32 %v302, %v737
      %739 = vmatmul.f32.gmra.mxu0 %v426
      %v740 = vpop.f32.mrf.mxu0
      %v741 = vadd.f32 %v302, %v740
      %742 = vmatmul.f32.gmra.mxu0 %v429
      %v743 = vpop.f32.mrf.mxu0
      %v744 = vadd.f32 %v302, %v743
      %745 = vmatmul.f32.gmra.mxu0 %v432
      %v746 = vpop.f32.mrf.mxu0
      %v747 = vadd.f32 %v302, %v746
      %748 = vmatmul.f32.gmra.mxu0 %v435
      %v749 = vpop.f32.mrf.mxu0
      %v750 = vadd.f32 %v302, %v749
      %751 = vmatmul.f32.gmra.mxu0 %v438
      %v752 = vpop.f32.mrf.mxu0
      %v753 = vadd.f32 %v302, %v752
      %754 = vmatmul.f32.gmra.mxu0 %v441
      %v755 = vpop.f32.mrf.mxu0
      %v756 = vadd.f32 %v302, %v755
      %757 = vmatmul.f32.gmra.mxu0 %v444
      %v758 = vpop.f32.mrf.mxu0
      %v759 = vadd.f32 %v302, %v758
      %760 = vmatmul.f32.gmra.mxu0 %v447
      %v761 = vpop.f32.mrf.mxu0
      %v762 = vadd.f32 %v302, %v761
      %763 = vmatmul.f32.gmra.mxu0 %v450
      %v764 = vpop.f32.mrf.mxu0
      %v765 = vadd.f32 %v302, %v764
      %766 = vmatmul.f32.gmra.mxu0 %v453
      %v767 = vpop.f32.mrf.mxu0
      %v768 = vadd.f32 %v302, %v767
      %769 = vmatmul.f32.gmra.mxu0 %v456
      %v770 = vpop.f32.mrf.mxu0
      %v771 = vadd.f32 %v302, %v770
      %772 = vmatmul.f32.gmra.mxu0 %v459
      %v773 = vpop.f32.mrf.mxu0
      %v774 = vadd.f32 %v302, %v773
      %775 = vmatmul.f32.gmra.mxu0 %v462
      %v776 = vpop.f32.mrf.mxu0
      %v777 = vadd.f32 %v302, %v776
      %778 = vmatmul.f32.gmra.mxu0 %v465
      %v779 = vpop.f32.mrf.mxu0
      %v780 = vadd.f32 %v302, %v779
      %781 = vmatmul.f32.gmra.mxu0 %v468
      %v782 = vpop.f32.mrf.mxu0
      %v783 = vadd.f32 %v302, %v782
      %784 = vmatmul.f32.gmra.mxu0 %v471
      %v785 = vpop.f32.mrf.mxu0
      %v786 = vadd.f32 %v302, %v785
      %787 = vmatmul.f32.gmra.mxu0 %v474
      %v788 = vpop.f32.mrf.mxu0
      %v789 = vadd.f32 %v302, %v788
      %790 = vmatmul.f32.gmra.mxu0 %v477
      %v791 = vpop.f32.mrf.mxu0
      %v792 = vadd.f32 %v302, %v791
      %793 = vmatmul.f32.gmra.mxu0 %v480
      %v794 = vpop.f32.mrf.mxu0
      %v795 = vadd.f32 %v302, %v794
      %796 = vmatmul.f32.gmra.mxu0 %v483
      %v797 = vpop.f32.mrf.mxu0
      %v798 = vadd.f32 %v302, %v797
      %799 = vmatmul.f32.gmra.mxu0 %v486
      %v800 = vpop.f32.mrf.mxu0
      %v801 = vadd.f32 %v302, %v800
      %802 = vmatmul.f32.gmra.mxu0 %v489
      %v803 = vpop.f32.mrf.mxu0
      %v804 = vadd.f32 %v302, %v803
      %805 = vmatmul.f32.gmra.mxu0 %v492
      %v806 = vpop.f32.mrf.mxu0
      %v807 = vadd.f32 %v302, %v806
      %808 = vmatmul.f32.gmra.mxu0 %v495
      %v809 = vpop.f32.mrf.mxu0
      %v810 = vadd.f32 %v302, %v809
      %811 = vmatmul.f32.gmra.mxu0 %v498
      %v812 = vpop.f32.mrf.mxu0
      %v813 = vadd.f32 %v302, %v812
      %814 = vmatmul.f32.gmra.mxu0 %v501
      %v815 = vpop.f32.mrf.mxu0
      %v816 = vadd.f32 %v302, %v815
      %817 = vmatmul.f32.gmra.mxu0 %v504
      %v818 = vpop.f32.mrf.mxu0
      %v819 = vadd.f32 %v302, %v818
      %820 = vmatmul.f32.gmra.mxu0 %v507
      %v821 = vpop.f32.mrf.mxu0
      %v822 = vadd.f32 %v302, %v821
      %823 = vmatmul.f32.gmra.mxu0 %v510
      %v824 = vpop.f32.mrf.mxu0
      %v825 = vadd.f32 %v302, %v824
      %826 = vmatmul.f32.gmra.mxu0 %v513
      %v827 = vpop.f32.mrf.mxu0
      %v828 = vadd.f32 %v302, %v827
      %829 = vmatmul.f32.gmra.mxu0 %v516
      %v830 = vpop.f32.mrf.mxu0
      %v831 = vadd.f32 %v302, %v830
      %832 = vmatmul.f32.gmra.mxu0 %v519
      %v833 = vpop.f32.mrf.mxu0
      %v834 = vadd.f32 %v302, %v833
      %835 = vmatmul.f32.gmra.mxu0 %v522
      %v836 = vpop.f32.mrf.mxu0
      %v837 = vadd.f32 %v302, %v836
      %838 = vmatmul.f32.gmra.mxu0 %v525
      %v839 = vpop.f32.mrf.mxu0
      %v840 = vadd.f32 %v302, %v839
      %841 = vmatmul.f32.gmra.mxu0 %v528
      %v842 = vpop.f32.mrf.mxu0
      %v843 = vadd.f32 %v302, %v842
      %844 = vmatmul.f32.gmra.mxu0 %v531
      %v845 = vpop.f32.mrf.mxu0
      %v846 = vadd.f32 %v302, %v845
      %847 = vmatmul.f32.gmra.mxu0 %v534
      %v848 = vpop.f32.mrf.mxu0
      %v849 = vadd.f32 %v302, %v848
      %850 = vmatmul.f32.gmra.mxu0 %v537
      %v851 = vpop.f32.mrf.mxu0
      %v852 = vadd.f32 %v302, %v851
      %853 = vmatmul.f32.gmra.mxu0 %v540
      %v854 = vpop.f32.mrf.mxu0
      %v855 = vadd.f32 %v302, %v854
      %856 = vmatmul.f32.gmra.mxu0 %v543
      %v857 = vpop.f32.mrf.mxu0
      %v858 = vadd.f32 %v302, %v857
      %859 = vmatmul.f32.gmra.mxu0 %v546
      %v860 = vpop.f32.mrf.mxu0
      %v861 = vadd.f32 %v302, %v860
      %862 = vmatmul.f32.gmra.mxu0 %v549
      %v863 = vpop.f32.mrf.mxu0
      %v864 = vadd.f32 %v302, %v863
      %865 = vmatmul.f32.gmra.mxu0 %v552
      %v866 = vpop.f32.mrf.mxu0
      %v867 = vadd.f32 %v302, %v866
      %868 = vmatmul.f32.gmra.mxu0 %v555
      %v869 = vpop.f32.mrf.mxu0
      %v870 = vadd.f32 %v302, %v869
      %871 = vmatmul.f32.gmra.mxu0 %v558
      %v872 = vpop.f32.mrf.mxu0
      %v873 = vadd.f32 %v302, %v872
      %874 = vmatmul.f32.gmra.mxu0 %v561
      %v875 = vpop.f32.mrf.mxu0
      %v876 = vadd.f32 %v302, %v875
      %877 = vmatmul.f32.gmra.mxu0 %v564
      %v878 = vpop.f32.mrf.mxu0
      %v879 = vadd.f32 %v302, %v878
      %880 = vmatmul.f32.gmra.mxu0 %v567
      %v881 = vpop.f32.mrf.mxu0
      %v882 = vadd.f32 %v302, %v881
      %883 = vmatmul.f32.gmra.mxu0 %v570
      %v884 = vpop.f32.mrf.mxu0
      %v885 = vadd.f32 %v302, %v884
      %886 = vmatmul.f32.gmra.mxu0 %v573
      %v887 = vpop.f32.mrf.mxu0
      %v888 = vadd.f32 %v302, %v887
      %889 = vmatmul.f32.gmra.mxu0 %v576
      %v890 = vpop.f32.mrf.mxu0
      %v891 = vadd.f32 %v302, %v890
      %892 = vmatmul.f32.gmra.mxu0 %v579
      %v893 = vpop.f32.mrf.mxu0
      %v894 = vadd.f32 %v302, %v893
      %895 = vmatmul.f32.gmra.mxu0 %v582
      %v896 = vpop.f32.mrf.mxu0
      %v897 = vadd.f32 %v302, %v896
      %898 = vmatmul.f32.gmra.mxu0 %v585
      %v899 = vpop.f32.mrf.mxu0
      %v900 = vadd.f32 %v302, %v899
      %901 = vmatmul.f32.gmra.mxu0 %v588
      %v902 = vpop.f32.mrf.mxu0
      %v903 = vadd.f32 %v302, %v902
      %904 = vmatmul.f32.gmra.mxu0 %v591
      %v905 = vpop.f32.mrf.mxu0
      %v906 = vadd.f32 %v302, %v905
      %907 = vmatmul.f32.gmra.mxu0 %v594
      %v908 = vpop.f32.mrf.mxu0
      %v909 = vadd.f32 %v302, %v908
      %910 = vmatmul.f32.gmra.mxu0 %v597
      %v911 = vpop.f32.mrf.mxu0
      %v912 = vadd.f32 %v302, %v911
      %913 = vdwg.mxu0
      %v914 = vmax.f32 %v621, 0.0
      %v915 = vmax.f32 %v624, 0.0
      %v916 = vmax.f32 %v627, 0.0
      %v917 = vmax.f32 %v630, 0.0
      %v918 = vmax.f32 %v633, 0.0
      %v919 = vmax.f32 %v636, 0.0
      %v920 = vmax.f32 %v639, 0.0
      %v921 = vmax.f32 %v642, 0.0
      %v922 = vmax.f32 %v645, 0.0
      %v923 = vmax.f32 %v648, 0.0
      %v924 = vmax.f32 %v651, 0.0
      %v925 = vmax.f32 %v654, 0.0
      %v926 = vmax.f32 %v657, 0.0
      %v927 = vmax.f32 %v660, 0.0
      %v928 = vmax.f32 %v663, 0.0
      %v929 = vmax.f32 %v666, 0.0
      %v930 = vmax.f32 %v669, 0.0
      %v931 = vmax.f32 %v672, 0.0
      %v932 = vmax.f32 %v675, 0.0
      %v933 = vmax.f32 %v678, 0.0
      %v934 = vmax.f32 %v681, 0.0
      %v935 = vmax.f32 %v684, 0.0
      %v936 = vmax.f32 %v687, 0.0
      %v937 = vmax.f32 %v690, 0.0
      %v938 = vmax.f32 %v693, 0.0
      %v939 = vmax.f32 %v696, 0.0
      %v940 = vmax.f32 %v699, 0.0
      %v941 = vmax.f32 %v702, 0.0
      %v942 = vmax.f32 %v705, 0.0
      %v943 = vmax.f32 %v708, 0.0
      %v944 = vmax.f32 %v711, 0.0
      %v945 = vmax.f32 %v714, 0.0
      %v946 = vmax.f32 %v717, 0.0
      %v947 = vmax.f32 %v720, 0.0
      %v948 = vmax.f32 %v723, 0.0
      %v949 = vmax.f32 %v726, 0.0
      %v950 = vmax.f32 %v729, 0.0
      %v951 = vmax.f32 %v732, 0.0
      %v952 = vmax.f32 %v735, 0.0
      %v953 = vmax.f32 %v738, 0.0
      %v954 = vmax.f32 %v741, 0.0
      %v955 = vmax.f32 %v744, 0.0
      %v956 = vmax.f32 %v747, 0.0
      %v957 = vmax.f32 %v750, 0.0
      %v958 = vmax.f32 %v753, 0.0
      %v959 = vmax.f32 %v756, 0.0
      %v960 = vmax.f32 %v759, 0.0
      %v961 = vmax.f32 %v762, 0.0
      %v962 = vmax.f32 %v765, 0.0
      %v963 = vmax.f32 %v768, 0.0
      %v964 = vmax.f32 %v771, 0.0
      %v965 = vmax.f32 %v774, 0.0
      %v966 = vmax.f32 %v777, 0.0
      %v967 = vmax.f32 %v780, 0.0
      %v968 = vmax.f32 %v783, 0.0
      %v969 = vmax.f32 %v786, 0.0
      %v970 = vmax.f32 %v789, 0.0
      %v971 = vmax.f32 %v792, 0.0
      %v972 = vmax.f32 %v795, 0.0
      %v973 = vmax.f32 %v798, 0.0
      %v974 = vmax.f32 %v801, 0.0
      %v975 = vmax.f32 %v804, 0.0
      %v976 = vmax.f32 %v807, 0.0
      %v977 = vmax.f32 %v810, 0.0
      %v978 = vmax.f32 %v813, 0.0
      %v979 = vmax.f32 %v816, 0.0
      %v980 = vmax.f32 %v819, 0.0
      %v981 = vmax.f32 %v822, 0.0
      %v982 = vmax.f32 %v825, 0.0
      %v983 = vmax.f32 %v828, 0.0
      %v984 = vmax.f32 %v831, 0.0
      %v985 = vmax.f32 %v834, 0.0
      %v986 = vmax.f32 %v837, 0.0
      %v987 = vmax.f32 %v840, 0.0
      %v988 = vmax.f32 %v843, 0.0
      %v989 = vmax.f32 %v846, 0.0
      %v990 = vmax.f32 %v849, 0.0
      %v991 = vmax.f32 %v852, 0.0
      %v992 = vmax.f32 %v855, 0.0
      %v993 = vmax.f32 %v858, 0.0
      %v994 = vmax.f32 %v861, 0.0
      %v995 = vmax.f32 %v864, 0.0
      %v996 = vmax.f32 %v867, 0.0
      %v997 = vmax.f32 %v870, 0.0
      %v998 = vmax.f32 %v873, 0.0
      %v999 = vmax.f32 %v876, 0.0
      %v1000 = vmax.f32 %v879, 0.0
      %v1001 = vmax.f32 %v882, 0.0
      %v1002 = vmax.f32 %v885, 0.0
      %v1003 = vmax.f32 %v888, 0.0
      %v1004 = vmax.f32 %v891, 0.0
      %v1005 = vmax.f32 %v894, 0.0
      %v1006 = vmax.f32 %v897, 0.0
      %v1007 = vmax.f32 %v900, 0.0
      %v1008 = vmax.f32 %v903, 0.0
      %v1009 = vmax.f32 %v906, 0.0
      %v1010 = vmax.f32 %v909, 0.0
      %v1011 = vmax.f32 %v912, 0.0
      %v1012 = vld [vmem:[%s3] sm:$0xff]
      %v1013 = vld [vmem:[%s3 + $0x8] sm:$0xff]
      %v1014 = vld [vmem:[%s3 + $0x10] sm:$0xff]
      %v1015 = vld [vmem:[%s3 + $0x18] sm:$0xff]
      %v1016 = vld [vmem:[%s3 + $0x20] sm:$0xff]
      %v1017 = vld [vmem:[%s3 + $0x28] sm:$0xff]
      %v1018 = vld [vmem:[%s3 + $0x30] sm:$0xff]
      %v1019 = vld [vmem:[%s3 + $0x38] sm:$0xff]
      %v1020 = vld [vmem:[%s3 + $0x40] sm:$0xff]
      %v1021 = vld [vmem:[%s3 + $0x48] sm:$0xff]
      %v1022 = vld [vmem:[%s3 + $0x50] sm:$0xff]
      %v1023 = vld [vmem:[%s3 + $0x58] sm:$0xff]
      %v1024 = vld [vmem:[%s3 + $0x60] sm:$0xff]
      %v1025 = vld [vmem:[%s3 + $0x68] sm:$0xff]
      %v1026 = vld [vmem:[%s3 + $0x70] sm:$0xff]
      %v1027 = vld [vmem:[%s3 + $0x78] sm:$0xff]
      %v1028 = vld [vmem:[%s3 + $0x80] sm:$0xff]
      %v1029 = vld [vmem:[%s3 + $0x88] sm:$0xff]
      %v1030 = vld [vmem:[%s3 + $0x90] sm:$0xff]
      %v1031 = vld [vmem:[%s3 + $0x98] sm:$0xff]
      %v1032 = vld [vmem:[%s3 + $0xa0] sm:$0xff]
      %v1033 = vld [vmem:[%s3 + $0xa8] sm:$0xff]
      %v1034 = vld [vmem:[%s3 + $0xb0] sm:$0xff]
      %v1035 = vld [vmem:[%s3 + $0xb8] sm:$0xff]
      %v1036 = vld [vmem:[%s3 + $0xc0] sm:$0xff]
      %v1037 = vld [vmem:[%s3 + $0xc8] sm:$0xff]
      %v1038 = vld [vmem:[%s3 + $0xd0] sm:$0xff]
      %v1039 = vld [vmem:[%s3 + $0xd8] sm:$0xff]
      %v1040 = vld [vmem:[%s3 + $0xe0] sm:$0xff]
      %v1041 = vld [vmem:[%s3 + $0xe8] sm:$0xff]
      %v1042 = vld [vmem:[%s3 + $0xf0] sm:$0xff]
      %v1043 = vld [vmem:[%s3 + $0xf8] sm:$0xff]
      %v1044 = vld [vmem:[%s3 + $0x100] sm:$0xff]
      %v1045 = vld [vmem:[%s3 + $0x108] sm:$0xff]
      %v1046 = vld [vmem:[%s3 + $0x110] sm:$0xff]
      %v1047 = vld [vmem:[%s3 + $0x118] sm:$0xff]
      %v1048 = vld [vmem:[%s3 + $0x120] sm:$0xff]
      %v1049 = vld [vmem:[%s3 + $0x128] sm:$0xff]
      %v1050 = vld [vmem:[%s3 + $0x130] sm:$0xff]
      %v1051 = vld [vmem:[%s3 + $0x138] sm:$0xff]
      %v1052 = vld [vmem:[%s3 + $0x140] sm:$0xff]
      %v1053 = vld [vmem:[%s3 + $0x148] sm:$0xff]
      %v1054 = vld [vmem:[%s3 + $0x150] sm:$0xff]
      %v1055 = vld [vmem:[%s3 + $0x158] sm:$0xff]
      %v1056 = vld [vmem:[%s3 + $0x160] sm:$0xff]
      %v1057 = vld [vmem:[%s3 + $0x168] sm:$0xff]
      %v1058 = vld [vmem:[%s3 + $0x170] sm:$0xff]
      %v1059 = vld [vmem:[%s3 + $0x178] sm:$0xff]
      %v1060 = vld [vmem:[%s3 + $0x180] sm:$0xff]
      %v1061 = vld [vmem:[%s3 + $0x188] sm:$0xff]
      %v1062 = vld [vmem:[%s3 + $0x190] sm:$0xff]
      %v1063 = vld [vmem:[%s3 + $0x198] sm:$0xff]
      %v1064 = vld [vmem:[%s3 + $0x1a0] sm:$0xff]
      %v1065 = vld [vmem:[%s3 + $0x1a8] sm:$0xff]
      %v1066 = vld [vmem:[%s3 + $0x1b0] sm:$0xff]
      %v1067 = vld [vmem:[%s3 + $0x1b8] sm:$0xff]
      %v1068 = vld [vmem:[%s3 + $0x1c0] sm:$0xff]
      %v1069 = vld [vmem:[%s3 + $0x1c8] sm:$0xff]
      %v1070 = vld [vmem:[%s3 + $0x1d0] sm:$0xff]
      %v1071 = vld [vmem:[%s3 + $0x1d8] sm:$0xff]
      %v1072 = vld [vmem:[%s3 + $0x1e0] sm:$0xff]
      %v1073 = vld [vmem:[%s3 + $0x1e8] sm:$0xff]
      %v1074 = vld [vmem:[%s3 + $0x1f0] sm:$0xff]
      %v1075 = vld [vmem:[%s3 + $0x1f8] sm:$0xff]
      %v1076 = vld [vmem:[%s3 + $0x200] sm:$0xff]
      %v1077 = vld [vmem:[%s3 + $0x208] sm:$0xff]
      %v1078 = vld [vmem:[%s3 + $0x210] sm:$0xff]
      %v1079 = vld [vmem:[%s3 + $0x218] sm:$0xff]
      %v1080 = vld [vmem:[%s3 + $0x220] sm:$0xff]
      %v1081 = vld [vmem:[%s3 + $0x228] sm:$0xff]
      %v1082 = vld [vmem:[%s3 + $0x230] sm:$0xff]
      %v1083 = vld [vmem:[%s3 + $0x238] sm:$0xff]
      %v1084 = vld [vmem:[%s3 + $0x240] sm:$0xff]
      %v1085 = vld [vmem:[%s3 + $0x248] sm:$0xff]
      %v1086 = vld [vmem:[%s3 + $0x250] sm:$0xff]
      %v1087 = vld [vmem:[%s3 + $0x258] sm:$0xff]
      %v1088 = vld [vmem:[%s3 + $0x260] sm:$0xff]
      %v1089 = vld [vmem:[%s3 + $0x268] sm:$0xff]
      %v1090 = vld [vmem:[%s3 + $0x270] sm:$0xff]
      %v1091 = vld [vmem:[%s3 + $0x278] sm:$0xff]
      %v1092 = vld [vmem:[%s3 + $0x280] sm:$0xff]
      %v1093 = vld [vmem:[%s3 + $0x288] sm:$0xff]
      %v1094 = vld [vmem:[%s3 + $0x290] sm:$0xff]
      %v1095 = vld [vmem:[%s3 + $0x298] sm:$0xff]
      %v1096 = vld [vmem:[%s3 + $0x2a0] sm:$0xff]
      %v1097 = vld [vmem:[%s3 + $0x2a8] sm:$0xff]
      %v1098 = vld [vmem:[%s3 + $0x2b0] sm:$0xff]
      %v1099 = vld [vmem:[%s3 + $0x2b8] sm:$0xff]
      %v1100 = vld [vmem:[%s3 + $0x2c0] sm:$0xff]
      %v1101 = vld [vmem:[%s3 + $0x2c8] sm:$0xff]
      %v1102 = vld [vmem:[%s3 + $0x2d0] sm:$0xff]
      %v1103 = vld [vmem:[%s3 + $0x2d8] sm:$0xff]
      %v1104 = vld [vmem:[%s3 + $0x2e0] sm:$0xff]
      %v1105 = vld [vmem:[%s3 + $0x2e8] sm:$0xff]
      %v1106 = vld [vmem:[%s3 + $0x2f0] sm:$0xff]
      %v1107 = vld [vmem:[%s3 + $0x2f8] sm:$0xff]
      %v1108 = vld [vmem:[%s3 + $0x300] sm:$0xff]
      %v1109 = vld [vmem:[%s3 + $0x308] sm:$0xff]
      %v1110 = vld [vmem:[%s3 + $0x310] sm:$0xff]
      %v1111 = vld [vmem:[%s3 + $0x318] sm:$0xff]
      %v1112 = vld [vmem:[%s3 + $0x320] sm:$0xff]
      %v1113 = vld [vmem:[%s3 + $0x328] sm:$0xff]
      %v1114 = vld [vmem:[%s3 + $0x330] sm:$0xff]
      %v1115 = vld [vmem:[%s3 + $0x338] sm:$0xff]
      %v1116 = vld [vmem:[%s3 + $0x340] sm:$0xff]
      %v1117 = vld [vmem:[%s3 + $0x348] sm:$0xff]
      %v1118 = vld [vmem:[%s3 + $0x350] sm:$0xff]
      %v1119 = vld [vmem:[%s3 + $0x358] sm:$0xff]
      %v1120 = vld [vmem:[%s3 + $0x360] sm:$0xff]
      %v1121 = vld [vmem:[%s3 + $0x368] sm:$0xff]
      %v1122 = vld [vmem:[%s3 + $0x370] sm:$0xff]
      %v1123 = vld [vmem:[%s3 + $0x378] sm:$0xff]
      %v1124 = vld [vmem:[%s3 + $0x380] sm:$0xff]
      %v1125 = vld [vmem:[%s3 + $0x388] sm:$0xff]
      %v1126 = vld [vmem:[%s3 + $0x390] sm:$0xff]
      %v1127 = vld [vmem:[%s3 + $0x398] sm:$0xff]
      %v1128 = vld [vmem:[%s3 + $0x3a0] sm:$0xff]
      %v1129 = vld [vmem:[%s3 + $0x3a8] sm:$0xff]
      %v1130 = vld [vmem:[%s3 + $0x3b0] sm:$0xff]
      %v1131 = vld [vmem:[%s3 + $0x3b8] sm:$0xff]
      %v1132 = vld [vmem:[%s3 + $0x3c0] sm:$0xff]
      %v1133 = vld [vmem:[%s3 + $0x3c8] sm:$0xff]
      %v1134 = vld [vmem:[%s3 + $0x3d0] sm:$0xff]
      %v1135 = vld [vmem:[%s3 + $0x3d8] sm:$0xff]
      %v1136 = vld [vmem:[%s3 + $0x3e0] sm:$0xff]
      %v1137 = vld [vmem:[%s3 + $0x3e8] sm:$0xff]
      %v1138 = vld [vmem:[%s3 + $0x3f0] sm:$0xff]
      %v1139 = vld [vmem:[%s3 + $0x3f8] sm:$0xff]
      %v1140 = vld [vmem:[%s3 + $0x400] sm:$0xff]
      %v1141 = vld [vmem:[%s3 + $0x408] sm:$0xff]
      %v1142 = vld [vmem:[%s3 + $0x410] sm:$0xff]
      %v1143 = vld [vmem:[%s3 + $0x418] sm:$0xff]
      %v1144 = vld [vmem:[%s3 + $0x420] sm:$0xff]
      %v1145 = vld [vmem:[%s3 + $0x428] sm:$0xff]
      %v1146 = vld [vmem:[%s3 + $0x430] sm:$0xff]
      %v1147 = vld [vmem:[%s3 + $0x438] sm:$0xff]
      %v1148 = vld [vmem:[%s3 + $0x440] sm:$0xff]
      %v1149 = vld [vmem:[%s3 + $0x448] sm:$0xff]
      %v1150 = vld [vmem:[%s3 + $0x450] sm:$0xff]
      %v1151 = vld [vmem:[%s3 + $0x458] sm:$0xff]
      %v1152 = vld [vmem:[%s3 + $0x460] sm:$0xff]
      %v1153 = vld [vmem:[%s3 + $0x468] sm:$0xff]
      %v1154 = vld [vmem:[%s3 + $0x470] sm:$0xff]
      %v1155 = vld [vmem:[%s3 + $0x478] sm:$0xff]
      %v1156 = vld [vmem:[%s3 + $0x480] sm:$0xff]
      %v1157 = vld [vmem:[%s3 + $0x488] sm:$0xff]
      %v1158 = vld [vmem:[%s3 + $0x490] sm:$0xff]
      %v1159 = vld [vmem:[%s3 + $0x498] sm:$0xff]
      %v1160 = vld [vmem:[%s3 + $0x4a0] sm:$0xff]
      %v1161 = vld [vmem:[%s3 + $0x4a8] sm:$0xff]
      %v1162 = vld [vmem:[%s3 + $0x4b0] sm:$0xff]
      %v1163 = vld [vmem:[%s3 + $0x4b8] sm:$0xff]
      %v1164 = vld [vmem:[%s3 + $0x4c0] sm:$0xff]
      %v1165 = vld [vmem:[%s3 + $0x4c8] sm:$0xff]
      %v1166 = vld [vmem:[%s3 + $0x4d0] sm:$0xff]
      %v1167 = vld [vmem:[%s3 + $0x4d8] sm:$0xff]
      %v1168 = vld [vmem:[%s3 + $0x4e0] sm:$0xff]
      %v1169 = vld [vmem:[%s3 + $0x4e8] sm:$0xff]
      %v1170 = vld [vmem:[%s3 + $0x4f0] sm:$0xff]
      %v1171 = vld [vmem:[%s3 + $0x4f8] sm:$0xff]
      %v1172 = vld [vmem:[%s3 + $0x500] sm:$0xff]
      %v1173 = vld [vmem:[%s3 + $0x508] sm:$0xff]
      %v1174 = vld [vmem:[%s3 + $0x510] sm:$0xff]
      %v1175 = vld [vmem:[%s3 + $0x518] sm:$0xff]
      %v1176 = vld [vmem:[%s3 + $0x520] sm:$0xff]
      %v1177 = vld [vmem:[%s3 + $0x528] sm:$0xff]
      %v1178 = vld [vmem:[%s3 + $0x530] sm:$0xff]
      %v1179 = vld [vmem:[%s3 + $0x538] sm:$0xff]
      %v1180 = vld [vmem:[%s3 + $0x540] sm:$0xf]
      %v1181 = vld [vmem:[%s3 + $0x548] sm:$0xf]
      %v1182 = vld [vmem:[%s3 + $0x550] sm:$0xf]
      %v1183 = vld [vmem:[%s3 + $0x558] sm:$0xf]
      %v1184 = vld [vmem:[%s3 + $0x560] sm:$0xf]
      %v1185 = vld [vmem:[%s3 + $0x568] sm:$0xf]
      %v1186 = vld [vmem:[%s3 + $0x570] sm:$0xf]
      %vm1187 = vcmask 130048
      %v1189 = vsel %vm1187, %v1018, 0
      %v1192 = vsel %vm1187, %v1025, 0
      %v1195 = vsel %vm1187, %v1032, 0
      %v1198 = vsel %vm1187, %v1039, 0
      %v1201 = vsel %vm1187, %v1046, 0
      %v1204 = vsel %vm1187, %v1053, 0
      %v1207 = vsel %vm1187, %v1060, 0
      %v1210 = vsel %vm1187, %v1067, 0
      %v1213 = vsel %vm1187, %v1074, 0
      %v1216 = vsel %vm1187, %v1081, 0
      %v1219 = vsel %vm1187, %v1088, 0
      %v1222 = vsel %vm1187, %v1095, 0
      %v1225 = vsel %vm1187, %v1102, 0
      %v1228 = vsel %vm1187, %v1109, 0
      %v1231 = vsel %vm1187, %v1116, 0
      %v1234 = vsel %vm1187, %v1123, 0
      %v1237 = vsel %vm1187, %v1130, 0
      %v1240 = vsel %vm1187, %v1137, 0
      %v1243 = vsel %vm1187, %v1144, 0
      %v1246 = vsel %vm1187, %v1151, 0
      %v1249 = vsel %vm1187, %v1158, 0
      %v1252 = vsel %vm1187, %v1165, 0
      %v1255 = vsel %vm1187, %v1172, 0
      %v1258 = vsel %vm1187, %v1179, 0
      %v1261 = vsel %vm1187, %v1186, 0
      %1263 = vmatpush.msra.mxu0 %v929
      %1264 = vmatpush.msra.mxu0 %v928
      %1265 = vmatpush.msra.mxu0 %v927
      %1266 = vmatpush.msra.mxu0 %v926
      %1267 = vmatpush.msra.mxu0 %v925
      %1268 = vmatpush.msra.mxu0 %v924
      %1269 = vmatpush.msra.mxu0 %v923
      %1270 = vmatpush.msra.mxu0 %v922
      %1271 = vmatpush.msra.mxu0 %v921
      %1272 = vmatpush.msra.mxu0 %v920
      %1273 = vmatpush.msra.mxu0 %v919
      %1274 = vmatpush.msra.mxu0 %v918
      %1275 = vmatpush.msra.mxu0 %v917
      %1276 = vmatpush.msra.mxu0 %v916
      %1277 = vmatpush.msra.mxu0 %v915
      %1278 = vmatpush.msra.mxu0 %v914
      %1279 = vmatmul.f32.gmra.mxu0 %v1012
      %v1280 = vpop.f32.mrf.mxu0
      %v1281 = vadd.f32 0.0, %v1280
      %1282 = vmatmul.f32.gmra.mxu0 %v1019
      %v1283 = vpop.f32.mrf.mxu0
      %v1284 = vadd.f32 0.0, %v1283
      %1285 = vmatmul.f32.gmra.mxu0 %v1026
      %v1286 = vpop.f32.mrf.mxu0
      %v1287 = vadd.f32 0.0, %v1286
      %1288 = vmatmul.f32.gmra.mxu0 %v1033
      %v1289 = vpop.f32.mrf.mxu0
      %v1290 = vadd.f32 0.0, %v1289
      %1291 = vmatmul.f32.gmra.mxu0 %v1040
      %v1292 = vpop.f32.mrf.mxu0
      %v1293 = vadd.f32 0.0, %v1292
      %1294 = vmatmul.f32.gmra.mxu0 %v1047
      %v1295 = vpop.f32.mrf.mxu0
      %v1296 = vadd.f32 0.0, %v1295
      %1297 = vmatmul.f32.gmra.mxu0 %v1054
      %v1298 = vpop.f32.mrf.mxu0
      %v1299 = vadd.f32 0.0, %v1298
      %1300 = vmatmul.f32.gmra.mxu0 %v1061
      %v1301 = vpop.f32.mrf.mxu0
      %v1302 = vadd.f32 0.0, %v1301
      %1303 = vmatmul.f32.gmra.mxu0 %v1068
      %v1304 = vpop.f32.mrf.mxu0
      %v1305 = vadd.f32 0.0, %v1304
      %1306 = vmatmul.f32.gmra.mxu0 %v1075
      %v1307 = vpop.f32.mrf.mxu0
      %v1308 = vadd.f32 0.0, %v1307
      %1309 = vmatmul.f32.gmra.mxu0 %v1082
      %v1310 = vpop.f32.mrf.mxu0
      %v1311 = vadd.f32 0.0, %v1310
      %1312 = vmatmul.f32.gmra.mxu0 %v1089
      %v1313 = vpop.f32.mrf.mxu0
      %v1314 = vadd.f32 0.0, %v1313
      %1315 = vmatmul.f32.gmra.mxu0 %v1096
      %v1316 = vpop.f32.mrf.mxu0
      %v1317 = vadd.f32 0.0, %v1316
      %1318 = vmatmul.f32.gmra.mxu0 %v1103
      %v1319 = vpop.f32.mrf.mxu0
      %v1320 = vadd.f32 0.0, %v1319
      %1321 = vmatmul.f32.gmra.mxu0 %v1110
      %v1322 = vpop.f32.mrf.mxu0
      %v1323 = vadd.f32 0.0, %v1322
      %1324 = vmatmul.f32.gmra.mxu0 %v1117
      %v1325 = vpop.f32.mrf.mxu0
      %v1326 = vadd.f32 0.0, %v1325
      %1327 = vmatmul.f32.gmra.mxu0 %v1124
      %v1328 = vpop.f32.mrf.mxu0
      %v1329 = vadd.f32 0.0, %v1328
      %1330 = vmatmul.f32.gmra.mxu0 %v1131
      %v1331 = vpop.f32.mrf.mxu0
      %v1332 = vadd.f32 0.0, %v1331
      %1333 = vmatmul.f32.gmra.mxu0 %v1138
      %v1334 = vpop.f32.mrf.mxu0
      %v1335 = vadd.f32 0.0, %v1334
      %1336 = vmatmul.f32.gmra.mxu0 %v1145
      %v1337 = vpop.f32.mrf.mxu0
      %v1338 = vadd.f32 0.0, %v1337
      %1339 = vmatmul.f32.gmra.mxu0 %v1152
      %v1340 = vpop.f32.mrf.mxu0
      %v1341 = vadd.f32 0.0, %v1340
      %1342 = vmatmul.f32.gmra.mxu0 %v1159
      %v1343 = vpop.f32.mrf.mxu0
      %v1344 = vadd.f32 0.0, %v1343
      %1345 = vmatmul.f32.gmra.mxu0 %v1166
      %v1346 = vpop.f32.mrf.mxu0
      %v1347 = vadd.f32 0.0, %v1346
      %1348 = vmatmul.f32.gmra.mxu0 %v1173
      %v1349 = vpop.f32.mrf.mxu0
      %v1350 = vadd.f32 0.0, %v1349
      %1351 = vmatmul.f32.gmra.mxu0 %v1180
      %v1352 = vpop.f32.mrf.mxu0
      %v1353 = vadd.f32 0.0, %v1352
      %1354 = vdwg.mxu0
      %1355 = vmatpush.msra.mxu0 %v945
      %1356 = vmatpush.msra.mxu0 %v944
      %1357 = vmatpush.msra.mxu0 %v943
      %1358 = vmatpush.msra.mxu0 %v942
      %1359 = vmatpush.msra.mxu0 %v941
      %1360 = vmatpush.msra.mxu0 %v940
      %1361 = vmatpush.msra.mxu0 %v939
      %1362 = vmatpush.msra.mxu0 %v938
      %1363 = vmatpush.msra.mxu0 %v937
      %1364 = vmatpush.msra.mxu0 %v936
      %1365 = vmatpush.msra.mxu0 %v935
      %1366 = vmatpush.msra.mxu0 %v934
      %1367 = vmatpush.msra.mxu0 %v933
      %1368 = vmatpush.msra.mxu0 %v932
      %1369 = vmatpush.msra.mxu0 %v931
      %1370 = vmatpush.msra.mxu0 %v930
      %1371 = vmatmul.f32.gmra.mxu0 %v1013
      %v1372 = vpop.f32.mrf.mxu0
      %v1373 = vadd.f32 %v1281, %v1372
      %1374 = vmatmul.f32.gmra.mxu0 %v1020
      %v1375 = vpop.f32.mrf.mxu0
      %v1376 = vadd.f32 %v1284, %v1375
      %1377 = vmatmul.f32.gmra.mxu0 %v1027
      %v1378 = vpop.f32.mrf.mxu0
      %v1379 = vadd.f32 %v1287, %v1378
      %1380 = vmatmul.f32.gmra.mxu0 %v1034
      %v1381 = vpop.f32.mrf.mxu0
      %v1382 = vadd.f32 %v1290, %v1381
      %1383 = vmatmul.f32.gmra.mxu0 %v1041
      %v1384 = vpop.f32.mrf.mxu0
      %v1385 = vadd.f32 %v1293, %v1384
      %1386 = vmatmul.f32.gmra.mxu0 %v1048
      %v1387 = vpop.f32.mrf.mxu0
      %v1388 = vadd.f32 %v1296, %v1387
      %1389 = vmatmul.f32.gmra.mxu0 %v1055
      %v1390 = vpop.f32.mrf.mxu0
      %v1391 = vadd.f32 %v1299, %v1390
      %1392 = vmatmul.f32.gmra.mxu0 %v1062
      %v1393 = vpop.f32.mrf.mxu0
      %v1394 = vadd.f32 %v1302, %v1393
      %1395 = vmatmul.f32.gmra.mxu0 %v1069
      %v1396 = vpop.f32.mrf.mxu0
      %v1397 = vadd.f32 %v1305, %v1396
      %1398 = vmatmul.f32.gmra.mxu0 %v1076
      %v1399 = vpop.f32.mrf.mxu0
      %v1400 = vadd.f32 %v1308, %v1399
      %1401 = vmatmul.f32.gmra.mxu0 %v1083
      %v1402 = vpop.f32.mrf.mxu0
      %v1403 = vadd.f32 %v1311, %v1402
      %1404 = vmatmul.f32.gmra.mxu0 %v1090
      %v1405 = vpop.f32.mrf.mxu0
      %v1406 = vadd.f32 %v1314, %v1405
      %1407 = vmatmul.f32.gmra.mxu0 %v1097
      %v1408 = vpop.f32.mrf.mxu0
      %v1409 = vadd.f32 %v1317, %v1408
      %1410 = vmatmul.f32.gmra.mxu0 %v1104
      %v1411 = vpop.f32.mrf.mxu0
      %v1412 = vadd.f32 %v1320, %v1411
      %1413 = vmatmul.f32.gmra.mxu0 %v1111
      %v1414 = vpop.f32.mrf.mxu0
      %v1415 = vadd.f32 %v1323, %v1414
      %1416 = vmatmul.f32.gmra.mxu0 %v1118
      %v1417 = vpop.f32.mrf.mxu0
      %v1418 = vadd.f32 %v1326, %v1417
      %1419 = vmatmul.f32.gmra.mxu0 %v1125
      %v1420 = vpop.f32.mrf.mxu0
      %v1421 = vadd.f32 %v1329, %v1420
      %1422 = vmatmul.f32.gmra.mxu0 %v1132
      %v1423 = vpop.f32.mrf.mxu0
      %v1424 = vadd.f32 %v1332, %v1423
      %1425 = vmatmul.f32.gmra.mxu0 %v1139
      %v1426 = vpop.f32.mrf.mxu0
      %v1427 = vadd.f32 %v1335, %v1426
      %1428 = vmatmul.f32.gmra.mxu0 %v1146
      %v1429 = vpop.f32.mrf.mxu0
      %v1430 = vadd.f32 %v1338, %v1429
      %1431 = vmatmul.f32.gmra.mxu0 %v1153
      %v1432 = vpop.f32.mrf.mxu0
      %v1433 = vadd.f32 %v1341, %v1432
      %1434 = vmatmul.f32.gmra.mxu0 %v1160
      %v1435 = vpop.f32.mrf.mxu0
      %v1436 = vadd.f32 %v1344, %v1435
      %1437 = vmatmul.f32.gmra.mxu0 %v1167
      %v1438 = vpop.f32.mrf.mxu0
      %v1439 = vadd.f32 %v1347, %v1438
      %1440 = vmatmul.f32.gmra.mxu0 %v1174
      %v1441 = vpop.f32.mrf.mxu0
      %v1442 = vadd.f32 %v1350, %v1441
      %1443 = vmatmul.f32.gmra.mxu0 %v1181
      %v1444 = vpop.f32.mrf.mxu0
      %v1445 = vadd.f32 %v1353, %v1444
      %1446 = vdwg.mxu0
      %1447 = vmatpush.msra.mxu0 %v961
      %1448 = vmatpush.msra.mxu0 %v960
      %1449 = vmatpush.msra.mxu0 %v959
      %1450 = vmatpush.msra.mxu0 %v958
      %1451 = vmatpush.msra.mxu0 %v957
      %1452 = vmatpush.msra.mxu0 %v956
      %1453 = vmatpush.msra.mxu0 %v955
      %1454 = vmatpush.msra.mxu0 %v954
      %1455 = vmatpush.msra.mxu0 %v953
      %1456 = vmatpush.msra.mxu0 %v952
      %1457 = vmatpush.msra.mxu0 %v951
      %1458 = vmatpush.msra.mxu0 %v950
      %1459 = vmatpush.msra.mxu0 %v949
      %1460 = vmatpush.msra.mxu0 %v948
      %1461 = vmatpush.msra.mxu0 %v947
      %1462 = vmatpush.msra.mxu0 %v946
      %1463 = vmatmul.f32.gmra.mxu0 %v1014
      %v1464 = vpop.f32.mrf.mxu0
      %v1465 = vadd.f32 %v1373, %v1464
      %1466 = vmatmul.f32.gmra.mxu0 %v1021
      %v1467 = vpop.f32.mrf.mxu0
      %v1468 = vadd.f32 %v1376, %v1467
      %1469 = vmatmul.f32.gmra.mxu0 %v1028
      %v1470 = vpop.f32.mrf.mxu0
      %v1471 = vadd.f32 %v1379, %v1470
      %1472 = vmatmul.f32.gmra.mxu0 %v1035
      %v1473 = vpop.f32.mrf.mxu0
      %v1474 = vadd.f32 %v1382, %v1473
      %1475 = vmatmul.f32.gmra.mxu0 %v1042
      %v1476 = vpop.f32.mrf.mxu0
      %v1477 = vadd.f32 %v1385, %v1476
      %1478 = vmatmul.f32.gmra.mxu0 %v1049
      %v1479 = vpop.f32.mrf.mxu0
      %v1480 = vadd.f32 %v1388, %v1479
      %1481 = vmatmul.f32.gmra.mxu0 %v1056
      %v1482 = vpop.f32.mrf.mxu0
      %v1483 = vadd.f32 %v1391, %v1482
      %1484 = vmatmul.f32.gmra.mxu0 %v1063
      %v1485 = vpop.f32.mrf.mxu0
      %v1486 = vadd.f32 %v1394, %v1485
      %1487 = vmatmul.f32.gmra.mxu0 %v1070
      %v1488 = vpop.f32.mrf.mxu0
      %v1489 = vadd.f32 %v1397, %v1488
      %1490 = vmatmul.f32.gmra.mxu0 %v1077
      %v1491 = vpop.f32.mrf.mxu0
      %v1492 = vadd.f32 %v1400, %v1491
      %1493 = vmatmul.f32.gmra.mxu0 %v1084
      %v1494 = vpop.f32.mrf.mxu0
      %v1495 = vadd.f32 %v1403, %v1494
      %1496 = vmatmul.f32.gmra.mxu0 %v1091
      %v1497 = vpop.f32.mrf.mxu0
      %v1498 = vadd.f32 %v1406, %v1497
      %1499 = vmatmul.f32.gmra.mxu0 %v1098
      %v1500 = vpop.f32.mrf.mxu0
      %v1501 = vadd.f32 %v1409, %v1500
      %1502 = vmatmul.f32.gmra.mxu0 %v1105
      %v1503 = vpop.f32.mrf.mxu0
      %v1504 = vadd.f32 %v1412, %v1503
      %1505 = vmatmul.f32.gmra.mxu0 %v1112
      %v1506 = vpop.f32.mrf.mxu0
      %v1507 = vadd.f32 %v1415, %v1506
      %1508 = vmatmul.f32.gmra.mxu0 %v1119
      %v1509 = vpop.f32.mrf.mxu0
      %v1510 = vadd.f32 %v1418, %v1509
      %1511 = vmatmul.f32.gmra.mxu0 %v1126
      %v1512 = vpop.f32.mrf.mxu0
      %v1513 = vadd.f32 %v1421, %v1512
      %1514 = vmatmul.f32.gmra.mxu0 %v1133
      %v1515 = vpop.f32.mrf.mxu0
      %v1516 = vadd.f32 %v1424, %v1515
      %1517 = vmatmul.f32.gmra.mxu0 %v1140
      %v1518 = vpop.f32.mrf.mxu0
      %v1519 = vadd.f32 %v1427, %v1518
      %1520 = vmatmul.f32.gmra.mxu0 %v1147
      %v1521 = vpop.f32.mrf.mxu0
      %v1522 = vadd.f32 %v1430, %v1521
      %1523 = vmatmul.f32.gmra.mxu0 %v1154
      %v1524 = vpop.f32.mrf.mxu0
      %v1525 = vadd.f32 %v1433, %v1524
      %1526 = vmatmul.f32.gmra.mxu0 %v1161
      %v1527 = vpop.f32.mrf.mxu0
      %v1528 = vadd.f32 %v1436, %v1527
      %1529 = vmatmul.f32.gmra.mxu0 %v1168
      %v1530 = vpop.f32.mrf.mxu0
      %v1531 = vadd.f32 %v1439, %v1530
      %1532 = vmatmul.f32.gmra.mxu0 %v1175
      %v1533 = vpop.f32.mrf.mxu0
      %v1534 = vadd.f32 %v1442, %v1533
      %1535 = vmatmul.f32.gmra.mxu0 %v1182
      %v1536 = vpop.f32.mrf.mxu0
      %v1537 = vadd.f32 %v1445, %v1536
      %1538 = vdwg.mxu0
      %1539 = vmatpush.msra.mxu0 %v977
      %1540 = vmatpush.msra.mxu0 %v976
      %1541 = vmatpush.msra.mxu0 %v975
      %1542 = vmatpush.msra.mxu0 %v974
      %1543 = vmatpush.msra.mxu0 %v973
      %1544 = vmatpush.msra.mxu0 %v972
      %1545 = vmatpush.msra.mxu0 %v971
      %1546 = vmatpush.msra.mxu0 %v970
      %1547 = vmatpush.msra.mxu0 %v969
      %1548 = vmatpush.msra.mxu0 %v968
      %1549 = vmatpush.msra.mxu0 %v967
      %1550 = vmatpush.msra.mxu0 %v966
      %1551 = vmatpush.msra.mxu0 %v965
      %1552 = vmatpush.msra.mxu0 %v964
      %1553 = vmatpush.msra.mxu0 %v963
      %1554 = vmatpush.msra.mxu0 %v962
      %1555 = vmatmul.f32.gmra.mxu0 %v1015
      %v1556 = vpop.f32.mrf.mxu0
      %v1557 = vadd.f32 %v1465, %v1556
      %1558 = vmatmul.f32.gmra.mxu0 %v1022
      %v1559 = vpop.f32.mrf.mxu0
      %v1560 = vadd.f32 %v1468, %v1559
      %1561 = vmatmul.f32.gmra.mxu0 %v1029
      %v1562 = vpop.f32.mrf.mxu0
      %v1563 = vadd.f32 %v1471, %v1562
      %1564 = vmatmul.f32.gmra.mxu0 %v1036
      %v1565 = vpop.f32.mrf.mxu0
      %v1566 = vadd.f32 %v1474, %v1565
      %1567 = vmatmul.f32.gmra.mxu0 %v1043
      %v1568 = vpop.f32.mrf.mxu0
      %v1569 = vadd.f32 %v1477, %v1568
      %1570 = vmatmul.f32.gmra.mxu0 %v1050
      %v1571 = vpop.f32.mrf.mxu0
      %v1572 = vadd.f32 %v1480, %v1571
      %1573 = vmatmul.f32.gmra.mxu0 %v1057
      %v1574 = vpop.f32.mrf.mxu0
      %v1575 = vadd.f32 %v1483, %v1574
      %1576 = vmatmul.f32.gmra.mxu0 %v1064
      %v1577 = vpop.f32.mrf.mxu0
      %v1578 = vadd.f32 %v1486, %v1577
      %1579 = vmatmul.f32.gmra.mxu0 %v1071
      %v1580 = vpop.f32.mrf.mxu0
      %v1581 = vadd.f32 %v1489, %v1580
      %1582 = vmatmul.f32.gmra.mxu0 %v1078
      %v1583 = vpop.f32.mrf.mxu0
      %v1584 = vadd.f32 %v1492, %v1583
      %1585 = vmatmul.f32.gmra.mxu0 %v1085
      %v1586 = vpop.f32.mrf.mxu0
      %v1587 = vadd.f32 %v1495, %v1586
      %1588 = vmatmul.f32.gmra.mxu0 %v1092
      %v1589 = vpop.f32.mrf.mxu0
      %v1590 = vadd.f32 %v1498, %v1589
      %1591 = vmatmul.f32.gmra.mxu0 %v1099
      %v1592 = vpop.f32.mrf.mxu0
      %v1593 = vadd.f32 %v1501, %v1592
      %1594 = vmatmul.f32.gmra.mxu0 %v1106
      %v1595 = vpop.f32.mrf.mxu0
      %v1596 = vadd.f32 %v1504, %v1595
      %1597 = vmatmul.f32.gmra.mxu0 %v1113
      %v1598 = vpop.f32.mrf.mxu0
      %v1599 = vadd.f32 %v1507, %v1598
      %1600 = vmatmul.f32.gmra.mxu0 %v1120
      %v1601 = vpop.f32.mrf.mxu0
      %v1602 = vadd.f32 %v1510, %v1601
      %1603 = vmatmul.f32.gmra.mxu0 %v1127
      %v1604 = vpop.f32.mrf.mxu0
      %v1605 = vadd.f32 %v1513, %v1604
      %1606 = vmatmul.f32.gmra.mxu0 %v1134
      %v1607 = vpop.f32.mrf.mxu0
      %v1608 = vadd.f32 %v1516, %v1607
      %1609 = vmatmul.f32.gmra.mxu0 %v1141
      %v1610 = vpop.f32.mrf.mxu0
      %v1611 = vadd.f32 %v1519, %v1610
      %1612 = vmatmul.f32.gmra.mxu0 %v1148
      %v1613 = vpop.f32.mrf.mxu0
      %v1614 = vadd.f32 %v1522, %v1613
      %1615 = vmatmul.f32.gmra.mxu0 %v1155
      %v1616 = vpop.f32.mrf.mxu0
      %v1617 = vadd.f32 %v1525, %v1616
      %1618 = vmatmul.f32.gmra.mxu0 %v1162
      %v1619 = vpop.f32.mrf.mxu0
      %v1620 = vadd.f32 %v1528, %v1619
      %1621 = vmatmul.f32.gmra.mxu0 %v1169
      %v1622 = vpop.f32.mrf.mxu0
      %v1623 = vadd.f32 %v1531, %v1622
      %1624 = vmatmul.f32.gmra.mxu0 %v1176
      %v1625 = vpop.f32.mrf.mxu0
      %v1626 = vadd.f32 %v1534, %v1625
      %1627 = vmatmul.f32.gmra.mxu0 %v1183
      %v1628 = vpop.f32.mrf.mxu0
      %v1629 = vadd.f32 %v1537, %v1628
      %1630 = vdwg.mxu0
      %1631 = vmatpush.msra.mxu0 %v993
      %1632 = vmatpush.msra.mxu0 %v992
      %1633 = vmatpush.msra.mxu0 %v991
      %1634 = vmatpush.msra.mxu0 %v990
      %1635 = vmatpush.msra.mxu0 %v989
      %1636 = vmatpush.msra.mxu0 %v988
      %1637 = vmatpush.msra.mxu0 %v987
      %1638 = vmatpush.msra.mxu0 %v986
      %1639 = vmatpush.msra.mxu0 %v985
      %1640 = vmatpush.msra.mxu0 %v984
      %1641 = vmatpush.msra.mxu0 %v983
      %1642 = vmatpush.msra.mxu0 %v982
      %1643 = vmatpush.msra.mxu0 %v981
      %1644 = vmatpush.msra.mxu0 %v980
      %1645 = vmatpush.msra.mxu0 %v979
      %1646 = vmatpush.msra.mxu0 %v978
      %1647 = vmatmul.f32.gmra.mxu0 %v1016
      %v1648 = vpop.f32.mrf.mxu0
      %v1649 = vadd.f32 %v1557, %v1648
      %1650 = vmatmul.f32.gmra.mxu0 %v1023
      %v1651 = vpop.f32.mrf.mxu0
      %v1652 = vadd.f32 %v1560, %v1651
      %1653 = vmatmul.f32.gmra.mxu0 %v1030
      %v1654 = vpop.f32.mrf.mxu0
      %v1655 = vadd.f32 %v1563, %v1654
      %1656 = vmatmul.f32.gmra.mxu0 %v1037
      %v1657 = vpop.f32.mrf.mxu0
      %v1658 = vadd.f32 %v1566, %v1657
      %1659 = vmatmul.f32.gmra.mxu0 %v1044
      %v1660 = vpop.f32.mrf.mxu0
      %v1661 = vadd.f32 %v1569, %v1660
      %1662 = vmatmul.f32.gmra.mxu0 %v1051
      %v1663 = vpop.f32.mrf.mxu0
      %v1664 = vadd.f32 %v1572, %v1663
      %1665 = vmatmul.f32.gmra.mxu0 %v1058
      %v1666 = vpop.f32.mrf.mxu0
      %v1667 = vadd.f32 %v1575, %v1666
      %1668 = vmatmul.f32.gmra.mxu0 %v1065
      %v1669 = vpop.f32.mrf.mxu0
      %v1670 = vadd.f32 %v1578, %v1669
      %1671 = vmatmul.f32.gmra.mxu0 %v1072
      %v1672 = vpop.f32.mrf.mxu0
      %v1673 = vadd.f32 %v1581, %v1672
      %1674 = vmatmul.f32.gmra.mxu0 %v1079
      %v1675 = vpop.f32.mrf.mxu0
      %v1676 = vadd.f32 %v1584, %v1675
      %1677 = vmatmul.f32.gmra.mxu0 %v1086
      %v1678 = vpop.f32.mrf.mxu0
      %v1679 = vadd.f32 %v1587, %v1678
      %1680 = vmatmul.f32.gmra.mxu0 %v1093
      %v1681 = vpop.f32.mrf.mxu0
      %v1682 = vadd.f32 %v1590, %v1681
      %1683 = vmatmul.f32.gmra.mxu0 %v1100
      %v1684 = vpop.f32.mrf.mxu0
      %v1685 = vadd.f32 %v1593, %v1684
      %1686 = vmatmul.f32.gmra.mxu0 %v1107
      %v1687 = vpop.f32.mrf.mxu0
      %v1688 = vadd.f32 %v1596, %v1687
      %1689 = vmatmul.f32.gmra.mxu0 %v1114
      %v1690 = vpop.f32.mrf.mxu0
      %v1691 = vadd.f32 %v1599, %v1690
      %1692 = vmatmul.f32.gmra.mxu0 %v1121
      %v1693 = vpop.f32.mrf.mxu0
      %v1694 = vadd.f32 %v1602, %v1693
      %1695 = vmatmul.f32.gmra.mxu0 %v1128
      %v1696 = vpop.f32.mrf.mxu0
      %v1697 = vadd.f32 %v1605, %v1696
      %1698 = vmatmul.f32.gmra.mxu0 %v1135
      %v1699 = vpop.f32.mrf.mxu0
      %v1700 = vadd.f32 %v1608, %v1699
      %1701 = vmatmul.f32.gmra.mxu0 %v1142
      %v1702 = vpop.f32.mrf.mxu0
      %v1703 = vadd.f32 %v1611, %v1702
      %1704 = vmatmul.f32.gmra.mxu0 %v1149
      %v1705 = vpop.f32.mrf.mxu0
      %v1706 = vadd.f32 %v1614, %v1705
      %1707 = vmatmul.f32.gmra.mxu0 %v1156
      %v1708 = vpop.f32.mrf.mxu0
      %v1709 = vadd.f32 %v1617, %v1708
      %1710 = vmatmul.f32.gmra.mxu0 %v1163
      %v1711 = vpop.f32.mrf.mxu0
      %v1712 = vadd.f32 %v1620, %v1711
      %1713 = vmatmul.f32.gmra.mxu0 %v1170
      %v1714 = vpop.f32.mrf.mxu0
      %v1715 = vadd.f32 %v1623, %v1714
      %1716 = vmatmul.f32.gmra.mxu0 %v1177
      %v1717 = vpop.f32.mrf.mxu0
      %v1718 = vadd.f32 %v1626, %v1717
      %1719 = vmatmul.f32.gmra.mxu0 %v1184
      %v1720 = vpop.f32.mrf.mxu0
      %v1721 = vadd.f32 %v1629, %v1720
      %1722 = vdwg.mxu0
      %1723 = vmatpush.msra.mxu0 %v1009
      %1724 = vmatpush.msra.mxu0 %v1008
      %1725 = vmatpush.msra.mxu0 %v1007
      %1726 = vmatpush.msra.mxu0 %v1006
      %1727 = vmatpush.msra.mxu0 %v1005
      %1728 = vmatpush.msra.mxu0 %v1004
      %1729 = vmatpush.msra.mxu0 %v1003
      %1730 = vmatpush.msra.mxu0 %v1002
      %1731 = vmatpush.msra.mxu0 %v1001
      %1732 = vmatpush.msra.mxu0 %v1000
      %1733 = vmatpush.msra.mxu0 %v999
      %1734 = vmatpush.msra.mxu0 %v998
      %1735 = vmatpush.msra.mxu0 %v997
      %1736 = vmatpush.msra.mxu0 %v996
      %1737 = vmatpush.msra.mxu0 %v995
      %1738 = vmatpush.msra.mxu0 %v994
      %1739 = vmatmul.f32.gmra.mxu0 %v1017
      %v1740 = vpop.f32.mrf.mxu0
      %v1741 = vadd.f32 %v1649, %v1740
      %1742 = vmatmul.f32.gmra.mxu0 %v1024
      %v1743 = vpop.f32.mrf.mxu0
      %v1744 = vadd.f32 %v1652, %v1743
      %1745 = vmatmul.f32.gmra.mxu0 %v1031
      %v1746 = vpop.f32.mrf.mxu0
      %v1747 = vadd.f32 %v1655, %v1746
      %1748 = vmatmul.f32.gmra.mxu0 %v1038
      %v1749 = vpop.f32.mrf.mxu0
      %v1750 = vadd.f32 %v1658, %v1749
      %1751 = vmatmul.f32.gmra.mxu0 %v1045
      %v1752 = vpop.f32.mrf.mxu0
      %v1753 = vadd.f32 %v1661, %v1752
      %1754 = vmatmul.f32.gmra.mxu0 %v1052
      %v1755 = vpop.f32.mrf.mxu0
      %v1756 = vadd.f32 %v1664, %v1755
      %1757 = vmatmul.f32.gmra.mxu0 %v1059
      %v1758 = vpop.f32.mrf.mxu0
      %v1759 = vadd.f32 %v1667, %v1758
      %1760 = vmatmul.f32.gmra.mxu0 %v1066
      %v1761 = vpop.f32.mrf.mxu0
      %v1762 = vadd.f32 %v1670, %v1761
      %1763 = vmatmul.f32.gmra.mxu0 %v1073
      %v1764 = vpop.f32.mrf.mxu0
      %v1765 = vadd.f32 %v1673, %v1764
      %1766 = vmatmul.f32.gmra.mxu0 %v1080
      %v1767 = vpop.f32.mrf.mxu0
      %v1768 = vadd.f32 %v1676, %v1767
      %1769 = vmatmul.f32.gmra.mxu0 %v1087
      %v1770 = vpop.f32.mrf.mxu0
      %v1771 = vadd.f32 %v1679, %v1770
      %1772 = vmatmul.f32.gmra.mxu0 %v1094
      %v1773 = vpop.f32.mrf.mxu0
      %v1774 = vadd.f32 %v1682, %v1773
      %1775 = vmatmul.f32.gmra.mxu0 %v1101
      %v1776 = vpop.f32.mrf.mxu0
      %v1777 = vadd.f32 %v1685, %v1776
      %1778 = vmatmul.f32.gmra.mxu0 %v1108
      %v1779 = vpop.f32.mrf.mxu0
      %v1780 = vadd.f32 %v1688, %v1779
      %1781 = vmatmul.f32.gmra.mxu0 %v1115
      %v1782 = vpop.f32.mrf.mxu0
      %v1783 = vadd.f32 %v1691, %v1782
      %1784 = vmatmul.f32.gmra.mxu0 %v1122
      %v1785 = vpop.f32.mrf.mxu0
      %v1786 = vadd.f32 %v1694, %v1785
      %1787 = vmatmul.f32.gmra.mxu0 %v1129
      %v1788 = vpop.f32.mrf.mxu0
      %v1789 = vadd.f32 %v1697, %v1788
      %1790 = vmatmul.f32.gmra.mxu0 %v1136
      %v1791 = vpop.f32.mrf.mxu0
      %v1792 = vadd.f32 %v1700, %v1791
      %1793 = vmatmul.f32.gmra.mxu0 %v1143
      %v1794 = vpop.f32.mrf.mxu0
      %v1795 = vadd.f32 %v1703, %v1794
      %1796 = vmatmul.f32.gmra.mxu0 %v1150
      %v1797 = vpop.f32.mrf.mxu0
      %v1798 = vadd.f32 %v1706, %v1797
      %1799 = vmatmul.f32.gmra.mxu0 %v1157
      %v1800 = vpop.f32.mrf.mxu0
      %v1801 = vadd.f32 %v1709, %v1800
      %1802 = vmatmul.f32.gmra.mxu0 %v1164
      %v1803 = vpop.f32.mrf.mxu0
      %v1804 = vadd.f32 %v1712, %v1803
      %1805 = vmatmul.f32.gmra.mxu0 %v1171
      %v1806 = vpop.f32.mrf.mxu0
      %v1807 = vadd.f32 %v1715, %v1806
      %1808 = vmatmul.f32.gmra.mxu0 %v1178
      %v1809 = vpop.f32.mrf.mxu0
      %v1810 = vadd.f32 %v1718, %v1809
      %1811 = vmatmul.f32.gmra.mxu0 %v1185
      %v1812 = vpop.f32.mrf.mxu0
      %v1813 = vadd.f32 %v1721, %v1812
      %1814 = vdwg.mxu0
      %1815 = vmatpush.msra.mxu0 0.0
      %1816 = vmatpush.msra.mxu0 0.0
      %1817 = vmatpush.msra.mxu0 0.0
      %1818 = vmatpush.msra.mxu0 0.0
      %1819 = vmatpush.msra.mxu0 0.0
      %1820 = vmatpush.msra.mxu0 0.0
      %1821 = vmatpush.msra.mxu0 0.0
      %1822 = vmatpush.msra.mxu0 0.0
      %1823 = vmatpush.msra.mxu0 0.0
      %1824 = vmatpush.msra.mxu0 0.0
      %1825 = vmatpush.msra.mxu0 0.0
      %1826 = vmatpush.msra.mxu0 0.0
      %1827 = vmatpush.msra.mxu0 0.0
      %1828 = vmatpush.msra.mxu0 0.0
      %1829 = vmatpush.msra.mxu0 %v1011
      %1830 = vmatpush.msra.mxu0 %v1010
      %1831 = vmatmul.f32.gmra.mxu0 %v1189
      %v1832 = vpop.f32.mrf.mxu0
      %v1833 = vadd.f32 %v1741, %v1832
      %1834 = vmatmul.f32.gmra.mxu0 %v1192
      %v1835 = vpop.f32.mrf.mxu0
      %v1836 = vadd.f32 %v1744, %v1835
      %1837 = vmatmul.f32.gmra.mxu0 %v1195
      %v1838 = vpop.f32.mrf.mxu0
      %v1839 = vadd.f32 %v1747, %v1838
      %1840 = vmatmul.f32.gmra.mxu0 %v1198
      %v1841 = vpop.f32.mrf.mxu0
      %v1842 = vadd.f32 %v1750, %v1841
      %1843 = vmatmul.f32.gmra.mxu0 %v1201
      %v1844 = vpop.f32.mrf.mxu0
      %v1845 = vadd.f32 %v1753, %v1844
      %1846 = vmatmul.f32.gmra.mxu0 %v1204
      %v1847 = vpop.f32.mrf.mxu0
      %v1848 = vadd.f32 %v1756, %v1847
      %1849 = vmatmul.f32.gmra.mxu0 %v1207
      %v1850 = vpop.f32.mrf.mxu0
      %v1851 = vadd.f32 %v1759, %v1850
      %1852 = vmatmul.f32.gmra.mxu0 %v1210
      %v1853 = vpop.f32.mrf.mxu0
      %v1854 = vadd.f32 %v1762, %v1853
      %1855 = vmatmul.f32.gmra.mxu0 %v1213
      %v1856 = vpop.f32.mrf.mxu0
      %v1857 = vadd.f32 %v1765, %v1856
      %1858 = vmatmul.f32.gmra.mxu0 %v1216
      %v1859 = vpop.f32.mrf.mxu0
      %v1860 = vadd.f32 %v1768, %v1859
      %1861 = vmatmul.f32.gmra.mxu0 %v1219
      %v1862 = vpop.f32.mrf.mxu0
      %v1863 = vadd.f32 %v1771, %v1862
      %1864 = vmatmul.f32.gmra.mxu0 %v1222
      %v1865 = vpop.f32.mrf.mxu0
      %v1866 = vadd.f32 %v1774, %v1865
      %1867 = vmatmul.f32.gmra.mxu0 %v1225
      %v1868 = vpop.f32.mrf.mxu0
      %v1869 = vadd.f32 %v1777, %v1868
      %1870 = vmatmul.f32.gmra.mxu0 %v1228
      %v1871 = vpop.f32.mrf.mxu0
      %v1872 = vadd.f32 %v1780, %v1871
      %1873 = vmatmul.f32.gmra.mxu0 %v1231
      %v1874 = vpop.f32.mrf.mxu0
      %v1875 = vadd.f32 %v1783, %v1874
      %1876 = vmatmul.f32.gmra.mxu0 %v1234
      %v1877 = vpop.f32.mrf.mxu0
      %v1878 = vadd.f32 %v1786, %v1877
      %1879 = vmatmul.f32.gmra.mxu0 %v1237
      %v1880 = vpop.f32.mrf.mxu0
      %v1881 = vadd.f32 %v1789, %v1880
      %1882 = vmatmul.f32.gmra.mxu0 %v1240
      %v1883 = vpop.f32.mrf.mxu0
      %v1884 = vadd.f32 %v1792, %v1883
      %1885 = vmatmul.f32.gmra.mxu0 %v1243
      %v1886 = vpop.f32.mrf.mxu0
      %v1887 = vadd.f32 %v1795, %v1886
      %1888 = vmatmul.f32.gmra.mxu0 %v1246
      %v1889 = vpop.f32.mrf.mxu0
      %v1890 = vadd.f32 %v1798, %v1889
      %1891 = vmatmul.f32.gmra.mxu0 %v1249
      %v1892 = vpop.f32.mrf.mxu0
      %v1893 = vadd.f32 %v1801, %v1892
      %1894 = vmatmul.f32.gmra.mxu0 %v1252
      %v1895 = vpop.f32.mrf.mxu0
      %v1896 = vadd.f32 %v1804, %v1895
      %1897 = vmatmul.f32.gmra.mxu0 %v1255
      %v1898 = vpop.f32.mrf.mxu0
      %v1899 = vadd.f32 %v1807, %v1898
      %1900 = vmatmul.f32.gmra.mxu0 %v1258
      %v1901 = vpop.f32.mrf.mxu0
      %v1902 = vadd.f32 %v1810, %v1901
      %1903 = vmatmul.f32.gmra.mxu0 %v1261
      %v1904 = vpop.f32.mrf.mxu0
      %v1905 = vadd.f32 %v1813, %v1904
      %1906 = vdwg.mxu0
      %1907 = vst [vmem:[%s197] sm:$0xff] %v1833
      %1908 = vst [vmem:[%s197 + $0x8] sm:$0xff] %v1836
      %1909 = vst [vmem:[%s197 + $0x10] sm:$0xff] %v1839
      %1910 = vst [vmem:[%s197 + $0x18] sm:$0xff] %v1842
      %1911 = vst [vmem:[%s197 + $0x20] sm:$0xff] %v1845
      %1912 = vst [vmem:[%s197 + $0x28] sm:$0xff] %v1848
      %1913 = vst [vmem:[%s197 + $0x30] sm:$0xff] %v1851
      %1914 = vst [vmem:[%s197 + $0x38] sm:$0xff] %v1854
      %1915 = vst [vmem:[%s197 + $0x40] sm:$0xff] %v1857
      %1916 = vst [vmem:[%s197 + $0x48] sm:$0xff] %v1860
      %1917 = vst [vmem:[%s197 + $0x50] sm:$0xff] %v1863
      %1918 = vst [vmem:[%s197 + $0x58] sm:$0xff] %v1866
      %1919 = vst [vmem:[%s197 + $0x60] sm:$0xff] %v1869
      %1920 = vst [vmem:[%s197 + $0x68] sm:$0xff] %v1872
      %1921 = vst [vmem:[%s197 + $0x70] sm:$0xff] %v1875
      %1922 = vst [vmem:[%s197 + $0x78] sm:$0xff] %v1878
      %1923 = vst [vmem:[%s197 + $0x80] sm:$0xff] %v1881
      %1924 = vst [vmem:[%s197 + $0x88] sm:$0xff] %v1884
      %1925 = vst [vmem:[%s197 + $0x90] sm:$0xff] %v1887
      %1926 = vst [vmem:[%s197 + $0x98] sm:$0xff] %v1890
      %1927 = vst [vmem:[%s197 + $0xa0] sm:$0xff] %v1893
      %1928 = vst [vmem:[%s197 + $0xa8] sm:$0xff] %v1896
      %1929 = vst [vmem:[%s197 + $0xb0] sm:$0xff] %v1899
      %1930 = vst [vmem:[%s197 + $0xb8] sm:$0xff] %v1902
      %1931 = vst [vmem:[%s197 + $0xc0] sm:$0xf] %v1905
      %p1932 = scmp.lt.s32.totalorder %s15, 1
      %s1933 = scalar_select %p1932, %s15, 1
      %s1934 = smul.addr %s1933, 25
      %s1935 = smul.addr %s1934, 8
      %s1936 = scalar_lea.vmem %s4, %s1935
      // Predicated region
      $region37: #{lenet5_forward.3} parent=35 // pred_check
        %p1937 = pneg %p122
      $region38: #{lenet5_forward.3} parent=35 // pred_check_branch
        %1939 = sbr.rel (%p1937) target = $region40
      $region39: #{lenet5_forward.3} parent=35 // pred_region
        _
      $region40: #{lenet5_forward.3} parent=35 // pred_fallthru
        _
    $region36: #{lenet5_forward.3} parent=5 // pred_fallthru
      _
    %p1940 = scmp.le.s32.totalorder 2, %s10
    // Predicated region
    $region41: #{lenet5_forward.3} parent=5 // pred_check
      %p1941 = pneg %p1940
    $region42: #{lenet5_forward.3} parent=5 // pred_check_branch
      %1943 = sbr.rel (%p1941) target = $region44
    $region43: #{lenet5_forward.3} parent=5 // pred_region
      %s1944 = ssub.s32 %s10, 2
      // Predicated region
      $region45: #{lenet5_forward.3} parent=43 // pred_check
        %p1945 = pneg %p128
      $region46: #{lenet5_forward.3} parent=43 // pred_check_branch
        %1947 = sbr.rel (%p1945) target = $region48
      $region47: #{lenet5_forward.3} parent=43 // pred_region
        %p1948 = scmp.lt.s32.totalorder %s16, 1
        %s1949 = scalar_select %p1948, %s16, 1
        %s1950 = smul.addr %s1949, 25
        %s1951 = smul.addr %s1950, 8
        %s1952 = scalar_lea.vmem %s4, %s1951
      $region48: #{lenet5_forward.3} parent=43 // pred_fallthru
        _
    $region44: #{lenet5_forward.3} parent=5 // pred_fallthru
      _
  $region6: #{lenet5_forward.3} parent=0 // loop_footer
    %s14 = sadd.s32 1, %s10
  $region7: #{lenet5_forward.3} parent=0 // loop_footer_branch
    %9 = sbr.rel target = $region3
  $region8: #{lenet5_forward.3} parent=0 // loop_exit
    _

// kernel: lenet5_forward.4
$region0: #{lenet5_forward.4}
  #allocation0 [shape = 'u32[]', space=smem, size = 0x4, offset = 0x4, fixed_abs, tag = 'smem constant byte address 0x4 - core index']
  #allocation1 [shape = 'u32[72,128]{1,0:T(1,128)}', space=vmem, size = 0x9000, scoped, tag = 'internal scratch']
  %s0 = inlined_call_operand.vmem [shape: f32[2,100,150], index: 0, kind: input, shape index: {}]
  %s1 = inlined_call_operand.vmem [shape: f32[150,128], index: 1, kind: input, shape index: {}]
  %s2 = inlined_call_operand.vmem [shape: f32[1,128], index: 2, kind: input, shape index: {}]
  %s3 = inlined_call_operand.vmem [shape: f32[25,100], index: 3, kind: input, shape index: {}]
  %s4 = inlined_call_operand.vmem [shape: f32[2,25,128], index: 4, kind: output, shape index: {}]
  %s5 = sld [smem:[#allocation0]]
  $region49: #{lenet5_forward.4} parent=0
    _
  %s7 = ssub.s32 1, %s5
  %s8 = scalar_select 0, %s7, %s5
  loop: start=0, step=1, limit=4
  $region2: #{lenet5_forward.4} parent=0 // loop_pre_header
    _
  $region3: #{lenet5_forward.4} parent=0 // loop_header
    %s10 = sphi 0, %s14
    %p11 = scmp.ge.s32.totalorder %s10, 4
    %s20 = sphi 0, %s22
    %s23 = sphi 0, %s20
    %s24 = sphi 0, %s23
    %s40 = sphi 0, %s24
    %s44 = sphi 0, %s44
    %s46 = sphi 0, %s44
    %s47 = sphi 0, %s46
    %s61 = sphi 0, %s47
    %s65 = sphi 0, %s65
    %s67 = sphi 0, %s65
    %s68 = sphi 0, %s67
    %s82 = sphi 0, %s68
    %s86 = sphi 0, %s86
    %s88 = sphi 0, %s86
    %s89 = sphi 0, %s88
    %s103 = sphi 0, %s89
    %s109 = sphi 0, %s111
    %s112 = sphi 0, %s109
    %s113 = sphi 0, %s112
    %s129 = sphi 0, %s113
  $region4: #{lenet5_forward.4} parent=0 // loop_header_branch
    %13 = sbr.rel (%p11) target = $region8
  $region5: #{lenet5_forward.4} parent=0 // loop_body
    %s15 = ssub.s32 %s10, 1
    %s16 = ssub.s32 %s10, 2
    %s17 = sadd.s32 %s10, 1
    %s18 = ssub.s32 %s10, %s17
    %p19 = scmp.eq.s32.totalorder %s18, 0
    %s21 = sadd.s32 %s20, 1
    %s22 = scalar_select %p19, %s20, %s21
    %p25 = pneg %p19
    %p26 = scmp.eq.s32.totalorder %s10, 1
    %p27 = por %p25, %p26
    %p28 = scmp.ne.s32.totalorder %s20, %s23
    %p29 = scmp.eq.s32.totalorder %s10, 0
    %p30 = por %p28, %p29
    %p31 = scmp.ne.s32.totalorder %s20, %s23
    %p32 = scmp.eq.s32.totalorder %s15, 1
    %p33 = por %p31, %p32
    %p34 = scmp.ne.s32.totalorder %s23, %s24
    %p35 = scmp.eq.s32.totalorder %s15, 0
    %p36 = por %p34, %p35
    %p37 = scmp.ne.s32.totalorder %s23, %s24
    %p38 = scmp.eq.s32.totalorder %s16, 1
    %p39 = por %p37, %p38
    %p41 = scmp.ne.s32.totalorder %s24, %s40
    %p42 = scmp.eq.s32.totalorder %s16, 0
    %p43 = por %p41, %p42
    %s45 = sadd.s32 %s44, 1
    %p48 = scmp.eq.s32.totalorder %s10, 1
    %p49 = scmp.ne.s32.totalorder %s44, %s46
    %p50 = scmp.eq.s32.totalorder %s10, 0
    %p51 = por %p49, %p50
    %p52 = scmp.ne.s32.totalorder %s44, %s46
    %p53 = scmp.eq.s32.totalorder %s15, 1
    %p54 = por %p52, %p53
    %p55 = scmp.ne.s32.totalorder %s46, %s47
    %p56 = scmp.eq.s32.totalorder %s15, 0
    %p57 = por %p55, %p56
    %p58 = scmp.ne.s32.totalorder %s46, %s47
    %p59 = scmp.eq.s32.totalorder %s16, 1
    %p60 = por %p58, %p59
    %p62 = scmp.ne.s32.totalorder %s47, %s61
    %p63 = scmp.eq.s32.totalorder %s16, 0
    %p64 = por %p62, %p63
    %s66 = sadd.s32 %s65, 1
    %p69 = scmp.eq.s32.totalorder %s10, 1
    %p70 = scmp.ne.s32.totalorder %s65, %s67
    %p71 = scmp.eq.s32.totalorder %s10, 0
    %p72 = por %p70, %p71
    %p73 = scmp.ne.s32.totalorder %s65, %s67
    %p74 = scmp.eq.s32.totalorder %s15, 1
    %p75 = por %p73, %p74
    %p76 = scmp.ne.s32.totalorder %s67, %s68
    %p77 = scmp.eq.s32.totalorder %s15, 0
    %p78 = por %p76, %p77
    %p79 = scmp.ne.s32.totalorder %s67, %s68
    %p80 = scmp.eq.s32.totalorder %s16, 1
    %p81 = por %p79, %p80
    %p83 = scmp.ne.s32.totalorder %s68, %s82
    %p84 = scmp.eq.s32.totalorder %s16, 0
    %p85 = por %p83, %p84
    %s87 = sadd.s32 %s86, 1
    %p90 = scmp.eq.s32.totalorder %s10, 1
    %p91 = scmp.ne.s32.totalorder %s86, %s88
    %p92 = scmp.eq.s32.totalorder %s10, 0
    %p93 = por %p91, %p92
    %p94 = scmp.ne.s32.totalorder %s86, %s88
    %p95 = scmp.eq.s32.totalorder %s15, 1
    %p96 = por %p94, %p95
    %p97 = scmp.ne.s32.totalorder %s88, %s89
    %p98 = scmp.eq.s32.totalorder %s15, 0
    %p99 = por %p97, %p98
    %p100 = scmp.ne.s32.totalorder %s88, %s89
    %p101 = scmp.eq.s32.totalorder %s16, 1
    %p102 = por %p100, %p101
    %p104 = scmp.ne.s32.totalorder %s89, %s103
    %p105 = scmp.eq.s32.totalorder %s16, 0
    %p106 = por %p104, %p105
    %s107 = ssub.s32 %s10, %s17
    %p108 = scmp.eq.s32.totalorder %s107, 0
    %s110 = sadd.s32 %s109, 1
    %s111 = scalar_select %p108, %s109, %s110
    %p114 = pneg %p108
    %p115 = scmp.eq.s32.totalorder %s10, 1
    %p116 = por %p114, %p115
    %p117 = scmp.ne.s32.totalorder %s109, %s112
    %p118 = scmp.eq.s32.totalorder %s10, 0
    %p119 = por %p117, %p118
    %p120 = scmp.ne.s32.totalorder %s109, %s112
    %p121 = scmp.eq.s32.totalorder %s15, 1
    %p122 = por %p120, %p121
    %p123 = scmp.ne.s32.totalorder %s112, %s113
    %p124 = scmp.eq.s32.totalorder %s15, 0
    %p125 = por %p123, %p124
    %p126 = scmp.ne.s32.totalorder %s112, %s113
    %p127 = scmp.eq.s32.totalorder %s16, 1
    %p128 = por %p126, %p127
    %p130 = scmp.ne.s32.totalorder %s113, %s129
    %p131 = scmp.eq.s32.totalorder %s16, 0
    %p132 = por %p130, %p131
    %p133 = scmp.le.s32.totalorder 1, %s10
    %p134 = scmp.lt.s32.totalorder %s10, 3
    %p135 = pnand %p133, %p134
    %p136 = pneg %p135
    // Predicated region
    $region9: #{lenet5_forward.4} parent=5 // pred_check
      _
    $region10: #{lenet5_forward.4} parent=5 // pred_check_branch
      %138 = sbr.rel (%p135) target = $region12
    $region11: #{lenet5_forward.4} parent=5 // pred_region
      %s139 = ssub.s32 %s10, 1
      // Predicated region
      $region13: #{lenet5_forward.4} parent=11 // pred_check
        %p140 = pneg %p57
      $region14: #{lenet5_forward.4} parent=11 // pred_check_branch
        %142 = sbr.rel (%p140) target = $region16
      $region15: #{lenet5_forward.4} parent=11 // pred_region
        _
      $region16: #{lenet5_forward.4} parent=11 // pred_fallthru
        _
      // Predicated region
      $region17: #{lenet5_forward.4} parent=11 // pred_check
        %p143 = pneg %p78
      $region18: #{lenet5_forward.4} parent=11 // pred_check_branch
        %145 = sbr.rel (%p143) target = $region20
      $region19: #{lenet5_forward.4} parent=11 // pred_region
        _
      $region20: #{lenet5_forward.4} parent=11 // pred_fallthru
        _
      // Predicated region
      $region21: #{lenet5_forward.4} parent=11 // pred_check
        %p146 = pneg %p99
      $region22: #{lenet5_forward.4} parent=11 // pred_check_branch
        %148 = sbr.rel (%p146) target = $region24
      $region23: #{lenet5_forward.4} parent=11 // pred_region
        _
      $region24: #{lenet5_forward.4} parent=11 // pred_fallthru
        _
    $region12: #{lenet5_forward.4} parent=5 // pred_fallthru
      _
    %p149 = scmp.lt.s32.totalorder %s10, 2
    // Predicated region
    $region25: #{lenet5_forward.4} parent=5 // pred_check
      %p150 = pneg %p149
    $region26: #{lenet5_forward.4} parent=5 // pred_check_branch
      %152 = sbr.rel (%p150) target = $region28
    $region27: #{lenet5_forward.4} parent=5 // pred_region
      // Predicated region
      $region29: #{lenet5_forward.4} parent=27 // pred_check
        %p153 = pneg %p30
      $region30: #{lenet5_forward.4} parent=27 // pred_check_branch
        %155 = sbr.rel (%p153) target = $region32
      $region31: #{lenet5_forward.4} parent=27 // pred_region
        %p156 = scmp.lt.s32.totalorder %s10, 1
        %s157 = scalar_select %p156, %s10, 1
        %s158 = smul.addr %s157, 26
        %s159 = smul.addr %s158, 8
        %s160 = scalar_lea.vmem %s0, %s159
      $region32: #{lenet5_forward.4} parent=27 // pred_fallthru
        _
    $region28: #{lenet5_forward.4} parent=5 // pred_fallthru
      _
    %p161 = scmp.le.s32.totalorder 1, %s10
    %p162 = scmp.lt.s32.totalorder %s10, 3
    %p163 = pnand %p161, %p162
    %p164 = pneg %p163
    // Predicated region
    $region33: #{lenet5_forward.4} parent=5 // pred_check
      _
    $region34: #{lenet5_forward.4} parent=5 // pred_check_branch
      %166 = sbr.rel (%p163) target = $region36
    $region35: #{lenet5_forward.4} parent=5 // pred_region
      %s167 = ssub.s32 %s10, 1
      %p168 = scmp.lt.s32.totalorder %s15, 1
      %s169 = scalar_select %p168, %s15, 1
      %s170 = smul.addr %s169, 26
      %s171 = smul.addr %s170, 8
      %s172 = scalar_lea.vmem %s0, %s171
      %p173 = pneg %p36
      %p174 = pneg %p33
      %p175 = pneg %p57
      %p176 = pneg %p54
      %p177 = pneg %p78
      %p178 = pneg %p75
      %p179 = pneg %p99
      %p180 = pneg %p96
      %p181 = pneg %p125
      %p182 = pneg %p122
      %p183 = scmp.lt.s32.totalorder %s15, 1
      %s184 = scalar_select %p183, %s15, 1
      %s185 = smul.addr %s184, 4
      %s186 = smul.addr %s185, 8
      %s187 = scalar_lea.vmem %s4, %s186
      %p188 = scmp.lt.s32.totalorder %s15, 1
      %s189 = scalar_select %p188, %s15, 1
      %s190 = smul.addr %s189, 26
      %s191 = smul.addr %s190, 8
      %s192 = scalar_lea.vmem %s0, %s191
      %p193 = scmp.lt.s32.totalorder %s15, 1
      %s194 = scalar_select %p193, %s15, 1
      %s195 = smul.addr %s194, 4
      %s196 = smul.addr %s195, 8
      %s197 = scalar_lea.vmem %s4, %s196
      %v198 = vld [vmem:[%s192] sm:$0xff]
      %v199 = vld [vmem:[%s192 + $0x8] sm:$0xff]
      %v200 = vld [vmem:[%s192 + $0x10] sm:$0xff]
      %v201 = vld [vmem:[%s192 + $0x18] sm:$0xff]
      %v202 = vld [vmem:[%s192 + $0x20] sm:$0xff]
      %v203 = vld [vmem:[%s192 + $0x28] sm:$0xff]
      %v204 = vld [vmem:[%s192 + $0x30] sm:$0xff]
      %v205 = vld [vmem:[%s192 + $0x38] sm:$0xff]
      %v206 = vld [vmem:[%s192 + $0x40] sm:$0xff]
      %v207 = vld [vmem:[%s192 + $0x48] sm:$0xff]
      %v208 = vld [vmem:[%s192 + $0x50] sm:$0xff]
      %v209 = vld [vmem:[%s192 + $0x58] sm:$0xff]
      %v210 = vld [vmem:[%s192 + $0x60] sm:$0xff]
      %v211 = vld [vmem:[%s192 + $0x68] sm:$0xff]
      %v212 = vld [vmem:[%s192 + $0x70] sm:$0xff]
      %v213 = vld [vmem:[%s192 + $0x78] sm:$0xff]
      %v214 = vld [vmem:[%s192 + $0x80] sm:$0xff]
      %v215 = vld [vmem:[%s192 + $0x88] sm:$0xff]
      %v216 = vld [vmem:[%s192 + $0x90] sm:$0xff]
      %v217 = vld [vmem:[%s192 + $0x98] sm:$0xff]
      %v218 = vld [vmem:[%s192 + $0xa0] sm:$0xff]
      %v219 = vld [vmem:[%s192 + $0xa8] sm:$0xff]
      %v220 = vld [vmem:[%s192 + $0xb0] sm:$0xff]
      %v221 = vld [vmem:[%s192 + $0xb8] sm:$0xff]
      %v222 = vld [vmem:[%s192 + $0xc0] sm:$0xf]
      %v223 = vld [vmem:[%s192 + $0xc8] sm:$0xf]
      %v224 = vld [vmem:[%s1] sm:$0xff]
      %v225 = vld [vmem:[%s1 + $0x8] sm:$0xff]
      %v226 = vld [vmem:[%s1 + $0x10] sm:$0xff]
      %v227 = vld [vmem:[%s1 + $0x18] sm:$0xff]
      %v228 = vld [vmem:[%s1 + $0x20] sm:$0xff]
      %v229 = vld [vmem:[%s1 + $0x28] sm:$0xff]
      %v230 = vld [vmem:[%s1 + $0x30] sm:$0xff]
      %v231 = vld [vmem:[%s1 + $0x38] sm:$0xff]
      %v232 = vld [vmem:[%s1 + $0x40] sm:$0xff]
      %v233 = vld [vmem:[%s1 + $0x48] sm:$0xff]
      %v234 = vld [vmem:[%s1 + $0x50] sm:$0xff]
      %v235 = vld [vmem:[%s1 + $0x58] sm:$0xff]
      %v236 = vld [vmem:[%s1 + $0x60] sm:$0xff]
      %v237 = vld [vmem:[%s1 + $0x68] sm:$0xff]
      %v238 = vld [vmem:[%s1 + $0x70] sm:$0xff]
      %v239 = vld [vmem:[%s1 + $0x78] sm:$0xff]
      %v240 = vld [vmem:[%s1 + $0x80] sm:$0xff]
      %v241 = vld [vmem:[%s1 + $0x88] sm:$0xff]
      %v242 = vld [vmem:[%s1 + $0x90] sm:$0x3f]
      %v243 = vld [vmem:[%s2] sm:$0x1]
      %v245 = vperm.slane %v243, 0
      %vm247 = vcmask 179200
      %v249 = vsel %vm247, %v199, 0
      %v252 = vsel %vm247, %v201, 0
      %v255 = vsel %vm247, %v203, 0
      %v258 = vsel %vm247, %v205, 0
      %v261 = vsel %vm247, %v207, 0
      %v264 = vsel %vm247, %v209, 0
      %v267 = vsel %vm247, %v211, 0
      %v270 = vsel %vm247, %v213, 0
      %v273 = vsel %vm247, %v215, 0
      %v276 = vsel %vm247, %v217, 0
      %v279 = vsel %vm247, %v219, 0
      %v282 = vsel %vm247, %v221, 0
      %v285 = vsel %vm247, %v223, 0
      %vm287 = vcmask 1045504
      %v289 = vsel %vm287, %v242, 0
      %291 = vmatpush.msra.mxu0 %v239
      %292 = vmatpush.msra.mxu0 %v238
      %293 = vmatpush.msra.mxu0 %v237
      %294 = vmatpush.msra.mxu0 %v236
      %295 = vmatpush.msra.mxu0 %v235
      %296 = vmatpush.msra.mxu0 %v234
      %297 = vmatpush.msra.mxu0 %v233
      %298 = vmatpush.msra.mxu0 %v232
      %299 = vmatpush.msra.mxu0 %v231
      %300 = vmatpush.msra.mxu0 %v230
      %301 = vmatpush.msra.mxu0 %v229
      %302 = vmatpush.msra.mxu0 %v228
      %303 = vmatpush.msra.mxu0 %v227
      %304 = vmatpush.msra.mxu0 %v226
      %305 = vmatpush.msra.mxu0 %v225
      %306 = vmatpush.msra.mxu0 %v224
      %307 = vmatmul.f32.gmra.mxu0 %v198
      %v308 = vpop.f32.mrf.mxu0
      %v309 = vadd.f32 %v245, %v308
      %310 = vmatmul.f32.gmra.mxu0 %v200
      %v311 = vpop.f32.mrf.mxu0
      %v312 = vadd.f32 %v245, %v311
      %313 = vmatmul.f32.gmra.mxu0 %v202
      %v314 = vpop.f32.mrf.mxu0
      %v315 = vadd.f32 %v245, %v314
      %316 = vmatmul.f32.gmra.mxu0 %v204
      %v317 = vpop.f32.mrf.mxu0
      %v318 = vadd.f32 %v245, %v317
      %319 = vmatmul.f32.gmra.mxu0 %v206
      %v320 = vpop.f32.mrf.mxu0
      %v321 = vadd.f32 %v245, %v320
      %322 = vmatmul.f32.gmra.mxu0 %v208
      %v323 = vpop.f32.mrf.mxu0
      %v324 = vadd.f32 %v245, %v323
      %325 = vmatmul.f32.gmra.mxu0 %v210
      %v326 = vpop.f32.mrf.mxu0
      %v327 = vadd.f32 %v245, %v326
      %328 = vmatmul.f32.gmra.mxu0 %v212
      %v329 = vpop.f32.mrf.mxu0
      %v330 = vadd.f32 %v245, %v329
      %331 = vmatmul.f32.gmra.mxu0 %v214
      %v332 = vpop.f32.mrf.mxu0
      %v333 = vadd.f32 %v245, %v332
      %334 = vmatmul.f32.gmra.mxu0 %v216
      %v335 = vpop.f32.mrf.mxu0
      %v336 = vadd.f32 %v245, %v335
      %337 = vmatmul.f32.gmra.mxu0 %v218
      %v338 = vpop.f32.mrf.mxu0
      %v339 = vadd.f32 %v245, %v338
      %340 = vmatmul.f32.gmra.mxu0 %v220
      %v341 = vpop.f32.mrf.mxu0
      %v342 = vadd.f32 %v245, %v341
      %343 = vmatmul.f32.gmra.mxu0 %v222
      %v344 = vpop.f32.mrf.mxu0
      %v345 = vadd.f32 %v245, %v344
      %346 = vdwg.mxu0
      %347 = vmatpush.msra.mxu0 0.0
      %348 = vmatpush.msra.mxu0 0.0
      %349 = vmatpush.msra.mxu0 0.0
      %350 = vmatpush.msra.mxu0 0.0
      %351 = vmatpush.msra.mxu0 0.0
      %352 = vmatpush.msra.mxu0 0.0
      %353 = vmatpush.msra.mxu0 0.0
      %354 = vmatpush.msra.mxu0 0.0
      %355 = vmatpush.msra.mxu0 0.0
      %356 = vmatpush.msra.mxu0 0.0
      %357 = vmatpush.msra.mxu0 0.0
      %358 = vmatpush.msra.mxu0 0.0
      %359 = vmatpush.msra.mxu0 0.0
      %360 = vmatpush.msra.mxu0 %v289
      %361 = vmatpush.msra.mxu0 %v241
      %362 = vmatpush.msra.mxu0 %v240
      %363 = vmatmul.f32.gmra.mxu0 %v249
      %v364 = vpop.f32.mrf.mxu0
      %v365 = vadd.f32 %v309, %v364
      %366 = vmatmul.f32.gmra.mxu0 %v252
      %v367 = vpop.f32.mrf.mxu0
      %v368 = vadd.f32 %v312, %v367
      %369 = vmatmul.f32.gmra.mxu0 %v255
      %v370 = vpop.f32.mrf.mxu0
      %v371 = vadd.f32 %v315, %v370
      %372 = vmatmul.f32.gmra.mxu0 %v258
      %v373 = vpop.f32.mrf.mxu0
      %v374 = vadd.f32 %v318, %v373
      %375 = vmatmul.f32.gmra.mxu0 %v261
      %v376 = vpop.f32.mrf.mxu0
      %v377 = vadd.f32 %v321, %v376
      %378 = vmatmul.f32.gmra.mxu0 %v264
      %v379 = vpop.f32.mrf.mxu0
      %v380 = vadd.f32 %v324, %v379
      %381 = vmatmul.f32.gmra.mxu0 %v267
      %v382 = vpop.f32.mrf.mxu0
      %v383 = vadd.f32 %v327, %v382
      %384 = vmatmul.f32.gmra.mxu0 %v270
      %v385 = vpop.f32.mrf.mxu0
      %v386 = vadd.f32 %v330, %v385
      %387 = vmatmul.f32.gmra.mxu0 %v273
      %v388 = vpop.f32.mrf.mxu0
      %v389 = vadd.f32 %v333, %v388
      %390 = vmatmul.f32.gmra.mxu0 %v276
      %v391 = vpop.f32.mrf.mxu0
      %v392 = vadd.f32 %v336, %v391
      %393 = vmatmul.f32.gmra.mxu0 %v279
      %v394 = vpop.f32.mrf.mxu0
      %v395 = vadd.f32 %v339, %v394
      %396 = vmatmul.f32.gmra.mxu0 %v282
      %v397 = vpop.f32.mrf.mxu0
      %v398 = vadd.f32 %v342, %v397
      %399 = vmatmul.f32.gmra.mxu0 %v285
      %v400 = vpop.f32.mrf.mxu0
      %v401 = vadd.f32 %v345, %v400
      %402 = vdwg.mxu0
      %v403 = vmax.f32 %v365, 0.0
      %v404 = vmax.f32 %v368, 0.0
      %v405 = vmax.f32 %v371, 0.0
      %v406 = vmax.f32 %v374, 0.0
      %v407 = vmax.f32 %v377, 0.0
      %v408 = vmax.f32 %v380, 0.0
      %v409 = vmax.f32 %v383, 0.0
      %v410 = vmax.f32 %v386, 0.0
      %v411 = vmax.f32 %v389, 0.0
      %v412 = vmax.f32 %v392, 0.0
      %v413 = vmax.f32 %v395, 0.0
      %v414 = vmax.f32 %v398, 0.0
      %v415 = vmax.f32 %v401, 0.0
      %v416 = vld [vmem:[%s3] sm:$0xff]
      %v417 = vld [vmem:[%s3 + $0x8] sm:$0xff]
      %v418 = vld [vmem:[%s3 + $0x10] sm:$0xff]
      %v419 = vld [vmem:[%s3 + $0x18] sm:$0x1]
      %vm420 = vcmask 818176
      %v422 = vsel %vm420, %v416, 0
      %v425 = vsel %vm420, %v417, 0
      %v428 = vsel %vm420, %v418, 0
      %v431 = vsel %vm420, %v419, 0
      %vm433 = vcmask 1043456
      %v435 = vsel %vm433, %v415, 0
      %437 = vmatpush.msra.mxu0 0.0
      %438 = vmatpush.msra.mxu0 0.0
      %439 = vmatpush.msra.mxu0 0.0
      %440 = vmatpush.msra.mxu0 %v435
      %441 = vmatpush.msra.mxu0 %v414
      %442 = vmatpush.msra.mxu0 %v413
      %443 = vmatpush.msra.mxu0 %v412
      %444 = vmatpush.msra.mxu0 %v411
      %445 = vmatpush.msra.mxu0 %v410
      %446 = vmatpush.msra.mxu0 %v409
      %447 = vmatpush.msra.mxu0 %v408
      %448 = vmatpush.msra.mxu0 %v407
      %449 = vmatpush.msra.mxu0 %v406
      %450 = vmatpush.msra.mxu0 %v405
      %451 = vmatpush.msra.mxu0 %v404
      %452 = vmatpush.msra.mxu0 %v403
      %453 = vmatmul.f32.gmra.mxu0 %v422
      %v454 = vpop.f32.mrf.mxu0
      %v455 = vadd.f32 0.0, %v454
      %456 = vmatmul.f32.gmra.mxu0 %v425
      %v457 = vpop.f32.mrf.mxu0
      %v458 = vadd.f32 0.0, %v457
      %459 = vmatmul.f32.gmra.mxu0 %v428
      %v460 = vpop.f32.mrf.mxu0
      %v461 = vadd.f32 0.0, %v460
      %462 = vmatmul.f32.gmra.mxu0 %v431
      %v463 = vpop.f32.mrf.mxu0
      %v464 = vadd.f32 0.0, %v463
      %465 = vdwg.mxu0
      %466 = vst [vmem:[%s197] sm:$0xff] %v455
      %467 = vst [vmem:[%s197 + $0x8] sm:$0xff] %v458
      %468 = vst [vmem:[%s197 + $0x10] sm:$0xff] %v461
      %469 = vst [vmem:[%s197 + $0x18] sm:$0x1] %v464
      %p470 = scmp.lt.s32.totalorder %s15, 1
      %s471 = scalar_select %p470, %s15, 1
      %s472 = smul.addr %s471, 4
      %s473 = smul.addr %s472, 8
      %s474 = scalar_lea.vmem %s4, %s473
      // Predicated region
      $region37: #{lenet5_forward.4} parent=35 // pred_check
        %p475 = pneg %p122
      $region38: #{lenet5_forward.4} parent=35 // pred_check_branch
        %477 = sbr.rel (%p475) target = $region40
      $region39: #{lenet5_forward.4} parent=35 // pred_region
        _
      $region40: #{lenet5_forward.4} parent=35 // pred_fallthru
        _
    $region36: #{lenet5_forward.4} parent=5 // pred_fallthru
      _
    %p478 = scmp.le.s32.totalorder 2, %s10
    // Predicated region
    $region41: #{lenet5_forward.4} parent=5 // pred_check
      %p479 = pneg %p478
    $region42: #{lenet5_forward.4} parent=5 // pred_check_branch
      %481 = sbr.rel (%p479) target = $region44
    $region43: #{lenet5_forward.4} parent=5 // pred_region
      %s482 = ssub.s32 %s10, 2
      // Predicated region
      $region45: #{lenet5_forward.4} parent=43 // pred_check
        %p483 = pneg %p128
      $region46: #{lenet5_forward.4} parent=43 // pred_check_branch
        %485 = sbr.rel (%p483) target = $region48
      $region47: #{lenet5_forward.4} parent=43 // pred_region
        %p486 = scmp.lt.s32.totalorder %s16, 1
        %s487 = scalar_select %p486, %s16, 1
        %s488 = smul.addr %s487, 4
        %s489 = smul.addr %s488, 8
        %s490 = scalar_lea.vmem %s4, %s489
      $region48: #{lenet5_forward.4} parent=43 // pred_fallthru
        _
    $region44: #{lenet5_forward.4} parent=5 // pred_fallthru
      _
  $region6: #{lenet5_forward.4} parent=0 // loop_footer
    %s14 = sadd.s32 1, %s10
  $region7: #{lenet5_forward.4} parent=0 // loop_footer_branch
    %9 = sbr.rel target = $region3
  $region8: #{lenet5_forward.4} parent=0 // loop_exit
    _

// kernel: lenet5_forward.5
$region0: #{lenet5_forward.5}
  #allocation0 [shape = 'u32[]', space=smem, size = 0x4, offset = 0x4, fixed_abs, tag = 'smem constant byte address 0x4 - core index']
  #allocation1 [shape = 'u32[72,128]{1,0:T(1,128)}', space=vmem, size = 0x9000, scoped, tag = 'internal scratch']
  %s0 = inlined_call_operand.vmem [shape: f32[2,3200], index: 0, kind: input, shape index: {}]
  %s1 = inlined_call_operand.vmem [shape: f32[3200,128], index: 1, kind: input, shape index: {}]
  %s2 = inlined_call_operand.vmem [shape: f32[1,128], index: 2, kind: input, shape index: {}]
  %s3 = inlined_call_operand.vmem [shape: f32[128,128], index: 3, kind: input, shape index: {}]
  %s4 = inlined_call_operand.vmem [shape: f32[1,128], index: 4, kind: input, shape index: {}]
  %s5 = inlined_call_operand.vmem [shape: f32[128,128], index: 5, kind: input, shape index: {}]
  %s6 = inlined_call_operand.vmem [shape: f32[1,128], index: 6, kind: input, shape index: {}]
  %s7 = inlined_call_operand.hbm [shape: f32[2,128], index: 7, kind: output, shape index: {}]
  %s8 = sld [smem:[#allocation0]]
  $region38: #{lenet5_forward.5} parent=0
    _
  %s10 = ssub.s32 1, %s8
  %s11 = scalar_select 0, %s10, %s8
  $region1: #{lenet5_forward.5} parent=0
    #allocation2 [shape = 'u8[1024]{0}', space=vmem, size = 0x400, scoped, tag = 'output window, operand 0, single buffered']
    #allocation3 [shape = 's32[1]{0}', space=sflag, size = 0x4, scoped, tag = 'scoped memory for lenet5_forward.5']
    %12 = vsyncpa [#allocation3], 0
    // Predicated region
    $region2: #{lenet5_forward.5} parent=1 // pred_check
      _
    $region3: #{lenet5_forward.5} parent=1 // pred_check_branch
      %14 = sbr.rel (0) target = $region5
    $region4: #{lenet5_forward.5} parent=1 // pred_region
      _
    $region5: #{lenet5_forward.5} parent=1 // pred_fallthru
      _
    // Predicated region
    $region6: #{lenet5_forward.5} parent=1 // pred_check
      _
    $region7: #{lenet5_forward.5} parent=1 // pred_check_branch
      %16 = sbr.rel (0) target = $region9
    $region8: #{lenet5_forward.5} parent=1 // pred_region
      _
    $region9: #{lenet5_forward.5} parent=1 // pred_fallthru
      _
    // Predicated region
    $region10: #{lenet5_forward.5} parent=1 // pred_check
      _
    $region11: #{lenet5_forward.5} parent=1 // pred_check_branch
      %18 = sbr.rel (0) target = $region13
    $region12: #{lenet5_forward.5} parent=1 // pred_region
      _
    $region13: #{lenet5_forward.5} parent=1 // pred_fallthru
      _
    // Predicated region
    $region14: #{lenet5_forward.5} parent=1 // pred_check
      _
    $region15: #{lenet5_forward.5} parent=1 // pred_check_branch
      %20 = sbr.rel (0) target = $region17
    $region16: #{lenet5_forward.5} parent=1 // pred_region
      _
    $region17: #{lenet5_forward.5} parent=1 // pred_fallthru
      _
    // Predicated region
    $region18: #{lenet5_forward.5} parent=1 // pred_check
      _
    $region19: #{lenet5_forward.5} parent=1 // pred_check_branch
      %22 = sbr.rel (0) target = $region21
    $region20: #{lenet5_forward.5} parent=1 // pred_region
      _
    $region21: #{lenet5_forward.5} parent=1 // pred_fallthru
      _
    // Predicated region
    $region22: #{lenet5_forward.5} parent=1 // pred_check
      _
    $region23: #{lenet5_forward.5} parent=1 // pred_check_branch
      %24 = sbr.rel (0) target = $region25
    $region24: #{lenet5_forward.5} parent=1 // pred_region
      _
    $region25: #{lenet5_forward.5} parent=1 // pred_fallthru
      _
    // Predicated region
    $region26: #{lenet5_forward.5} parent=1 // pred_check
      _
    $region27: #{lenet5_forward.5} parent=1 // pred_check_branch
      %26 = sbr.rel (0) target = $region29
    $region28: #{lenet5_forward.5} parent=1 // pred_region
      _
    $region29: #{lenet5_forward.5} parent=1 // pred_fallthru
      _
    %v27 = vld [vmem:[%s0] sm:$0xff]
    %v28 = vld [vmem:[%s0 + $0x8] sm:$0xff]
    %v29 = vld [vmem:[%s0 + $0x10] sm:$0xff]
    %v30 = vld [vmem:[%s0 + $0x18] sm:$0xff]
    %v31 = vld [vmem:[%s0 + $0x20] sm:$0xff]
    %v32 = vld [vmem:[%s0 + $0x28] sm:$0xff]
    %v33 = vld [vmem:[%s0 + $0x30] sm:$0x3]
    %v34 = vld [vmem:[%s1] sm:$0xff]
    %v35 = vld [vmem:[%s1 + $0x8] sm:$0xff]
    %v36 = vld [vmem:[%s1 + $0x10] sm:$0xff]
    %v37 = vld [vmem:[%s1 + $0x18] sm:$0xff]
    %v38 = vld [vmem:[%s1 + $0x20] sm:$0xff]
    %v39 = vld [vmem:[%s1 + $0x28] sm:$0xff]
    %v40 = vld [vmem:[%s1 + $0x30] sm:$0xff]
    %v41 = vld [vmem:[%s1 + $0x38] sm:$0xff]
    %v42 = vld [vmem:[%s1 + $0x40] sm:$0xff]
    %v43 = vld [vmem:[%s1 + $0x48] sm:$0xff]
    %v44 = vld [vmem:[%s1 + $0x50] sm:$0xff]
    %v45 = vld [vmem:[%s1 + $0x58] sm:$0xff]
    %v46 = vld [vmem:[%s1 + $0x60] sm:$0xff]
    %v47 = vld [vmem:[%s1 + $0x68] sm:$0xff]
    %v48 = vld [vmem:[%s1 + $0x70] sm:$0xff]
    %v49 = vld [vmem:[%s1 + $0x78] sm:$0xff]
    %v50 = vld [vmem:[%s1 + $0x80] sm:$0xff]
    %v51 = vld [vmem:[%s1 + $0x88] sm:$0xff]
    %v52 = vld [vmem:[%s1 + $0x90] sm:$0xff]
    %v53 = vld [vmem:[%s1 + $0x98] sm:$0xff]
    %v54 = vld [vmem:[%s1 + $0xa0] sm:$0xff]
    %v55 = vld [vmem:[%s1 + $0xa8] sm:$0xff]
    %v56 = vld [vmem:[%s1 + $0xb0] sm:$0xff]
    %v57 = vld [vmem:[%s1 + $0xb8] sm:$0xff]
    %v58 = vld [vmem:[%s1 + $0xc0] sm:$0xff]
    %v59 = vld [vmem:[%s1 + $0xc8] sm:$0xff]
    %v60 = vld [vmem:[%s1 + $0xd0] sm:$0xff]
    %v61 = vld [vmem:[%s1 + $0xd8] sm:$0xff]
    %v62 = vld [vmem:[%s1 + $0xe0] sm:$0xff]
    %v63 = vld [vmem:[%s1 + $0xe8] sm:$0xff]
    %v64 = vld [vmem:[%s1 + $0xf0] sm:$0xff]
    %v65 = vld [vmem:[%s1 + $0xf8] sm:$0xff]
    %v66 = vld [vmem:[%s1 + $0x100] sm:$0xff]
    %v67 = vld [vmem:[%s1 + $0x108] sm:$0xff]
    %v68 = vld [vmem:[%s1 + $0x110] sm:$0xff]
    %v69 = vld [vmem:[%s1 + $0x118] sm:$0xff]
    %v70 = vld [vmem:[%s1 + $0x120] sm:$0xff]
    %v71 = vld [vmem:[%s1 + $0x128] sm:$0xff]
    %v72 = vld [vmem:[%s1 + $0x130] sm:$0xff]
    %v73 = vld [vmem:[%s1 + $0x138] sm:$0xff]
    %v74 = vld [vmem:[%s1 + $0x140] sm:$0xff]
    %v75 = vld [vmem:[%s1 + $0x148] sm:$0xff]
    %v76 = vld [vmem:[%s1 + $0x150] sm:$0xff]
    %v77 = vld [vmem:[%s1 + $0x158] sm:$0xff]
    %v78 = vld [vmem:[%s1 + $0x160] sm:$0xff]
    %v79 = vld [vmem:[%s1 + $0x168] sm:$0xff]
    %v80 = vld [vmem:[%s1 + $0x170] sm:$0xff]
    %v81 = vld [vmem:[%s1 + $0x178] sm:$0xff]
    %v82 = vld [vmem:[%s1 + $0x180] sm:$0xff]
    %v83 = vld [vmem:[%s1 + $0x188] sm:$0xff]
    %v84 = vld [vmem:[%s1 + $0x190] sm:$0xff]
    %v85 = vld [vmem:[%s1 + $0x198] sm:$0xff]
    %v86 = vld [vmem:[%s1 + $0x1a0] sm:$0xff]
    %v87 = vld [vmem:[%s1 + $0x1a8] sm:$0xff]
    %v88 = vld [vmem:[%s1 + $0x1b0] sm:$0xff]
    %v89 = vld [vmem:[%s1 + $0x1b8] sm:$0xff]
    %v90 = vld [vmem:[%s1 + $0x1c0] sm:$0xff]
    %v91 = vld [vmem:[%s1 + $0x1c8] sm:$0xff]
    %v92 = vld [vmem:[%s1 + $0x1d0] sm:$0xff]
    %v93 = vld [vmem:[%s1 + $0x1d8] sm:$0xff]
    %v94 = vld [vmem:[%s1 + $0x1e0] sm:$0xff]
    %v95 = vld [vmem:[%s1 + $0x1e8] sm:$0xff]
    %v96 = vld [vmem:[%s1 + $0x1f0] sm:$0xff]
    %v97 = vld [vmem:[%s1 + $0x1f8] sm:$0xff]
    %v98 = vld [vmem:[%s1 + $0x200] sm:$0xff]
    %v99 = vld [vmem:[%s1 + $0x208] sm:$0xff]
    %v100 = vld [vmem:[%s1 + $0x210] sm:$0xff]
    %v101 = vld [vmem:[%s1 + $0x218] sm:$0xff]
    %v102 = vld [vmem:[%s1 + $0x220] sm:$0xff]
    %v103 = vld [vmem:[%s1 + $0x228] sm:$0xff]
    %v104 = vld [vmem:[%s1 + $0x230] sm:$0xff]
    %v105 = vld [vmem:[%s1 + $0x238] sm:$0xff]
    %v106 = vld [vmem:[%s1 + $0x240] sm:$0xff]
    %v107 = vld [vmem:[%s1 + $0x248] sm:$0xff]
    %v108 = vld [vmem:[%s1 + $0x250] sm:$0xff]
    %v109 = vld [vmem:[%s1 + $0x258] sm:$0xff]
    %v110 = vld [vmem:[%s1 + $0x260] sm:$0xff]
    %v111 = vld [vmem:[%s1 + $0x268] sm:$0xff]
    %v112 = vld [vmem:[%s1 + $0x270] sm:$0xff]
    %v113 = vld [vmem:[%s1 + $0x278] sm:$0xff]
    %v114 = vld [vmem:[%s1 + $0x280] sm:$0xff]
    %v115 = vld [vmem:[%s1 + $0x288] sm:$0xff]
    %v116 = vld [vmem:[%s1 + $0x290] sm:$0xff]
    %v117 = vld [vmem:[%s1 + $0x298] sm:$0xff]
    %v118 = vld [vmem:[%s1 + $0x2a0] sm:$0xff]
    %v119 = vld [vmem:[%s1 + $0x2a8] sm:$0xff]
    %v120 = vld [vmem:[%s1 + $0x2b0] sm:$0xff]
    %v121 = vld [vmem:[%s1 + $0x2b8] sm:$0xff]
    %v122 = vld [vmem:[%s1 + $0x2c0] sm:$0xff]
    %v123 = vld [vmem:[%s1 + $0x2c8] sm:$0xff]
    %v124 = vld [vmem:[%s1 + $0x2d0] sm:$0xff]
    %v125 = vld [vmem:[%s1 + $0x2d8] sm:$0xff]
    %v126 = vld [vmem:[%s1 + $0x2e0] sm:$0xff]
    %v127 = vld [vmem:[%s1 + $0x2e8] sm:$0xff]
    %v128 = vld [vmem:[%s1 + $0x2f0] sm:$0xff]
    %v129 = vld [vmem:[%s1 + $0x2f8] sm:$0xff]
    %v130 = vld [vmem:[%s1 + $0x300] sm:$0xff]
    %v131 = vld [vmem:[%s1 + $0x308] sm:$0xff]
    %v132 = vld [vmem:[%s1 + $0x310] sm:$0xff]
    %v133 = vld [vmem:[%s1 + $0x318] sm:$0xff]
    %v134 = vld [vmem:[%s1 + $0x320] sm:$0xff]
    %v135 = vld [vmem:[%s1 + $0x328] sm:$0xff]
    %v136 = vld [vmem:[%s1 + $0x330] sm:$0xff]
    %v137 = vld [vmem:[%s1 + $0x338] sm:$0xff]
    %v138 = vld [vmem:[%s1 + $0x340] sm:$0xff]
    %v139 = vld [vmem:[%s1 + $0x348] sm:$0xff]
    %v140 = vld [vmem:[%s1 + $0x350] sm:$0xff]
    %v141 = vld [vmem:[%s1 + $0x358] sm:$0xff]
    %v142 = vld [vmem:[%s1 + $0x360] sm:$0xff]
    %v143 = vld [vmem:[%s1 + $0x368] sm:$0xff]
    %v144 = vld [vmem:[%s1 + $0x370] sm:$0xff]
    %v145 = vld [vmem:[%s1 + $0x378] sm:$0xff]
    %v146 = vld [vmem:[%s1 + $0x380] sm:$0xff]
    %v147 = vld [vmem:[%s1 + $0x388] sm:$0xff]
    %v148 = vld [vmem:[%s1 + $0x390] sm:$0xff]
    %v149 = vld [vmem:[%s1 + $0x398] sm:$0xff]
    %v150 = vld [vmem:[%s1 + $0x3a0] sm:$0xff]
    %v151 = vld [vmem:[%s1 + $0x3a8] sm:$0xff]
    %v152 = vld [vmem:[%s1 + $0x3b0] sm:$0xff]
    %v153 = vld [vmem:[%s1 + $0x3b8] sm:$0xff]
    %v154 = vld [vmem:[%s1 + $0x3c0] sm:$0xff]
    %v155 = vld [vmem:[%s1 + $0x3c8] sm:$0xff]
    %v156 = vld [vmem:[%s1 + $0x3d0] sm:$0xff]
    %v157 = vld [vmem:[%s1 + $0x3d8] sm:$0xff]
    %v158 = vld [vmem:[%s1 + $0x3e0] sm:$0xff]
    %v159 = vld [vmem:[%s1 + $0x3e8] sm:$0xff]
    %v160 = vld [vmem:[%s1 + $0x3f0] sm:$0xff]
    %v161 = vld [vmem:[%s1 + $0x3f8] sm:$0xff]
    %v162 = vld [vmem:[%s1 + $0x400] sm:$0xff]
    %v163 = vld [vmem:[%s1 + $0x408] sm:$0xff]
    %v164 = vld [vmem:[%s1 + $0x410] sm:$0xff]
    %v165 = vld [vmem:[%s1 + $0x418] sm:$0xff]
    %v166 = vld [vmem:[%s1 + $0x420] sm:$0xff]
    %v167 = vld [vmem:[%s1 + $0x428] sm:$0xff]
    %v168 = vld [vmem:[%s1 + $0x430] sm:$0xff]
    %v169 = vld [vmem:[%s1 + $0x438] sm:$0xff]
    %v170 = vld [vmem:[%s1 + $0x440] sm:$0xff]
    %v171 = vld [vmem:[%s1 + $0x448] sm:$0xff]
    %v172 = vld [vmem:[%s1 + $0x450] sm:$0xff]
    %v173 = vld [vmem:[%s1 + $0x458] sm:$0xff]
    %v174 = vld [vmem:[%s1 + $0x460] sm:$0xff]
    %v175 = vld [vmem:[%s1 + $0x468] sm:$0xff]
    %v176 = vld [vmem:[%s1 + $0x470] sm:$0xff]
    %v177 = vld [vmem:[%s1 + $0x478] sm:$0xff]
    %v178 = vld [vmem:[%s1 + $0x480] sm:$0xff]
    %v179 = vld [vmem:[%s1 + $0x488] sm:$0xff]
    %v180 = vld [vmem:[%s1 + $0x490] sm:$0xff]
    %v181 = vld [vmem:[%s1 + $0x498] sm:$0xff]
    %v182 = vld [vmem:[%s1 + $0x4a0] sm:$0xff]
    %v183 = vld [vmem:[%s1 + $0x4a8] sm:$0xff]
    %v184 = vld [vmem:[%s1 + $0x4b0] sm:$0xff]
    %v185 = vld [vmem:[%s1 + $0x4b8] sm:$0xff]
    %v186 = vld [vmem:[%s1 + $0x4c0] sm:$0xff]
    %v187 = vld [vmem:[%s1 + $0x4c8] sm:$0xff]
    %v188 = vld [vmem:[%s1 + $0x4d0] sm:$0xff]
    %v189 = vld [vmem:[%s1 + $0x4d8] sm:$0xff]
    %v190 = vld [vmem:[%s1 + $0x4e0] sm:$0xff]
    %v191 = vld [vmem:[%s1 + $0x4e8] sm:$0xff]
    %v192 = vld [vmem:[%s1 + $0x4f0] sm:$0xff]
    %v193 = vld [vmem:[%s1 + $0x4f8] sm:$0xff]
    %v194 = vld [vmem:[%s1 + $0x500] sm:$0xff]
    %v195 = vld [vmem:[%s1 + $0x508] sm:$0xff]
    %v196 = vld [vmem:[%s1 + $0x510] sm:$0xff]
    %v197 = vld [vmem:[%s1 + $0x518] sm:$0xff]
    %v198 = vld [vmem:[%s1 + $0x520] sm:$0xff]
    %v199 = vld [vmem:[%s1 + $0x528] sm:$0xff]
    %v200 = vld [vmem:[%s1 + $0x530] sm:$0xff]
    %v201 = vld [vmem:[%s1 + $0x538] sm:$0xff]
    %v202 = vld [vmem:[%s1 + $0x540] sm:$0xff]
    %v203 = vld [vmem:[%s1 + $0x548] sm:$0xff]
    %v204 = vld [vmem:[%s1 + $0x550] sm:$0xff]
    %v205 = vld [vmem:[%s1 + $0x558] sm:$0xff]
    %v206 = vld [vmem:[%s1 + $0x560] sm:$0xff]
    %v207 = vld [vmem:[%s1 + $0x568] sm:$0xff]
    %v208 = vld [vmem:[%s1 + $0x570] sm:$0xff]
    %v209 = vld [vmem:[%s1 + $0x578] sm:$0xff]
    %v210 = vld [vmem:[%s1 + $0x580] sm:$0xff]
    %v211 = vld [vmem:[%s1 + $0x588] sm:$0xff]
    %v212 = vld [vmem:[%s1 + $0x590] sm:$0xff]
    %v213 = vld [vmem:[%s1 + $0x598] sm:$0xff]
    %v214 = vld [vmem:[%s1 + $0x5a0] sm:$0xff]
    %v215 = vld [vmem:[%s1 + $0x5a8] sm:$0xff]
    %v216 = vld [vmem:[%s1 + $0x5b0] sm:$0xff]
    %v217 = vld [vmem:[%s1 + $0x5b8] sm:$0xff]
    %v218 = vld [vmem:[%s1 + $0x5c0] sm:$0xff]
    %v219 = vld [vmem:[%s1 + $0x5c8] sm:$0xff]
    %v220 = vld [vmem:[%s1 + $0x5d0] sm:$0xff]
    %v221 = vld [vmem:[%s1 + $0x5d8] sm:$0xff]
    %v222 = vld [vmem:[%s1 + $0x5e0] sm:$0xff]
    %v223 = vld [vmem:[%s1 + $0x5e8] sm:$0xff]
    %v224 = vld [vmem:[%s1 + $0x5f0] sm:$0xff]
    %v225 = vld [vmem:[%s1 + $0x5f8] sm:$0xff]
    %v226 = vld [vmem:[%s1 + $0x600] sm:$0xff]
    %v227 = vld [vmem:[%s1 + $0x608] sm:$0xff]
    %v228 = vld [vmem:[%s1 + $0x610] sm:$0xff]
    %v229 = vld [vmem:[%s1 + $0x618] sm:$0xff]
    %v230 = vld [vmem:[%s1 + $0x620] sm:$0xff]
    %v231 = vld [vmem:[%s1 + $0x628] sm:$0xff]
    %v232 = vld [vmem:[%s1 + $0x630] sm:$0xff]
    %v233 = vld [vmem:[%s1 + $0x638] sm:$0xff]
    %v234 = vld [vmem:[%s1 + $0x640] sm:$0xff]
    %v235 = vld [vmem:[%s1 + $0x648] sm:$0xff]
    %v236 = vld [vmem:[%s1 + $0x650] sm:$0xff]
    %v237 = vld [vmem:[%s1 + $0x658] sm:$0xff]
    %v238 = vld [vmem:[%s1 + $0x660] sm:$0xff]
    %v239 = vld [vmem:[%s1 + $0x668] sm:$0xff]
    %v240 = vld [vmem:[%s1 + $0x670] sm:$0xff]
    %v241 = vld [vmem:[%s1 + $0x678] sm:$0xff]
    %v242 = vld [vmem:[%s1 + $0x680] sm:$0xff]
    %v243 = vld [vmem:[%s1 + $0x688] sm:$0xff]
    %v244 = vld [vmem:[%s1 + $0x690] sm:$0xff]
    %v245 = vld [vmem:[%s1 + $0x698] sm:$0xff]
    %v246 = vld [vmem:[%s1 + $0x6a0] sm:$0xff]
    %v247 = vld [vmem:[%s1 + $0x6a8] sm:$0xff]
    %v248 = vld [vmem:[%s1 + $0x6b0] sm:$0xff]
    %v249 = vld [vmem:[%s1 + $0x6b8] sm:$0xff]
    %v250 = vld [vmem:[%s1 + $0x6c0] sm:$0xff]
    %v251 = vld [vmem:[%s1 + $0x6c8] sm:$0xff]
    %v252 = vld [vmem:[%s1 + $0x6d0] sm:$0xff]
    %v253 = vld [vmem:[%s1 + $0x6d8] sm:$0xff]
    %v254 = vld [vmem:[%s1 + $0x6e0] sm:$0xff]
    %v255 = vld [vmem:[%s1 + $0x6e8] sm:$0xff]
    %v256 = vld [vmem:[%s1 + $0x6f0] sm:$0xff]
    %v257 = vld [vmem:[%s1 + $0x6f8] sm:$0xff]
    %v258 = vld [vmem:[%s1 + $0x700] sm:$0xff]
    %v259 = vld [vmem:[%s1 + $0x708] sm:$0xff]
    %v260 = vld [vmem:[%s1 + $0x710] sm:$0xff]
    %v261 = vld [vmem:[%s1 + $0x718] sm:$0xff]
    %v262 = vld [vmem:[%s1 + $0x720] sm:$0xff]
    %v263 = vld [vmem:[%s1 + $0x728] sm:$0xff]
    %v264 = vld [vmem:[%s1 + $0x730] sm:$0xff]
    %v265 = vld [vmem:[%s1 + $0x738] sm:$0xff]
    %v266 = vld [vmem:[%s1 + $0x740] sm:$0xff]
    %v267 = vld [vmem:[%s1 + $0x748] sm:$0xff]
    %v268 = vld [vmem:[%s1 + $0x750] sm:$0xff]
    %v269 = vld [vmem:[%s1 + $0x758] sm:$0xff]
    %v270 = vld [vmem:[%s1 + $0x760] sm:$0xff]
    %v271 = vld [vmem:[%s1 + $0x768] sm:$0xff]
    %v272 = vld [vmem:[%s1 + $0x770] sm:$0xff]
    %v273 = vld [vmem:[%s1 + $0x778] sm:$0xff]
    %v274 = vld [vmem:[%s1 + $0x780] sm:$0xff]
    %v275 = vld [vmem:[%s1 + $0x788] sm:$0xff]
    %v276 = vld [vmem:[%s1 + $0x790] sm:$0xff]
    %v277 = vld [vmem:[%s1 + $0x798] sm:$0xff]
    %v278 = vld [vmem:[%s1 + $0x7a0] sm:$0xff]
    %v279 = vld [vmem:[%s1 + $0x7a8] sm:$0xff]
    %v280 = vld [vmem:[%s1 + $0x7b0] sm:$0xff]
    %v281 = vld [vmem:[%s1 + $0x7b8] sm:$0xff]
    %v282 = vld [vmem:[%s1 + $0x7c0] sm:$0xff]
    %v283 = vld [vmem:[%s1 + $0x7c8] sm:$0xff]
    %v284 = vld [vmem:[%s1 + $0x7d0] sm:$0xff]
    %v285 = vld [vmem:[%s1 + $0x7d8] sm:$0xff]
    %v286 = vld [vmem:[%s1 + $0x7e0] sm:$0xff]
    %v287 = vld [vmem:[%s1 + $0x7e8] sm:$0xff]
    %v288 = vld [vmem:[%s1 + $0x7f0] sm:$0xff]
    %v289 = vld [vmem:[%s1 + $0x7f8] sm:$0xff]
    %v290 = vld [vmem:[%s1 + $0x800] sm:$0xff]
    %v291 = vld [vmem:[%s1 + $0x808] sm:$0xff]
    %v292 = vld [vmem:[%s1 + $0x810] sm:$0xff]
    %v293 = vld [vmem:[%s1 + $0x818] sm:$0xff]
    %v294 = vld [vmem:[%s1 + $0x820] sm:$0xff]
    %v295 = vld [vmem:[%s1 + $0x828] sm:$0xff]
    %v296 = vld [vmem:[%s1 + $0x830] sm:$0xff]
    %v297 = vld [vmem:[%s1 + $0x838] sm:$0xff]
    %v298 = vld [vmem:[%s1 + $0x840] sm:$0xff]
    %v299 = vld [vmem:[%s1 + $0x848] sm:$0xff]
    %v300 = vld [vmem:[%s1 + $0x850] sm:$0xff]
    %v301 = vld [vmem:[%s1 + $0x858] sm:$0xff]
    %v302 = vld [vmem:[%s1 + $0x860] sm:$0xff]
    %v303 = vld [vmem:[%s1 + $0x868] sm:$0xff]
    %v304 = vld [vmem:[%s1 + $0x870] sm:$0xff]
    %v305 = vld [vmem:[%s1 + $0x878] sm:$0xff]
    %v306 = vld [vmem:[%s1 + $0x880] sm:$0xff]
    %v307 = vld [vmem:[%s1 + $0x888] sm:$0xff]
    %v308 = vld [vmem:[%s1 + $0x890] sm:$0xff]
    %v309 = vld [vmem:[%s1 + $0x898] sm:$0xff]
    %v310 = vld [vmem:[%s1 + $0x8a0] sm:$0xff]
    %v311 = vld [vmem:[%s1 + $0x8a8] sm:$0xff]
    %v312 = vld [vmem:[%s1 + $0x8b0] sm:$0xff]
    %v313 = vld [vmem:[%s1 + $0x8b8] sm:$0xff]
    %v314 = vld [vmem:[%s1 + $0x8c0] sm:$0xff]
    %v315 = vld [vmem:[%s1 + $0x8c8] sm:$0xff]
    %v316 = vld [vmem:[%s1 + $0x8d0] sm:$0xff]
    %v317 = vld [vmem:[%s1 + $0x8d8] sm:$0xff]
    %v318 = vld [vmem:[%s1 + $0x8e0] sm:$0xff]
    %v319 = vld [vmem:[%s1 + $0x8e8] sm:$0xff]
    %v320 = vld [vmem:[%s1 + $0x8f0] sm:$0xff]
    %v321 = vld [vmem:[%s1 + $0x8f8] sm:$0xff]
    %v322 = vld [vmem:[%s1 + $0x900] sm:$0xff]
    %v323 = vld [vmem:[%s1 + $0x908] sm:$0xff]
    %v324 = vld [vmem:[%s1 + $0x910] sm:$0xff]
    %v325 = vld [vmem:[%s1 + $0x918] sm:$0xff]
    %v326 = vld [vmem:[%s1 + $0x920] sm:$0xff]
    %v327 = vld [vmem:[%s1 + $0x928] sm:$0xff]
    %v328 = vld [vmem:[%s1 + $0x930] sm:$0xff]
    %v329 = vld [vmem:[%s1 + $0x938] sm:$0xff]
    %v330 = vld [vmem:[%s1 + $0x940] sm:$0xff]
    %v331 = vld [vmem:[%s1 + $0x948] sm:$0xff]
    %v332 = vld [vmem:[%s1 + $0x950] sm:$0xff]
    %v333 = vld [vmem:[%s1 + $0x958] sm:$0xff]
    %v334 = vld [vmem:[%s1 + $0x960] sm:$0xff]
    %v335 = vld [vmem:[%s1 + $0x968] sm:$0xff]
    %v336 = vld [vmem:[%s1 + $0x970] sm:$0xff]
    %v337 = vld [vmem:[%s1 + $0x978] sm:$0xff]
    %v338 = vld [vmem:[%s1 + $0x980] sm:$0xff]
    %v339 = vld [vmem:[%s1 + $0x988] sm:$0xff]
    %v340 = vld [vmem:[%s1 + $0x990] sm:$0xff]
    %v341 = vld [vmem:[%s1 + $0x998] sm:$0xff]
    %v342 = vld [vmem:[%s1 + $0x9a0] sm:$0xff]
    %v343 = vld [vmem:[%s1 + $0x9a8] sm:$0xff]
    %v344 = vld [vmem:[%s1 + $0x9b0] sm:$0xff]
    %v345 = vld [vmem:[%s1 + $0x9b8] sm:$0xff]
    %v346 = vld [vmem:[%s1 + $0x9c0] sm:$0xff]
    %v347 = vld [vmem:[%s1 + $0x9c8] sm:$0xff]
    %v348 = vld [vmem:[%s1 + $0x9d0] sm:$0xff]
    %v349 = vld [vmem:[%s1 + $0x9d8] sm:$0xff]
    %v350 = vld [vmem:[%s1 + $0x9e0] sm:$0xff]
    %v351 = vld [vmem:[%s1 + $0x9e8] sm:$0xff]
    %v352 = vld [vmem:[%s1 + $0x9f0] sm:$0xff]
    %v353 = vld [vmem:[%s1 + $0x9f8] sm:$0xff]
    %v354 = vld [vmem:[%s1 + $0xa00] sm:$0xff]
    %v355 = vld [vmem:[%s1 + $0xa08] sm:$0xff]
    %v356 = vld [vmem:[%s1 + $0xa10] sm:$0xff]
    %v357 = vld [vmem:[%s1 + $0xa18] sm:$0xff]
    %v358 = vld [vmem:[%s1 + $0xa20] sm:$0xff]
    %v359 = vld [vmem:[%s1 + $0xa28] sm:$0xff]
    %v360 = vld [vmem:[%s1 + $0xa30] sm:$0xff]
    %v361 = vld [vmem:[%s1 + $0xa38] sm:$0xff]
    %v362 = vld [vmem:[%s1 + $0xa40] sm:$0xff]
    %v363 = vld [vmem:[%s1 + $0xa48] sm:$0xff]
    %v364 = vld [vmem:[%s1 + $0xa50] sm:$0xff]
    %v365 = vld [vmem:[%s1 + $0xa58] sm:$0xff]
    %v366 = vld [vmem:[%s1 + $0xa60] sm:$0xff]
    %v367 = vld [vmem:[%s1 + $0xa68] sm:$0xff]
    %v368 = vld [vmem:[%s1 + $0xa70] sm:$0xff]
    %v369 = vld [vmem:[%s1 + $0xa78] sm:$0xff]
    %v370 = vld [vmem:[%s1 + $0xa80] sm:$0xff]
    %v371 = vld [vmem:[%s1 + $0xa88] sm:$0xff]
    %v372 = vld [vmem:[%s1 + $0xa90] sm:$0xff]
    %v373 = vld [vmem:[%s1 + $0xa98] sm:$0xff]
    %v374 = vld [vmem:[%s1 + $0xaa0] sm:$0xff]
    %v375 = vld [vmem:[%s1 + $0xaa8] sm:$0xff]
    %v376 = vld [vmem:[%s1 + $0xab0] sm:$0xff]
    %v377 = vld [vmem:[%s1 + $0xab8] sm:$0xff]
    %v378 = vld [vmem:[%s1 + $0xac0] sm:$0xff]
    %v379 = vld [vmem:[%s1 + $0xac8] sm:$0xff]
    %v380 = vld [vmem:[%s1 + $0xad0] sm:$0xff]
    %v381 = vld [vmem:[%s1 + $0xad8] sm:$0xff]
    %v382 = vld [vmem:[%s1 + $0xae0] sm:$0xff]
    %v383 = vld [vmem:[%s1 + $0xae8] sm:$0xff]
    %v384 = vld [vmem:[%s1 + $0xaf0] sm:$0xff]
    %v385 = vld [vmem:[%s1 + $0xaf8] sm:$0xff]
    %v386 = vld [vmem:[%s1 + $0xb00] sm:$0xff]
    %v387 = vld [vmem:[%s1 + $0xb08] sm:$0xff]
    %v388 = vld [vmem:[%s1 + $0xb10] sm:$0xff]
    %v389 = vld [vmem:[%s1 + $0xb18] sm:$0xff]
    %v390 = vld [vmem:[%s1 + $0xb20] sm:$0xff]
    %v391 = vld [vmem:[%s1 + $0xb28] sm:$0xff]
    %v392 = vld [vmem:[%s1 + $0xb30] sm:$0xff]
    %v393 = vld [vmem:[%s1 + $0xb38] sm:$0xff]
    %v394 = vld [vmem:[%s1 + $0xb40] sm:$0xff]
    %v395 = vld [vmem:[%s1 + $0xb48] sm:$0xff]
    %v396 = vld [vmem:[%s1 + $0xb50] sm:$0xff]
    %v397 = vld [vmem:[%s1 + $0xb58] sm:$0xff]
    %v398 = vld [vmem:[%s1 + $0xb60] sm:$0xff]
    %v399 = vld [vmem:[%s1 + $0xb68] sm:$0xff]
    %v400 = vld [vmem:[%s1 + $0xb70] sm:$0xff]
    %v401 = vld [vmem:[%s1 + $0xb78] sm:$0xff]
    %v402 = vld [vmem:[%s1 + $0xb80] sm:$0xff]
    %v403 = vld [vmem:[%s1 + $0xb88] sm:$0xff]
    %v404 = vld [vmem:[%s1 + $0xb90] sm:$0xff]
    %v405 = vld [vmem:[%s1 + $0xb98] sm:$0xff]
    %v406 = vld [vmem:[%s1 + $0xba0] sm:$0xff]
    %v407 = vld [vmem:[%s1 + $0xba8] sm:$0xff]
    %v408 = vld [vmem:[%s1 + $0xbb0] sm:$0xff]
    %v409 = vld [vmem:[%s1 + $0xbb8] sm:$0xff]
    %v410 = vld [vmem:[%s1 + $0xbc0] sm:$0xff]
    %v411 = vld [vmem:[%s1 + $0xbc8] sm:$0xff]
    %v412 = vld [vmem:[%s1 + $0xbd0] sm:$0xff]
    %v413 = vld [vmem:[%s1 + $0xbd8] sm:$0xff]
    %v414 = vld [vmem:[%s1 + $0xbe0] sm:$0xff]
    %v415 = vld [vmem:[%s1 + $0xbe8] sm:$0xff]
    %v416 = vld [vmem:[%s1 + $0xbf0] sm:$0xff]
    %v417 = vld [vmem:[%s1 + $0xbf8] sm:$0xff]
    %v418 = vld [vmem:[%s1 + $0xc00] sm:$0xff]
    %v419 = vld [vmem:[%s1 + $0xc08] sm:$0xff]
    %v420 = vld [vmem:[%s1 + $0xc10] sm:$0xff]
    %v421 = vld [vmem:[%s1 + $0xc18] sm:$0xff]
    %v422 = vld [vmem:[%s1 + $0xc20] sm:$0xff]
    %v423 = vld [vmem:[%s1 + $0xc28] sm:$0xff]
    %v424 = vld [vmem:[%s1 + $0xc30] sm:$0xff]
    %v425 = vld [vmem:[%s1 + $0xc38] sm:$0xff]
    %v426 = vld [vmem:[%s1 + $0xc40] sm:$0xff]
    %v427 = vld [vmem:[%s1 + $0xc48] sm:$0xff]
    %v428 = vld [vmem:[%s1 + $0xc50] sm:$0xff]
    %v429 = vld [vmem:[%s1 + $0xc58] sm:$0xff]
    %v430 = vld [vmem:[%s1 + $0xc60] sm:$0xff]
    %v431 = vld [vmem:[%s1 + $0xc68] sm:$0xff]
    %v432 = vld [vmem:[%s1 + $0xc70] sm:$0xff]
    %v433 = vld [vmem:[%s1 + $0xc78] sm:$0xff]
    %v434 = vld [vmem:[%s2] sm:$0x1]
    %v436 = vperm.slane %v434, 0
    %445 = vst [vmem:[#allocation1] ss:$4 sm:$0xff] %v27
    %s446 = scalar_lea.vmem [#allocation1], 32
    %447 = vst [vmem:[%s446] ss:$4 sm:$0xff] %v28
    %v448 = vld.sshfl [vmem:[#allocation1] sm:$0xff pattern:$0x73625140]
    %v449 = vld.sshfl [vmem:[#allocation1 + $0x8] sm:$0xff pattern:$0x73625140]
    %v450 = vld.sshfl [vmem:[#allocation1 + $0x10] sm:$0xff pattern:$0x73625140]
    %v451 = vld.sshfl [vmem:[#allocation1 + $0x18] sm:$0xff pattern:$0x73625140]
    %v452 = vld.sshfl [vmem:[#allocation1 + $0x20] sm:$0xff pattern:$0x73625140]
    %v453 = vld.sshfl [vmem:[#allocation1 + $0x28] sm:$0xff pattern:$0x73625140]
    %v454 = vld.sshfl [vmem:[#allocation1 + $0x30] sm:$0xff pattern:$0x73625140]
    %v455 = vld.sshfl [vmem:[#allocation1 + $0x38] sm:$0xff pattern:$0x73625140]
    %456 = vst [vmem:[#allocation1] ss:$4 sm:$0xff] %v29
    %457 = vst [vmem:[%s446] ss:$4 sm:$0xff] %v30
    %v458 = vld.sshfl [vmem:[#allocation1] sm:$0xff pattern:$0x73625140]
    %v459 = vld.sshfl [vmem:[#allocation1 + $0x8] sm:$0xff pattern:$0x73625140]
    %v460 = vld.sshfl [vmem:[#allocation1 + $0x10] sm:$0xff pattern:$0x73625140]
    %v461 = vld.sshfl [vmem:[#allocation1 + $0x18] sm:$0xff pattern:$0x73625140]
    %v462 = vld.sshfl [vmem:[#allocation1 + $0x20] sm:$0xff pattern:$0x73625140]
    %v463 = vld.sshfl [vmem:[#allocation1 + $0x28] sm:$0xff pattern:$0x73625140]
    %v464 = vld.sshfl [vmem:[#allocation1 + $0x30] sm:$0xff pattern:$0x73625140]
    %v465 = vld.sshfl [vmem:[#allocation1 + $0x38] sm:$0xff pattern:$0x73625140]
    %466 = vst [vmem:[#allocation1] ss:$4 sm:$0xff] %v31
    %467 = vst [vmem:[%s446] ss:$4 sm:$0xff] %v32
    %v468 = vld.sshfl [vmem:[#allocation1] sm:$0xff pattern:$0x73625140]
    %v469 = vld.sshfl [vmem:[#allocation1 + $0x8] sm:$0xff pattern:$0x73625140]
    %v470 = vld.sshfl [vmem:[#allocation1 + $0x10] sm:$0xff pattern:$0x73625140]
    %v471 = vld.sshfl [vmem:[#allocation1 + $0x18] sm:$0xff pattern:$0x73625140]
    %v472 = vld.sshfl [vmem:[#allocation1 + $0x20] sm:$0xff pattern:$0x73625140]
    %v473 = vld.sshfl [vmem:[#allocation1 + $0x28] sm:$0xff pattern:$0x73625140]
    %v474 = vld.sshfl [vmem:[#allocation1 + $0x30] sm:$0xff pattern:$0x73625140]
    %v475 = vld.sshfl [vmem:[#allocation1 + $0x38] sm:$0xff pattern:$0x73625140]
    %476 = vst [vmem:[#allocation1] ss:$4 sm:$0xff] %v33
    %v477 = vld.sshfl [vmem:[#allocation1] sm:$0xff pattern:$0x73625140]
    %503 = vmatpush.msra.mxu0 %v49
    %504 = vmatpush.msra.mxu0 %v48
    %505 = vmatpush.msra.mxu0 %v47
    %506 = vmatpush.msra.mxu0 %v46
    %507 = vmatpush.msra.mxu0 %v45
    %508 = vmatpush.msra.mxu0 %v44
    %509 = vmatpush.msra.mxu0 %v43
    %510 = vmatpush.msra.mxu0 %v42
    %511 = vmatpush.msra.mxu0 %v41
    %512 = vmatpush.msra.mxu0 %v40
    %513 = vmatpush.msra.mxu0 %v39
    %514 = vmatpush.msra.mxu0 %v38
    %515 = vmatpush.msra.mxu0 %v37
    %516 = vmatpush.msra.mxu0 %v36
    %517 = vmatpush.msra.mxu0 %v35
    %518 = vmatpush.msra.mxu0 %v34
    %519 = vmatmul.f32.gmra.mxu0 %v448
    %v520 = vpop.f32.mrf.mxu0
    %v521 = vadd.f32 %v436, %v520
    %522 = vdwg.mxu0
    %523 = vmatpush.msra.mxu0 %v65
    %524 = vmatpush.msra.mxu0 %v64
    %525 = vmatpush.msra.mxu0 %v63
    %526 = vmatpush.msra.mxu0 %v62
    %527 = vmatpush.msra.mxu0 %v61
    %528 = vmatpush.msra.mxu0 %v60
    %529 = vmatpush.msra.mxu0 %v59
    %530 = vmatpush.msra.mxu0 %v58
    %531 = vmatpush.msra.mxu0 %v57
    %532 = vmatpush.msra.mxu0 %v56
    %533 = vmatpush.msra.mxu0 %v55
    %534 = vmatpush.msra.mxu0 %v54
    %535 = vmatpush.msra.mxu0 %v53
    %536 = vmatpush.msra.mxu0 %v52
    %537 = vmatpush.msra.mxu0 %v51
    %538 = vmatpush.msra.mxu0 %v50
    %539 = vmatmul.f32.gmra.mxu0 %v449
    %v540 = vpop.f32.mrf.mxu0
    %v541 = vadd.f32 %v521, %v540
    %542 = vdwg.mxu0
    %543 = vmatpush.msra.mxu0 %v81
    %544 = vmatpush.msra.mxu0 %v80
    %545 = vmatpush.msra.mxu0 %v79
    %546 = vmatpush.msra.mxu0 %v78
    %547 = vmatpush.msra.mxu0 %v77
    %548 = vmatpush.msra.mxu0 %v76
    %549 = vmatpush.msra.mxu0 %v75
    %550 = vmatpush.msra.mxu0 %v74
    %551 = vmatpush.msra.mxu0 %v73
    %552 = vmatpush.msra.mxu0 %v72
    %553 = vmatpush.msra.mxu0 %v71
    %554 = vmatpush.msra.mxu0 %v70
    %555 = vmatpush.msra.mxu0 %v69
    %556 = vmatpush.msra.mxu0 %v68
    %557 = vmatpush.msra.mxu0 %v67
    %558 = vmatpush.msra.mxu0 %v66
    %559 = vmatmul.f32.gmra.mxu0 %v450
    %v560 = vpop.f32.mrf.mxu0
    %v561 = vadd.f32 %v541, %v560
    %562 = vdwg.mxu0
    %563 = vmatpush.msra.mxu0 %v97
    %564 = vmatpush.msra.mxu0 %v96
    %565 = vmatpush.msra.mxu0 %v95
    %566 = vmatpush.msra.mxu0 %v94
    %567 = vmatpush.msra.mxu0 %v93
    %568 = vmatpush.msra.mxu0 %v92
    %569 = vmatpush.msra.mxu0 %v91
    %570 = vmatpush.msra.mxu0 %v90
    %571 = vmatpush.msra.mxu0 %v89
    %572 = vmatpush.msra.mxu0 %v88
    %573 = vmatpush.msra.mxu0 %v87
    %574 = vmatpush.msra.mxu0 %v86
    %575 = vmatpush.msra.mxu0 %v85
    %576 = vmatpush.msra.mxu0 %v84
    %577 = vmatpush.msra.mxu0 %v83
    %578 = vmatpush.msra.mxu0 %v82
    %579 = vmatmul.f32.gmra.mxu0 %v451
    %v580 = vpop.f32.mrf.mxu0
    %v581 = vadd.f32 %v561, %v580
    %582 = vdwg.mxu0
    %583 = vmatpush.msra.mxu0 %v113
    %584 = vmatpush.msra.mxu0 %v112
    %585 = vmatpush.msra.mxu0 %v111
    %586 = vmatpush.msra.mxu0 %v110
    %587 = vmatpush.msra.mxu0 %v109
    %588 = vmatpush.msra.mxu0 %v108
    %589 = vmatpush.msra.mxu0 %v107
    %590 = vmatpush.msra.mxu0 %v106
    %591 = vmatpush.msra.mxu0 %v105
    %592 = vmatpush.msra.mxu0 %v104
    %593 = vmatpush.msra.mxu0 %v103
    %594 = vmatpush.msra.mxu0 %v102
    %595 = vmatpush.msra.mxu0 %v101
    %596 = vmatpush.msra.mxu0 %v100
    %597 = vmatpush.msra.mxu0 %v99
    %598 = vmatpush.msra.mxu0 %v98
    %599 = vmatmul.f32.gmra.mxu0 %v452
    %v600 = vpop.f32.mrf.mxu0
    %v601 = vadd.f32 %v581, %v600
    %602 = vdwg.mxu0
    %603 = vmatpush.msra.mxu0 %v129
    %604 = vmatpush.msra.mxu0 %v128
    %605 = vmatpush.msra.mxu0 %v127
    %606 = vmatpush.msra.mxu0 %v126
    %607 = vmatpush.msra.mxu0 %v125
    %608 = vmatpush.msra.mxu0 %v124
    %609 = vmatpush.msra.mxu0 %v123
    %610 = vmatpush.msra.mxu0 %v122
    %611 = vmatpush.msra.mxu0 %v121
    %612 = vmatpush.msra.mxu0 %v120
    %613 = vmatpush.msra.mxu0 %v119
    %614 = vmatpush.msra.mxu0 %v118
    %615 = vmatpush.msra.mxu0 %v117
    %616 = vmatpush.msra.mxu0 %v116
    %617 = vmatpush.msra.mxu0 %v115
    %618 = vmatpush.msra.mxu0 %v114
    %619 = vmatmul.f32.gmra.mxu0 %v453
    %v620 = vpop.f32.mrf.mxu0
    %v621 = vadd.f32 %v601, %v620
    %622 = vdwg.mxu0
    %623 = vmatpush.msra.mxu0 %v145
    %624 = vmatpush.msra.mxu0 %v144
    %625 = vmatpush.msra.mxu0 %v143
    %626 = vmatpush.msra.mxu0 %v142
    %627 = vmatpush.msra.mxu0 %v141
    %628 = vmatpush.msra.mxu0 %v140
    %629 = vmatpush.msra.mxu0 %v139
    %630 = vmatpush.msra.mxu0 %v138
    %631 = vmatpush.msra.mxu0 %v137
    %632 = vmatpush.msra.mxu0 %v136
    %633 = vmatpush.msra.mxu0 %v135
    %634 = vmatpush.msra.mxu0 %v134
    %635 = vmatpush.msra.mxu0 %v133
    %636 = vmatpush.msra.mxu0 %v132
    %637 = vmatpush.msra.mxu0 %v131
    %638 = vmatpush.msra.mxu0 %v130
    %639 = vmatmul.f32.gmra.mxu0 %v454
    %v640 = vpop.f32.mrf.mxu0
    %v641 = vadd.f32 %v621, %v640
    %642 = vdwg.mxu0
    %643 = vmatpush.msra.mxu0 %v161
    %644 = vmatpush.msra.mxu0 %v160
    %645 = vmatpush.msra.mxu0 %v159
    %646 = vmatpush.msra.mxu0 %v158
    %647 = vmatpush.msra.mxu0 %v157
    %648 = vmatpush.msra.mxu0 %v156
    %649 = vmatpush.msra.mxu0 %v155
    %650 = vmatpush.msra.mxu0 %v154
    %651 = vmatpush.msra.mxu0 %v153
    %652 = vmatpush.msra.mxu0 %v152
    %653 = vmatpush.msra.mxu0 %v151
    %654 = vmatpush.msra.mxu0 %v150
    %655 = vmatpush.msra.mxu0 %v149
    %656 = vmatpush.msra.mxu0 %v148
    %657 = vmatpush.msra.mxu0 %v147
    %658 = vmatpush.msra.mxu0 %v146
    %659 = vmatmul.f32.gmra.mxu0 %v455
    %v660 = vpop.f32.mrf.mxu0
    %v661 = vadd.f32 %v641, %v660
    %662 = vdwg.mxu0
    %663 = vmatpush.msra.mxu0 %v177
    %664 = vmatpush.msra.mxu0 %v176
    %665 = vmatpush.msra.mxu0 %v175
    %666 = vmatpush.msra.mxu0 %v174
    %667 = vmatpush.msra.mxu0 %v173
    %668 = vmatpush.msra.mxu0 %v172
    %669 = vmatpush.msra.mxu0 %v171
    %670 = vmatpush.msra.mxu0 %v170
    %671 = vmatpush.msra.mxu0 %v169
    %672 = vmatpush.msra.mxu0 %v168
    %673 = vmatpush.msra.mxu0 %v167
    %674 = vmatpush.msra.mxu0 %v166
    %675 = vmatpush.msra.mxu0 %v165
    %676 = vmatpush.msra.mxu0 %v164
    %677 = vmatpush.msra.mxu0 %v163
    %678 = vmatpush.msra.mxu0 %v162
    %679 = vmatmul.f32.gmra.mxu0 %v458
    %v680 = vpop.f32.mrf.mxu0
    %v681 = vadd.f32 %v661, %v680
    %682 = vdwg.mxu0
    %683 = vmatpush.msra.mxu0 %v193
    %684 = vmatpush.msra.mxu0 %v192
    %685 = vmatpush.msra.mxu0 %v191
    %686 = vmatpush.msra.mxu0 %v190
    %687 = vmatpush.msra.mxu0 %v189
    %688 = vmatpush.msra.mxu0 %v188
    %689 = vmatpush.msra.mxu0 %v187
    %690 = vmatpush.msra.mxu0 %v186
    %691 = vmatpush.msra.mxu0 %v185
    %692 = vmatpush.msra.mxu0 %v184
    %693 = vmatpush.msra.mxu0 %v183
    %694 = vmatpush.msra.mxu0 %v182
    %695 = vmatpush.msra.mxu0 %v181
    %696 = vmatpush.msra.mxu0 %v180
    %697 = vmatpush.msra.mxu0 %v179
    %698 = vmatpush.msra.mxu0 %v178
    %699 = vmatmul.f32.gmra.mxu0 %v459
    %v700 = vpop.f32.mrf.mxu0
    %v701 = vadd.f32 %v681, %v700
    %702 = vdwg.mxu0
    %703 = vmatpush.msra.mxu0 %v209
    %704 = vmatpush.msra.mxu0 %v208
    %705 = vmatpush.msra.mxu0 %v207
    %706 = vmatpush.msra.mxu0 %v206
    %707 = vmatpush.msra.mxu0 %v205
    %708 = vmatpush.msra.mxu0 %v204
    %709 = vmatpush.msra.mxu0 %v203
    %710 = vmatpush.msra.mxu0 %v202
    %711 = vmatpush.msra.mxu0 %v201
    %712 = vmatpush.msra.mxu0 %v200
    %713 = vmatpush.msra.mxu0 %v199
    %714 = vmatpush.msra.mxu0 %v198
    %715 = vmatpush.msra.mxu0 %v197
    %716 = vmatpush.msra.mxu0 %v196
    %717 = vmatpush.msra.mxu0 %v195
    %718 = vmatpush.msra.mxu0 %v194
    %719 = vmatmul.f32.gmra.mxu0 %v460
    %v720 = vpop.f32.mrf.mxu0
    %v721 = vadd.f32 %v701, %v720
    %722 = vdwg.mxu0
    %723 = vmatpush.msra.mxu0 %v225
    %724 = vmatpush.msra.mxu0 %v224
    %725 = vmatpush.msra.mxu0 %v223
    %726 = vmatpush.msra.mxu0 %v222
    %727 = vmatpush.msra.mxu0 %v221
    %728 = vmatpush.msra.mxu0 %v220
    %729 = vmatpush.msra.mxu0 %v219
    %730 = vmatpush.msra.mxu0 %v218
    %731 = vmatpush.msra.mxu0 %v217
    %732 = vmatpush.msra.mxu0 %v216
    %733 = vmatpush.msra.mxu0 %v215
    %734 = vmatpush.msra.mxu0 %v214
    %735 = vmatpush.msra.mxu0 %v213
    %736 = vmatpush.msra.mxu0 %v212
    %737 = vmatpush.msra.mxu0 %v211
    %738 = vmatpush.msra.mxu0 %v210
    %739 = vmatmul.f32.gmra.mxu0 %v461
    %v740 = vpop.f32.mrf.mxu0
    %v741 = vadd.f32 %v721, %v740
    %742 = vdwg.mxu0
    %743 = vmatpush.msra.mxu0 %v241
    %744 = vmatpush.msra.mxu0 %v240
    %745 = vmatpush.msra.mxu0 %v239
    %746 = vmatpush.msra.mxu0 %v238
    %747 = vmatpush.msra.mxu0 %v237
    %748 = vmatpush.msra.mxu0 %v236
    %749 = vmatpush.msra.mxu0 %v235
    %750 = vmatpush.msra.mxu0 %v234
    %751 = vmatpush.msra.mxu0 %v233
    %752 = vmatpush.msra.mxu0 %v232
    %753 = vmatpush.msra.mxu0 %v231
    %754 = vmatpush.msra.mxu0 %v230
    %755 = vmatpush.msra.mxu0 %v229
    %756 = vmatpush.msra.mxu0 %v228
    %757 = vmatpush.msra.mxu0 %v227
    %758 = vmatpush.msra.mxu0 %v226
    %759 = vmatmul.f32.gmra.mxu0 %v462
    %v760 = vpop.f32.mrf.mxu0
    %v761 = vadd.f32 %v741, %v760
    %762 = vdwg.mxu0
    %763 = vmatpush.msra.mxu0 %v257
    %764 = vmatpush.msra.mxu0 %v256
    %765 = vmatpush.msra.mxu0 %v255
    %766 = vmatpush.msra.mxu0 %v254
    %767 = vmatpush.msra.mxu0 %v253
    %768 = vmatpush.msra.mxu0 %v252
    %769 = vmatpush.msra.mxu0 %v251
    %770 = vmatpush.msra.mxu0 %v250
    %771 = vmatpush.msra.mxu0 %v249
    %772 = vmatpush.msra.mxu0 %v248
    %773 = vmatpush.msra.mxu0 %v247
    %774 = vmatpush.msra.mxu0 %v246
    %775 = vmatpush.msra.mxu0 %v245
    %776 = vmatpush.msra.mxu0 %v244
    %777 = vmatpush.msra.mxu0 %v243
    %778 = vmatpush.msra.mxu0 %v242
    %779 = vmatmul.f32.gmra.mxu0 %v463
    %v780 = vpop.f32.mrf.mxu0
    %v781 = vadd.f32 %v761, %v780
    %782 = vdwg.mxu0
    %783 = vmatpush.msra.mxu0 %v273
    %784 = vmatpush.msra.mxu0 %v272
    %785 = vmatpush.msra.mxu0 %v271
    %786 = vmatpush.msra.mxu0 %v270
    %787 = vmatpush.msra.mxu0 %v269
    %788 = vmatpush.msra.mxu0 %v268
    %789 = vmatpush.msra.mxu0 %v267
    %790 = vmatpush.msra.mxu0 %v266
    %791 = vmatpush.msra.mxu0 %v265
    %792 = vmatpush.msra.mxu0 %v264
    %793 = vmatpush.msra.mxu0 %v263
    %794 = vmatpush.msra.mxu0 %v262
    %795 = vmatpush.msra.mxu0 %v261
    %796 = vmatpush.msra.mxu0 %v260
    %797 = vmatpush.msra.mxu0 %v259
    %798 = vmatpush.msra.mxu0 %v258
    %799 = vmatmul.f32.gmra.mxu0 %v464
    %v800 = vpop.f32.mrf.mxu0
    %v801 = vadd.f32 %v781, %v800
    %802 = vdwg.mxu0
    %803 = vmatpush.msra.mxu0 %v289
    %804 = vmatpush.msra.mxu0 %v288
    %805 = vmatpush.msra.mxu0 %v287
    %806 = vmatpush.msra.mxu0 %v286
    %807 = vmatpush.msra.mxu0 %v285
    %808 = vmatpush.msra.mxu0 %v284
    %809 = vmatpush.msra.mxu0 %v283
    %810 = vmatpush.msra.mxu0 %v282
    %811 = vmatpush.msra.mxu0 %v281
    %812 = vmatpush.msra.mxu0 %v280
    %813 = vmatpush.msra.mxu0 %v279
    %814 = vmatpush.msra.mxu0 %v278
    %815 = vmatpush.msra.mxu0 %v277
    %816 = vmatpush.msra.mxu0 %v276
    %817 = vmatpush.msra.mxu0 %v275
    %818 = vmatpush.msra.mxu0 %v274
    %819 = vmatmul.f32.gmra.mxu0 %v465
    %v820 = vpop.f32.mrf.mxu0
    %v821 = vadd.f32 %v801, %v820
    %822 = vdwg.mxu0
    %823 = vmatpush.msra.mxu0 %v305
    %824 = vmatpush.msra.mxu0 %v304
    %825 = vmatpush.msra.mxu0 %v303
    %826 = vmatpush.msra.mxu0 %v302
    %827 = vmatpush.msra.mxu0 %v301
    %828 = vmatpush.msra.mxu0 %v300
    %829 = vmatpush.msra.mxu0 %v299
    %830 = vmatpush.msra.mxu0 %v298
    %831 = vmatpush.msra.mxu0 %v297
    %832 = vmatpush.msra.mxu0 %v296
    %833 = vmatpush.msra.mxu0 %v295
    %834 = vmatpush.msra.mxu0 %v294
    %835 = vmatpush.msra.mxu0 %v293
    %836 = vmatpush.msra.mxu0 %v292
    %837 = vmatpush.msra.mxu0 %v291
    %838 = vmatpush.msra.mxu0 %v290
    %839 = vmatmul.f32.gmra.mxu0 %v468
    %v840 = vpop.f32.mrf.mxu0
    %v841 = vadd.f32 %v821, %v840
    %842 = vdwg.mxu0
    %843 = vmatpush.msra.mxu0 %v321
    %844 = vmatpush.msra.mxu0 %v320
    %845 = vmatpush.msra.mxu0 %v319
    %846 = vmatpush.msra.mxu0 %v318
    %847 = vmatpush.msra.mxu0 %v317
    %848 = vmatpush.msra.mxu0 %v316
    %849 = vmatpush.msra.mxu0 %v315
    %850 = vmatpush.msra.mxu0 %v314
    %851 = vmatpush.msra.mxu0 %v313
    %852 = vmatpush.msra.mxu0 %v312
    %853 = vmatpush.msra.mxu0 %v311
    %854 = vmatpush.msra.mxu0 %v310
    %855 = vmatpush.msra.mxu0 %v309
    %856 = vmatpush.msra.mxu0 %v308
    %857 = vmatpush.msra.mxu0 %v307
    %858 = vmatpush.msra.mxu0 %v306
    %859 = vmatmul.f32.gmra.mxu0 %v469
    %v860 = vpop.f32.mrf.mxu0
    %v861 = vadd.f32 %v841, %v860
    %862 = vdwg.mxu0
    %863 = vmatpush.msra.mxu0 %v337
    %864 = vmatpush.msra.mxu0 %v336
    %865 = vmatpush.msra.mxu0 %v335
    %866 = vmatpush.msra.mxu0 %v334
    %867 = vmatpush.msra.mxu0 %v333
    %868 = vmatpush.msra.mxu0 %v332
    %869 = vmatpush.msra.mxu0 %v331
    %870 = vmatpush.msra.mxu0 %v330
    %871 = vmatpush.msra.mxu0 %v329
    %872 = vmatpush.msra.mxu0 %v328
    %873 = vmatpush.msra.mxu0 %v327
    %874 = vmatpush.msra.mxu0 %v326
    %875 = vmatpush.msra.mxu0 %v325
    %876 = vmatpush.msra.mxu0 %v324
    %877 = vmatpush.msra.mxu0 %v323
    %878 = vmatpush.msra.mxu0 %v322
    %879 = vmatmul.f32.gmra.mxu0 %v470
    %v880 = vpop.f32.mrf.mxu0
    %v881 = vadd.f32 %v861, %v880
    %882 = vdwg.mxu0
    %883 = vmatpush.msra.mxu0 %v353
    %884 = vmatpush.msra.mxu0 %v352
    %885 = vmatpush.msra.mxu0 %v351
    %886 = vmatpush.msra.mxu0 %v350
    %887 = vmatpush.msra.mxu0 %v349
    %888 = vmatpush.msra.mxu0 %v348
    %889 = vmatpush.msra.mxu0 %v347
    %890 = vmatpush.msra.mxu0 %v346
    %891 = vmatpush.msra.mxu0 %v345
    %892 = vmatpush.msra.mxu0 %v344
    %893 = vmatpush.msra.mxu0 %v343
    %894 = vmatpush.msra.mxu0 %v342
    %895 = vmatpush.msra.mxu0 %v341
    %896 = vmatpush.msra.mxu0 %v340
    %897 = vmatpush.msra.mxu0 %v339
    %898 = vmatpush.msra.mxu0 %v338
    %899 = vmatmul.f32.gmra.mxu0 %v471
    %v900 = vpop.f32.mrf.mxu0
    %v901 = vadd.f32 %v881, %v900
    %902 = vdwg.mxu0
    %903 = vmatpush.msra.mxu0 %v369
    %904 = vmatpush.msra.mxu0 %v368
    %905 = vmatpush.msra.mxu0 %v367
    %906 = vmatpush.msra.mxu0 %v366
    %907 = vmatpush.msra.mxu0 %v365
    %908 = vmatpush.msra.mxu0 %v364
    %909 = vmatpush.msra.mxu0 %v363
    %910 = vmatpush.msra.mxu0 %v362
    %911 = vmatpush.msra.mxu0 %v361
    %912 = vmatpush.msra.mxu0 %v360
    %913 = vmatpush.msra.mxu0 %v359
    %914 = vmatpush.msra.mxu0 %v358
    %915 = vmatpush.msra.mxu0 %v357
    %916 = vmatpush.msra.mxu0 %v356
    %917 = vmatpush.msra.mxu0 %v355
    %918 = vmatpush.msra.mxu0 %v354
    %919 = vmatmul.f32.gmra.mxu0 %v472
    %v920 = vpop.f32.mrf.mxu0
    %v921 = vadd.f32 %v901, %v920
    %922 = vdwg.mxu0
    %923 = vmatpush.msra.mxu0 %v385
    %924 = vmatpush.msra.mxu0 %v384
    %925 = vmatpush.msra.mxu0 %v383
    %926 = vmatpush.msra.mxu0 %v382
    %927 = vmatpush.msra.mxu0 %v381
    %928 = vmatpush.msra.mxu0 %v380
    %929 = vmatpush.msra.mxu0 %v379
    %930 = vmatpush.msra.mxu0 %v378
    %931 = vmatpush.msra.mxu0 %v377
    %932 = vmatpush.msra.mxu0 %v376
    %933 = vmatpush.msra.mxu0 %v375
    %934 = vmatpush.msra.mxu0 %v374
    %935 = vmatpush.msra.mxu0 %v373
    %936 = vmatpush.msra.mxu0 %v372
    %937 = vmatpush.msra.mxu0 %v371
    %938 = vmatpush.msra.mxu0 %v370
    %939 = vmatmul.f32.gmra.mxu0 %v473
    %v940 = vpop.f32.mrf.mxu0
    %v941 = vadd.f32 %v921, %v940
    %942 = vdwg.mxu0
    %943 = vmatpush.msra.mxu0 %v401
    %944 = vmatpush.msra.mxu0 %v400
    %945 = vmatpush.msra.mxu0 %v399
    %946 = vmatpush.msra.mxu0 %v398
    %947 = vmatpush.msra.mxu0 %v397
    %948 = vmatpush.msra.mxu0 %v396
    %949 = vmatpush.msra.mxu0 %v395
    %950 = vmatpush.msra.mxu0 %v394
    %951 = vmatpush.msra.mxu0 %v393
    %952 = vmatpush.msra.mxu0 %v392
    %953 = vmatpush.msra.mxu0 %v391
    %954 = vmatpush.msra.mxu0 %v390
    %955 = vmatpush.msra.mxu0 %v389
    %956 = vmatpush.msra.mxu0 %v388
    %957 = vmatpush.msra.mxu0 %v387
    %958 = vmatpush.msra.mxu0 %v386
    %959 = vmatmul.f32.gmra.mxu0 %v474
    %v960 = vpop.f32.mrf.mxu0
    %v961 = vadd.f32 %v941, %v960
    %962 = vdwg.mxu0
    %963 = vmatpush.msra.mxu0 %v417
    %964 = vmatpush.msra.mxu0 %v416
    %965 = vmatpush.msra.mxu0 %v415
    %966 = vmatpush.msra.mxu0 %v414
    %967 = vmatpush.msra.mxu0 %v413
    %968 = vmatpush.msra.mxu0 %v412
    %969 = vmatpush.msra.mxu0 %v411
    %970 = vmatpush.msra.mxu0 %v410
    %971 = vmatpush.msra.mxu0 %v409
    %972 = vmatpush.msra.mxu0 %v408
    %973 = vmatpush.msra.mxu0 %v407
    %974 = vmatpush.msra.mxu0 %v406
    %975 = vmatpush.msra.mxu0 %v405
    %976 = vmatpush.msra.mxu0 %v404
    %977 = vmatpush.msra.mxu0 %v403
    %978 = vmatpush.msra.mxu0 %v402
    %979 = vmatmul.f32.gmra.mxu0 %v475
    %v980 = vpop.f32.mrf.mxu0
    %v981 = vadd.f32 %v961, %v980
    %982 = vdwg.mxu0
    %983 = vmatpush.msra.mxu0 %v433
    %984 = vmatpush.msra.mxu0 %v432
    %985 = vmatpush.msra.mxu0 %v431
    %986 = vmatpush.msra.mxu0 %v430
    %987 = vmatpush.msra.mxu0 %v429
    %988 = vmatpush.msra.mxu0 %v428
    %989 = vmatpush.msra.mxu0 %v427
    %990 = vmatpush.msra.mxu0 %v426
    %991 = vmatpush.msra.mxu0 %v425
    %992 = vmatpush.msra.mxu0 %v424
    %993 = vmatpush.msra.mxu0 %v423
    %994 = vmatpush.msra.mxu0 %v422
    %995 = vmatpush.msra.mxu0 %v421
    %996 = vmatpush.msra.mxu0 %v420
    %997 = vmatpush.msra.mxu0 %v419
    %998 = vmatpush.msra.mxu0 %v418
    %999 = vmatmul.f32.gmra.mxu0 %v477
    %v1000 = vpop.f32.mrf.mxu0
    %v1001 = vadd.f32 %v981, %v1000
    %1002 = vdwg.mxu0
    %v1003 = vmax.f32 %v1001, 0.0
    %v1004 = vld [vmem:[%s3] sm:$0xff]
    %v1005 = vld [vmem:[%s3 + $0x8] sm:$0xff]
    %v1006 = vld [vmem:[%s3 + $0x10] sm:$0xff]
    %v1007 = vld [vmem:[%s3 + $0x18] sm:$0xff]
    %v1008 = vld [vmem:[%s3 + $0x20] sm:$0xff]
    %v1009 = vld [vmem:[%s3 + $0x28] sm:$0xff]
    %v1010 = vld [vmem:[%s3 + $0x30] sm:$0xff]
    %v1011 = vld [vmem:[%s3 + $0x38] sm:$0xff]
    %v1012 = vld [vmem:[%s3 + $0x40] sm:$0xff]
    %v1013 = vld [vmem:[%s3 + $0x48] sm:$0xff]
    %v1014 = vld [vmem:[%s3 + $0x50] sm:$0xff]
    %v1015 = vld [vmem:[%s3 + $0x58] sm:$0xff]
    %v1016 = vld [vmem:[%s3 + $0x60] sm:$0xff]
    %v1017 = vld [vmem:[%s3 + $0x68] sm:$0xff]
    %v1018 = vld [vmem:[%s3 + $0x70] sm:$0xff]
    %v1019 = vld [vmem:[%s3 + $0x78] sm:$0xff]
    %v1020 = vld [vmem:[%s4] sm:$0x1]
    %v1022 = vperm.slane %v1020, 0
    %1024 = vmatpush.msra.mxu0 %v1019
    %1025 = vmatpush.msra.mxu0 %v1018
    %1026 = vmatpush.msra.mxu0 %v1017
    %1027 = vmatpush.msra.mxu0 %v1016
    %1028 = vmatpush.msra.mxu0 %v1015
    %1029 = vmatpush.msra.mxu0 %v1014
    %1030 = vmatpush.msra.mxu0 %v1013
    %1031 = vmatpush.msra.mxu0 %v1012
    %1032 = vmatpush.msra.mxu0 %v1011
    %1033 = vmatpush.msra.mxu0 %v1010
    %1034 = vmatpush.msra.mxu0 %v1009
    %1035 = vmatpush.msra.mxu0 %v1008
    %1036 = vmatpush.msra.mxu0 %v1007
    %1037 = vmatpush.msra.mxu0 %v1006
    %1038 = vmatpush.msra.mxu0 %v1005
    %1039 = vmatpush.msra.mxu0 %v1004
    %1040 = vmatmul.f32.gmra.mxu0 %v1003
    %v1041 = vpop.f32.mrf.mxu0
    %v1042 = vadd.f32 %v1022, %v1041
    %1043 = vdwg.mxu0
    %v1044 = vmax.f32 %v1042, 0.0
    %v1045 = vld [vmem:[%s5] sm:$0xff]
    %v1046 = vld [vmem:[%s5 + $0x8] sm:$0xff]
    %v1047 = vld [vmem:[%s5 + $0x10] sm:$0xff]
    %v1048 = vld [vmem:[%s5 + $0x18] sm:$0xff]
    %v1049 = vld [vmem:[%s5 + $0x20] sm:$0xff]
    %v1050 = vld [vmem:[%s5 + $0x28] sm:$0xff]
    %v1051 = vld [vmem:[%s5 + $0x30] sm:$0xff]
    %v1052 = vld [vmem:[%s5 + $0x38] sm:$0xff]
    %v1053 = vld [vmem:[%s5 + $0x40] sm:$0xff]
    %v1054 = vld [vmem:[%s5 + $0x48] sm:$0xff]
    %v1055 = vld [vmem:[%s5 + $0x50] sm:$0xff]
    %v1056 = vld [vmem:[%s5 + $0x58] sm:$0xff]
    %v1057 = vld [vmem:[%s5 + $0x60] sm:$0xff]
    %v1058 = vld [vmem:[%s5 + $0x68] sm:$0xff]
    %v1059 = vld [vmem:[%s5 + $0x70] sm:$0xff]
    %v1060 = vld [vmem:[%s5 + $0x78] sm:$0xff]
    %v1061 = vld [vmem:[%s6] sm:$0x1]
    %v1063 = vperm.slane %v1061, 0
    %1065 = vmatpush.msra.mxu0 %v1060
    %1066 = vmatpush.msra.mxu0 %v1059
    %1067 = vmatpush.msra.mxu0 %v1058
    %1068 = vmatpush.msra.mxu0 %v1057
    %1069 = vmatpush.msra.mxu0 %v1056
    %1070 = vmatpush.msra.mxu0 %v1055
    %1071 = vmatpush.msra.mxu0 %v1054
    %1072 = vmatpush.msra.mxu0 %v1053
    %1073 = vmatpush.msra.mxu0 %v1052
    %1074 = vmatpush.msra.mxu0 %v1051
    %1075 = vmatpush.msra.mxu0 %v1050
    %1076 = vmatpush.msra.mxu0 %v1049
    %1077 = vmatpush.msra.mxu0 %v1048
    %1078 = vmatpush.msra.mxu0 %v1047
    %1079 = vmatpush.msra.mxu0 %v1046
    %1080 = vmatpush.msra.mxu0 %v1045
    %1081 = vmatmul.f32.gmra.mxu0 %v1044
    %v1082 = vpop.f32.mrf.mxu0
    %v1083 = vadd.f32 %v1063, %v1082
    %1084 = vdwg.mxu0
    %1085 = vst [vmem:[#allocation2] sm:$0x3] %v1083
    // Predicated region
    $region30: #{lenet5_forward.5} parent=1 // pred_check
      _
    $region31: #{lenet5_forward.5} parent=1 // pred_check_branch
      %1087 = sbr.rel (0) target = $region33
    $region32: #{lenet5_forward.5} parent=1 // pred_region
      %1089 = vsyncadd [#allocation3], 0
      %s1091 = sshll.u32 [#allocation2], 4
      %s1092 = int_to_ptr.vmem [resolvable:$true] %s1091
      %s1093 = sshll.u32 %s7, 4
      %s1094 = int_to_ptr.hbm [resolvable:$true] %s1093
      %1096 = dma.vmem_to_hbm [thread:$0]  %s1092, 32, %s1094, [#allocation3]
    $region33: #{lenet5_forward.5} parent=1 // pred_fallthru
      _
    // Predicated region
    $region34: #{lenet5_forward.5} parent=1 // pred_check
      _
    $region35: #{lenet5_forward.5} parent=1 // pred_check_branch
      %1098 = sbr.rel (0) target = $region37
    $region36: #{lenet5_forward.5} parent=1 // pred_region
      %1100 = dma.done [#allocation3], 32
    $region37: #{lenet5_forward.5} parent=1 // pred_fallthru
      _
    %1101 = vsyncpa [#allocation3], 1

</llo_original>
